<compile_context>
chip_gen: v7x
topology: tpu7x:2x2x1
jax: 0.10.0
libtpu: 0.0.40
codegen_flags: <defaults>
</compile_context>

<pallas_src>
import math

import jax
import jax.numpy as jnp
from jax.experimental import pallas as pl
from jax.experimental.pallas import tpu as pltpu

# ----------------------------- config (small, spec-consistent) --------------
BATCH = 2
SEQ_LEN = 16
HIDDEN = 32                     # config.hidden_size
NUM_HEADS = 4                   # config.num_attention_heads
HEAD_DIM = HIDDEN // NUM_HEADS  # attention_head_size
SCALE = 1.0 / math.sqrt(HEAD_DIM)


# ----------------------------- Pallas kernel --------------------------------
def mha_kernel(x_ref, wqkv_ref, bqkv_ref, o_ref):
    """Whole module in ONE invocation (grid=()).

    x_ref: (N*L, D)   wqkv_ref: (D, 3D)   bqkv_ref: (1, 3D)   o_ref: (N*L, D)
    """
    D = HIDDEN
    x = x_ref[...].astype(jnp.float32)

    # Fused Q/K/V projection with batch folded in: one (N*L, D) x (D, 3D) MXU
    # matmul + bias.  SCALE is already folded into the Q third of wqkv/bqkv.
    qkv = (jnp.dot(x, wqkv_ref[...], preferred_element_type=jnp.float32)
           + bqkv_ref[...])                                       # (N*L, 3D)

    def split_heads(t):
        # (N*L, D) -> (N*H, L, dh): commit the head layout ONCE; both attention
        # einsums then run in this same batched layout (no inter-einsum relayout).
        return (t.reshape(BATCH, SEQ_LEN, NUM_HEADS, HEAD_DIM)
                 .transpose(0, 2, 1, 3)
                 .reshape(BATCH * NUM_HEADS, SEQ_LEN, HEAD_DIM))

    q = split_heads(qkv[:, 0 * D:1 * D])   # already pre-scaled by 1/sqrt(dh)
    k = split_heads(qkv[:, 1 * D:2 * D])
    v = split_heads(qkv[:, 2 * D:3 * D])

    # Attention scores for ALL batches*heads in one batched einsum.
    s = jnp.einsum("bqd,bkd->bqk", q, k,
                   preferred_element_type=jnp.float32)            # (N*H, L, L)

    # Numerically-stable softmax; the divide goes to the EUP via approx recip.
    s = s - jnp.max(s, axis=-1, keepdims=True)
    p = jnp.exp(s)
    p = p * pl.reciprocal(jnp.sum(p, axis=-1, keepdims=True), approx=True)

    # TODO(synk): dropout (p=0.0 -> identity), head_mask=None and
    # output_attentions=False are the module defaults; train-mode dropout
    # would need pltpu.prng_seed / pltpu.prng_random_bits here.

    # Context in the SAME (N*H, L, dh) layout, then merge heads -> (N*L, D).
    ctx = jnp.einsum("bqk,bkd->bqd", p, v,
                     preferred_element_type=jnp.float32)          # (N*H, L, dh)
    out = (ctx.reshape(BATCH, NUM_HEADS, SEQ_LEN, HEAD_DIM)
              .transpose(0, 2, 1, 3)
              .reshape(BATCH * SEQ_LEN, D))
    o_ref[...] = out.astype(o_ref.dtype)


# ----------------------------- parameter prep (call once at init) ------------
def stack_qkv_params(wq, bq, wk, bk, wv, bv):
    """Stack the three linears ONCE (hoisted out of the per-call path) and fold
    the 1/sqrt(head_dim) scale into the Q columns."""
    wqkv = jnp.concatenate([wq * SCALE, wk, wv], axis=1)           # (D, 3D)
    bqkv = jnp.concatenate([bq * SCALE, bk, bv], axis=0)[None, :]  # (1, 3D)
    return wqkv, bqkv


# ----------------------------- wrapper ---------------------------------------
def vit_mae_self_attention(hidden_states, wqkv, bqkv):
    """hidden_states: (N, L, D); wqkv: (D, 3D) pre-stacked; bqkv: (1, 3D)."""
    N, L, D = hidden_states.shape
    x2 = hidden_states.reshape(N * L, D)          # free row-major reshape
    out2 = pl.pallas_call(
        mha_kernel,
        out_shape=jax.ShapeDtypeStruct((N * L, D), hidden_states.dtype),
        # No grid: everything is VMEM-resident for the single invocation
        # (total residency is a few tens of KB << any VMEM budget).
        in_specs=[
            pl.BlockSpec(memory_space=pltpu.MemorySpace.VMEM),
            pl.BlockSpec(memory_space=pltpu.MemorySpace.VMEM),
            pl.BlockSpec(memory_space=pltpu.MemorySpace.VMEM),
        ],
        out_specs=pl.BlockSpec(memory_space=pltpu.MemorySpace.VMEM),
    )(x2, wqkv, bqkv)
    return out2.reshape(N, L, D)


# ----------------------------- pure-JAX reference ----------------------------
def reference_attention(x, wq, bq, wk, bk, wv, bv):
    N, L, D = x.shape

    def split(t):
        return t.reshape(N, L, NUM_HEADS, HEAD_DIM).transpose(0, 2, 1, 3)

    q = split(x @ wq + bq)
    k = split(x @ wk + bk)
    v = split(x @ wv + bv)
    s = jnp.einsum("nhqd,nhkd->nhqk", q, k) * SCALE
    p = jax.nn.softmax(s, axis=-1)
    ctx = jnp.einsum("nhqk,nhkd->nhqd", p, v)
    return ctx.transpose(0, 2, 1, 3).reshape(N, L, D)


# ----------------------------- main ------------------------------------------
if __name__ == "__main__":
    key = jax.random.PRNGKey(0)
    kx, kq, kk, kv, kbq, kbk, kbv = jax.random.split(key, 7)

    lim_w = math.sqrt(6.0 / (HIDDEN + HIDDEN))
    lim_b = 1.0 / math.sqrt(HIDDEN)

    x = jax.random.normal(kx, (BATCH, SEQ_LEN, HIDDEN), jnp.float32)
    wq = jax.random.uniform(kq, (HIDDEN, HIDDEN), jnp.float32, -lim_w, lim_w)
    wk = jax.random.uniform(kk, (HIDDEN, HIDDEN), jnp.float32, -lim_w, lim_w)
    wv = jax.random.uniform(kv, (HIDDEN, HIDDEN), jnp.float32, -lim_w, lim_w)
    bq = jax.random.uniform(kbq, (HIDDEN,), jnp.float32, -lim_b, lim_b)
    bk = jax.random.uniform(kbk, (HIDDEN,), jnp.float32, -lim_b, lim_b)
    bv = jax.random.uniform(kbv, (HIDDEN,), jnp.float32, -lim_b, lim_b)

    # One-time parameter stacking (not on the per-call path).
    wqkv, bqkv = stack_qkv_params(wq, bq, wk, bk, wv, bv)
    wqkv, bqkv = jax.block_until_ready((wqkv, bqkv))

    out = vit_mae_self_attention(x, wqkv, bqkv)
    out = jax.block_until_ready(out)

    ref = reference_attention(x, wq, bq, wk, bk, wv, bv)

    assert out.shape == (BATCH, SEQ_LEN, HIDDEN)
    assert bool(jnp.all(jnp.isfinite(out)))
    assert bool(jnp.allclose(out, ref, atol=2e-2, rtol=2e-2)), "mismatch vs reference"
    print("KERNEL_OK")
</pallas_src>

<mosaic_0001>
module attributes {stable_mosaic.version = 11 : i64} {
  func.func @mha_kernel(%arg0: memref<32x32xf32, #tpu.memory_space<vmem>>, %arg1: memref<32x96xf32, #tpu.memory_space<vmem>>, %arg2: memref<1x96xf32, #tpu.memory_space<vmem>>, %arg3: memref<32x32xf32, #tpu.memory_space<vmem>>) attributes {dimension_semantics = [], scalar_prefetch = 0 : i64, scratch_operands = 0 : i64, tpu.core_type = #tpu.core_type<tc>} {
    %c0 = arith.constant 0 : index
    %c0_0 = arith.constant 0 : index
    %0 = vector.load %arg0[%c0, %c0_0] : memref<32x32xf32, #tpu.memory_space<vmem>>, vector<32x32xf32>
    %c0_1 = arith.constant 0 : index
    %c0_2 = arith.constant 0 : index
    %1 = vector.load %arg1[%c0_1, %c0_2] : memref<32x96xf32, #tpu.memory_space<vmem>>, vector<32x96xf32>
    %cst = arith.constant dense<0.000000e+00> : vector<32x96xf32>
    %2 = tpu.matmul %0, %1, %cst {dimension_numbers = #tpu.dot_dimension_numbers<[1], [0], [0], [1], [0, 0, 1, 1], [], []>} : vector<32x32xf32>, vector<32x96xf32>, vector<32x96xf32> -> vector<32x96xf32>
    %c0_3 = arith.constant 0 : index
    %c0_4 = arith.constant 0 : index
    %3 = vector.load %arg2[%c0_3, %c0_4] : memref<1x96xf32, #tpu.memory_space<vmem>>, vector<1x96xf32>
    %4 = vector.broadcast %3 : vector<1x96xf32> to vector<32x96xf32>
    %5 = arith.addf %2, %4 : vector<32x96xf32>
    %6 = vector.extract_strided_slice %5 {offsets = [0, 0], sizes = [32, 32], strides = [1, 1]} : vector<32x96xf32> to vector<32x32xf32>
    %7 = vector.shape_cast %6 : vector<32x32xf32> to vector<2x16x4x8xf32>
    %8 = tpu.transpose %7, [0, 2, 1, 3] : vector<2x16x4x8xf32> -> vector<2x4x16x8xf32>
    %9 = vector.shape_cast %8 : vector<2x4x16x8xf32> to vector<8x16x8xf32>
    %10 = vector.extract_strided_slice %5 {offsets = [0, 32], sizes = [32, 32], strides = [1, 1]} : vector<32x96xf32> to vector<32x32xf32>
    %11 = vector.shape_cast %10 : vector<32x32xf32> to vector<2x16x4x8xf32>
    %12 = tpu.transpose %11, [0, 2, 1, 3] : vector<2x16x4x8xf32> -> vector<2x4x16x8xf32>
    %13 = vector.shape_cast %12 : vector<2x4x16x8xf32> to vector<8x16x8xf32>
    %14 = vector.extract_strided_slice %5 {offsets = [0, 64], sizes = [32, 32], strides = [1, 1]} : vector<32x96xf32> to vector<32x32xf32>
    %15 = vector.shape_cast %14 : vector<32x32xf32> to vector<2x16x4x8xf32>
    %16 = tpu.transpose %15, [0, 2, 1, 3] : vector<2x16x4x8xf32> -> vector<2x4x16x8xf32>
    %17 = vector.shape_cast %16 : vector<2x4x16x8xf32> to vector<8x16x8xf32>
    "tpu.trace_start"() <{level = 10 : i32, message = "bqd,bkd->bqk"}> : () -> ()
    %cst_5 = arith.constant dense<0.000000e+00> : vector<8x16x16xf32>
    %18 = tpu.matmul %9, %13, %cst_5 {dimension_numbers = #tpu.dot_dimension_numbers<[2], [2], [1], [1], [0, 0, 0, 1, 1, 1], [0], [0]>} : vector<8x16x8xf32>, vector<8x16x8xf32>, vector<8x16x16xf32> -> vector<8x16x16xf32>
    "tpu.trace_stop"() : () -> ()
    %cst_6 = arith.constant dense<0xFF800000> : vector<8x16xf32>
    %19 = vector.multi_reduction <maximumf>, %18, %cst_6 [2] : vector<8x16x16xf32> to vector<8x16xf32>
    %20 = vector.shape_cast %19 : vector<8x16xf32> to vector<8x16x1xf32>
    %21 = vector.broadcast %20 : vector<8x16x1xf32> to vector<8x16x16xf32>
    %22 = arith.subf %18, %21 : vector<8x16x16xf32>
    %23 = math.exp %22 : vector<8x16x16xf32>
    %cst_7 = arith.constant dense<0.000000e+00> : vector<8x16xf32>
    %24 = vector.multi_reduction <add>, %23, %cst_7 [2] : vector<8x16x16xf32> to vector<8x16xf32>
    %25 = vector.shape_cast %24 : vector<8x16xf32> to vector<8x16x1xf32>
    %26 = tpu.reciprocal %25 {approx = true} : vector<8x16x1xf32> -> vector<8x16x1xf32>
    %27 = vector.broadcast %26 : vector<8x16x1xf32> to vector<8x16x16xf32>
    %28 = arith.mulf %23, %27 : vector<8x16x16xf32>
    "tpu.trace_start"() <{level = 10 : i32, message = "bqk,bkd->bqd"}> : () -> ()
    %cst_8 = arith.constant dense<0.000000e+00> : vector<8x16x8xf32>
    %29 = tpu.matmul %28, %17, %cst_8 {dimension_numbers = #tpu.dot_dimension_numbers<[2], [1], [1], [2], [0, 0, 0, 1, 1, 2], [0], [0]>} : vector<8x16x16xf32>, vector<8x16x8xf32>, vector<8x16x8xf32> -> vector<8x16x8xf32>
    "tpu.trace_stop"() : () -> ()
    %30 = vector.shape_cast %29 : vector<8x16x8xf32> to vector<2x4x16x8xf32>
    %31 = tpu.transpose %30, [0, 2, 1, 3] : vector<2x4x16x8xf32> -> vector<2x16x4x8xf32>
    %32 = vector.shape_cast %31 : vector<2x16x4x8xf32> to vector<32x32xf32>
    %c0_9 = arith.constant 0 : index
    %c0_10 = arith.constant 0 : index
    %33 = vector.load %arg3[%c0_9, %c0_10] : memref<32x32xf32, #tpu.memory_space<vmem>>, vector<32x32xf32>
    tpu.vector_store %arg3[%c0_9, %c0_10], %32 {strides = array<i32>} : memref<32x32xf32, #tpu.memory_space<vmem>>, vector<32x32xf32>,
    return
  }
}

</mosaic_0001>

<llo_original>
// kernel: tpu_custom_call.1
$region0: #{tpu_custom_call.1}
  #allocation0 [shape = 'u32[]', space=smem, size = 0x4, offset = 0x4, fixed_abs, tag = 'smem constant byte address 0x4 - core index']
  #allocation1 [shape = 'u32[144,128]{1,0:T(1,128)}', space=vmem, size = 0x12000, scoped, tag = 'internal scratch']
  %s0 = inlined_call_operand.hbm [shape: f32[32,32], index: 0, kind: input, shape index: {}]
  %s1 = inlined_call_operand.hbm [shape: f32[32,96], index: 1, kind: input, shape index: {}]
  %s2 = inlined_call_operand.vmem [shape: f32[1,96], index: 2, kind: input, shape index: {}]
  %s3 = inlined_call_operand.hbm [shape: f32[32,32], index: 3, kind: output, shape index: {}]
  %s4 = sld [smem:[#allocation0]]
  $region30: #{tpu_custom_call.1} parent=0
    _
  %s6 = ssub.s32 1, %s4
  %s7 = scalar_select 0, %s6, %s4
  $region1: #{tpu_custom_call.1} parent=0
    #allocation2 [shape = 'u8[16384]{0}', space=vmem, size = 0x4000, scoped, tag = 'input window, operand 0, single buffered']
    #allocation3 [shape = 's32[1]{0}', space=sflag, size = 0x4, scoped, tag = 'scoped memory for tpu_custom_call.1']
    #allocation4 [shape = 's32[1]{0}', space=sflag, size = 0x4, scoped, tag = 'scoped memory for tpu_custom_call.1']
    #allocation5 [shape = 'u8[16384]{0}', space=vmem, size = 0x4000, scoped, tag = 'input window, operand 1, single buffered']
    #allocation6 [shape = 's32[1]{0}', space=sflag, size = 0x4, scoped, tag = 'scoped memory for tpu_custom_call.1']
    #allocation7 [shape = 'u8[16384]{0}', space=vmem, size = 0x4000, scoped, tag = 'output window, operand 0, single buffered']
    %8 = vsyncpa [#allocation3], 0
    %9 = vsyncpa [#allocation6], 0
    %10 = vsyncpa [#allocation4], 0
    // Predicated region
    $region2: #{tpu_custom_call.1} parent=1 // pred_check
      _
    $region3: #{tpu_custom_call.1} parent=1 // pred_check_branch
      %12 = sbr.rel (0) target = $region5
    $region4: #{tpu_custom_call.1} parent=1 // pred_region
      %s14 = ssub.s32 512, 512
      %15 = vsyncadd [#allocation3], %s14
      %s16 = sshll.u32 [#allocation2], 4
      %s17 = int_to_ptr.vmem [resolvable:$true] %s16
      %22 = dma.hbm_to_vmem [thread:$0]  %s0, 512, %s17, [#allocation3], 128, 128, 8
    $region5: #{tpu_custom_call.1} parent=1 // pred_fallthru
      _
    // Predicated region
    $region6: #{tpu_custom_call.1} parent=1 // pred_check
      _
    $region7: #{tpu_custom_call.1} parent=1 // pred_check_branch
      %24 = sbr.rel (0) target = $region9
    $region8: #{tpu_custom_call.1} parent=1 // pred_region
      %s26 = ssub.s32 512, 512
      %27 = vsyncadd [#allocation6], %s26
      %s28 = sshll.u32 [#allocation5], 4
      %s29 = int_to_ptr.vmem [resolvable:$true] %s28
      %34 = dma.hbm_to_vmem [thread:$0]  %s1, 512, %s29, [#allocation6], 128, 128, 8
    $region9: #{tpu_custom_call.1} parent=1 // pred_fallthru
      _
    // Predicated region
    $region10: #{tpu_custom_call.1} parent=1 // pred_check
      _
    $region11: #{tpu_custom_call.1} parent=1 // pred_check_branch
      %36 = sbr.rel (0) target = $region13
    $region12: #{tpu_custom_call.1} parent=1 // pred_region
      _
    $region13: #{tpu_custom_call.1} parent=1 // pred_fallthru
      _
    // Predicated region
    $region14: #{tpu_custom_call.1} parent=1 // pred_check
      _
    $region15: #{tpu_custom_call.1} parent=1 // pred_check_branch
      %38 = sbr.rel (0) target = $region17
    $region16: #{tpu_custom_call.1} parent=1 // pred_region
      %39 = dma.done [#allocation3], 512
    $region17: #{tpu_custom_call.1} parent=1 // pred_fallthru
      _
    // Predicated region
    $region18: #{tpu_custom_call.1} parent=1 // pred_check
      _
    $region19: #{tpu_custom_call.1} parent=1 // pred_check_branch
      %41 = sbr.rel (0) target = $region21
    $region20: #{tpu_custom_call.1} parent=1 // pred_region
      %42 = dma.done [#allocation6], 512
    $region21: #{tpu_custom_call.1} parent=1 // pred_fallthru
      _
    %v43 = vld [vmem:[#allocation2] sm:$0xff]
    %v44 = vld [vmem:[#allocation2 + $0x8] sm:$0xff]
    %v45 = vld [vmem:[#allocation2 + $0x10] sm:$0xff]
    %v46 = vld [vmem:[#allocation2 + $0x18] sm:$0xff]
    %v47 = vld [vmem:[#allocation5] sm:$0xff]
    %v48 = vld [vmem:[#allocation5 + $0x8] sm:$0xff]
    %v49 = vld [vmem:[#allocation5 + $0x10] sm:$0xff]
    %v50 = vld [vmem:[#allocation5 + $0x18] sm:$0xff]
    %v51 = vld [vmem:[%s2] sm:$0x1]
    %v53 = vlaneseq
    %v54 = vshrl.u32 %v53, 7
    %v55 = vsub.s32 0, %v54
    %v56 = vrot.slane %v51, %v55
    %vm58 = vcmask 261120
    %v60 = vsel %vm58, %v43, 0
    %v63 = vsel %vm58, %v44, 0
    %v66 = vsel %vm58, %v45, 0
    %v69 = vsel %vm58, %v46, 0
    %71 = vmatprep.subr.mxu0 0.0
    %72 = vmatpush1.msra.mxu0 %v47
    %73 = vmatprep.subr.mxu0 0.0
    %74 = vmatpush1.msra.mxu0 %v48
    %75 = vmatprep.subr.mxu0 0.0
    %76 = vmatpush1.msra.mxu0 %v49
    %77 = vmatprep.subr.mxu0 0.0
    %78 = vmatpush1.msra.mxu0 %v50
    %79 = vmatprep.subr.mxu0 0.0
    %80 = vmatpush1.msra.mxu0 0.0
    %81 = vmatprep.subr.mxu0 0.0
    %82 = vmatpush1.msra.mxu0 0.0
    %83 = vmatprep.subr.mxu0 0.0
    %84 = vmatpush1.msra.mxu0 0.0
    %85 = vmatprep.subr.mxu0 0.0
    %86 = vmatpush1.msra.mxu0 0.0
    %87 = vmatprep.subr.mxu0 0.0
    %88 = vmatpush1.msra.mxu0 0.0
    %89 = vmatprep.subr.mxu0 0.0
    %90 = vmatpush1.msra.mxu0 0.0
    %91 = vmatprep.subr.mxu0 0.0
    %92 = vmatpush1.msra.mxu0 0.0
    %93 = vmatprep.subr.mxu0 0.0
    %94 = vmatpush1.msra.mxu0 0.0
    %95 = vmatprep.subr.mxu0 0.0
    %96 = vmatpush1.msra.mxu0 0.0
    %97 = vmatprep.subr.mxu0 0.0
    %98 = vmatpush1.msra.mxu0 0.0
    %99 = vmatprep.subr.mxu0 0.0
    %100 = vmatpush1.msra.mxu0 0.0
    %101 = vmatprep.subr.mxu0 0.0
    %102 = vmatpush1.msra.mxu0 0.0
    %103 = vmatprep.subr.mxu0 0.0
    %104 = vmatpush1.msra.mxu0 0.0
    %105 = vmatprep.subr.mxu0 0.0
    %106 = vmatpush1.msra.mxu0 0.0
    %107 = vmatprep.subr.mxu0 0.0
    %108 = vmatpush1.msra.mxu0 0.0
    %109 = vmatprep.subr.mxu0 0.0
    %110 = vmatpush1.msra.mxu0 0.0
    %111 = vmatprep.subr.mxu0 0.0
    %112 = vmatpush1.msra.mxu0 0.0
    %113 = vmatprep.subr.mxu0 0.0
    %114 = vmatpush1.msra.mxu0 0.0
    %115 = vmatprep.subr.mxu0 0.0
    %116 = vmatpush1.msra.mxu0 0.0
    %117 = vmatprep.subr.mxu0 0.0
    %118 = vmatpush1.msra.mxu0 0.0
    %119 = vmatprep.subr.mxu0 0.0
    %120 = vmatpush1.msra.mxu0 0.0
    %121 = vmatprep.subr.mxu0 0.0
    %122 = vmatpush1.msra.mxu0 0.0
    %123 = vmatprep.subr.mxu0 0.0
    %124 = vmatpush1.msra.mxu0 0.0
    %125 = vmatprep.subr.mxu0 0.0
    %126 = vmatpush1.msra.mxu0 0.0
    %127 = vmatprep.subr.mxu0 0.0
    %128 = vmatpush1.msra.mxu0 0.0
    %129 = vmatprep.subr.mxu0 0.0
    %130 = vmatpush1.msra.mxu0 0.0
    %131 = vmatprep.subr.mxu0 0.0
    %132 = vmatpush1.msra.mxu0 0.0
    %133 = vmatprep.subr.mxu0 0.0
    %134 = vmatpush1.msra.mxu0 0.0
    %135 = vmatprep.mubr.f32.mxu0 0.0
    %136 = vmatmul.mubr.f32.gmra.mrb[0].mxu0 %v60
    %v137 = vpop.f32.mrb[0].mxu0
    %v138 = vadd.f32 %v56, %v137
    %v139 = vpop.f32.mrb[0].mxu0
    %140 = vmatprep.mubr.f32.mxu0 0.0
    %141 = vmatmul.mubr.f32.gmra.mrb[0].mxu0 %v63
    %v142 = vpop.f32.mrb[0].mxu0
    %v143 = vadd.f32 %v56, %v142
    %v144 = vpop.f32.mrb[0].mxu0
    %145 = vmatprep.mubr.f32.mxu0 0.0
    %146 = vmatmul.mubr.f32.gmra.mrb[0].mxu0 %v66
    %v147 = vpop.f32.mrb[0].mxu0
    %v148 = vadd.f32 %v56, %v147
    %v149 = vpop.f32.mrb[0].mxu0
    %150 = vmatprep.mubr.f32.mxu0 0.0
    %151 = vmatmul.mubr.f32.gmra.mrb[0].mxu0 %v69
    %v152 = vpop.f32.mrb[0].mxu0
    %v153 = vadd.f32 %v56, %v152
    %v154 = vpop.f32.mrb[0].mxu0
    %155 = vdwg.mxu0
    %160 = vrot.lane.b32.xlu0 %v138, 120
    %v161 = vpop.permute.xlu0 %160
    %162 = vrot.lane.b32.xlu0 %v143, 120
    %v163 = vpop.permute.xlu0 %162
    %164 = vrot.lane.b32.xlu0 %v148, 120
    %v165 = vpop.permute.xlu0 %164
    %166 = vrot.lane.b32.xlu0 %v153, 120
    %v167 = vpop.permute.xlu0 %166
    %172 = vrot.lane.b32.xlu0 %v138, 112
    %v173 = vpop.permute.xlu0 %172
    %174 = vrot.lane.b32.xlu0 %v143, 112
    %v175 = vpop.permute.xlu0 %174
    %176 = vrot.lane.b32.xlu0 %v148, 112
    %v177 = vpop.permute.xlu0 %176
    %178 = vrot.lane.b32.xlu0 %v153, 112
    %v179 = vpop.permute.xlu0 %178
    %184 = vrot.lane.b32.xlu0 %v138, 104
    %v185 = vpop.permute.xlu0 %184
    %186 = vrot.lane.b32.xlu0 %v143, 104
    %v187 = vpop.permute.xlu0 %186
    %188 = vrot.lane.b32.xlu0 %v148, 104
    %v189 = vpop.permute.xlu0 %188
    %190 = vrot.lane.b32.xlu0 %v153, 104
    %v191 = vpop.permute.xlu0 %190
    %v196 = vcombine.low %v138, %v173
    %v197 = vcombine.high %v138, %v173
    %v199 = vunpack.c.l.s4 1983009808
    %v200 = vunpack.c.0.s8 %v199
    %v201 = vlaneseq
    %v202 = vshrl.u32 %v201, 7
    %v203 = vsub.s32 %v200, %v202
    %v204 = vrot.slane %v196, %v203
    %v206 = vunpack.c.l.s4 1983009808
    %v207 = vunpack.c.0.s8 %v206
    %v208 = vlaneseq
    %v209 = vshrl.u32 %v208, 7
    %v210 = vsub.s32 %v207, %v209
    %v211 = vrot.slane %v197, %v210
    %v212 = vcombine.low %v161, %v185
    %v213 = vcombine.high %v161, %v185
    %v215 = vunpack.c.l.s4 1983009808
    %v216 = vunpack.c.0.s8 %v215
    %v217 = vlaneseq
    %v218 = vshrl.u32 %v217, 7
    %v219 = vsub.s32 %v216, %v218
    %v220 = vrot.slane %v212, %v219
    %v222 = vunpack.c.l.s4 1983009808
    %v223 = vunpack.c.0.s8 %v222
    %v224 = vlaneseq
    %v225 = vshrl.u32 %v224, 7
    %v226 = vsub.s32 %v223, %v225
    %v227 = vrot.slane %v213, %v226
    %v228 = vcombine.low %v204, %v220
    %v229 = vcombine.high %v204, %v220
    %v231 = vunpack.c.l.s4 1934713408
    %v232 = vunpack.c.0.s8 %v231
    %v233 = vlaneseq
    %v234 = vshrl.u32 %v233, 7
    %v235 = vsub.s32 %v232, %v234
    %v236 = vrot.slane %v228, %v235
    %v238 = vunpack.c.l.s4 1934713408
    %v239 = vunpack.c.0.s8 %v238
    %v240 = vlaneseq
    %v241 = vshrl.u32 %v240, 7
    %v242 = vsub.s32 %v239, %v241
    %v243 = vrot.slane %v229, %v242
    %v244 = vcombine.low %v211, %v227
    %v245 = vcombine.high %v211, %v227
    %v247 = vunpack.c.l.s4 1934713408
    %v248 = vunpack.c.0.s8 %v247
    %v249 = vlaneseq
    %v250 = vshrl.u32 %v249, 7
    %v251 = vsub.s32 %v248, %v250
    %v252 = vrot.slane %v244, %v251
    %v254 = vunpack.c.l.s4 1934713408
    %v255 = vunpack.c.0.s8 %v254
    %v256 = vlaneseq
    %v257 = vshrl.u32 %v256, 7
    %v258 = vsub.s32 %v255, %v257
    %v259 = vrot.slane %v245, %v258
    %v260 = vcombine.high %v236, 0.0
    %v261 = vcombine.high %v243, 0.0
    %v262 = vcombine.high %v252, 0.0
    %v263 = vcombine.high %v259, 0.0
    %v264 = vcombine.low %v143, %v175
    %v265 = vcombine.high %v143, %v175
    %v267 = vunpack.c.l.s4 1983009808
    %v268 = vunpack.c.0.s8 %v267
    %v269 = vlaneseq
    %v270 = vshrl.u32 %v269, 7
    %v271 = vsub.s32 %v268, %v270
    %v272 = vrot.slane %v264, %v271
    %v274 = vunpack.c.l.s4 1983009808
    %v275 = vunpack.c.0.s8 %v274
    %v276 = vlaneseq
    %v277 = vshrl.u32 %v276, 7
    %v278 = vsub.s32 %v275, %v277
    %v279 = vrot.slane %v265, %v278
    %v280 = vcombine.low %v163, %v187
    %v281 = vcombine.high %v163, %v187
    %v283 = vunpack.c.l.s4 1983009808
    %v284 = vunpack.c.0.s8 %v283
    %v285 = vlaneseq
    %v286 = vshrl.u32 %v285, 7
    %v287 = vsub.s32 %v284, %v286
    %v288 = vrot.slane %v280, %v287
    %v290 = vunpack.c.l.s4 1983009808
    %v291 = vunpack.c.0.s8 %v290
    %v292 = vlaneseq
    %v293 = vshrl.u32 %v292, 7
    %v294 = vsub.s32 %v291, %v293
    %v295 = vrot.slane %v281, %v294
    %v296 = vcombine.low %v272, %v288
    %v297 = vcombine.high %v272, %v288
    %v299 = vunpack.c.l.s4 1934713408
    %v300 = vunpack.c.0.s8 %v299
    %v301 = vlaneseq
    %v302 = vshrl.u32 %v301, 7
    %v303 = vsub.s32 %v300, %v302
    %v304 = vrot.slane %v296, %v303
    %v306 = vunpack.c.l.s4 1934713408
    %v307 = vunpack.c.0.s8 %v306
    %v308 = vlaneseq
    %v309 = vshrl.u32 %v308, 7
    %v310 = vsub.s32 %v307, %v309
    %v311 = vrot.slane %v297, %v310
    %v312 = vcombine.low %v279, %v295
    %v313 = vcombine.high %v279, %v295
    %v315 = vunpack.c.l.s4 1934713408
    %v316 = vunpack.c.0.s8 %v315
    %v317 = vlaneseq
    %v318 = vshrl.u32 %v317, 7
    %v319 = vsub.s32 %v316, %v318
    %v320 = vrot.slane %v312, %v319
    %v322 = vunpack.c.l.s4 1934713408
    %v323 = vunpack.c.0.s8 %v322
    %v324 = vlaneseq
    %v325 = vshrl.u32 %v324, 7
    %v326 = vsub.s32 %v323, %v325
    %v327 = vrot.slane %v313, %v326
    %v328 = vcombine.high %v304, 0.0
    %v329 = vcombine.high %v311, 0.0
    %v330 = vcombine.high %v320, 0.0
    %v331 = vcombine.high %v327, 0.0
    %v332 = vcombine.low %v148, %v177
    %v333 = vcombine.high %v148, %v177
    %v335 = vunpack.c.l.s4 1983009808
    %v336 = vunpack.c.0.s8 %v335
    %v337 = vlaneseq
    %v338 = vshrl.u32 %v337, 7
    %v339 = vsub.s32 %v336, %v338
    %v340 = vrot.slane %v332, %v339
    %v342 = vunpack.c.l.s4 1983009808
    %v343 = vunpack.c.0.s8 %v342
    %v344 = vlaneseq
    %v345 = vshrl.u32 %v344, 7
    %v346 = vsub.s32 %v343, %v345
    %v347 = vrot.slane %v333, %v346
    %v348 = vcombine.low %v165, %v189
    %v349 = vcombine.high %v165, %v189
    %v351 = vunpack.c.l.s4 1983009808
    %v352 = vunpack.c.0.s8 %v351
    %v353 = vlaneseq
    %v354 = vshrl.u32 %v353, 7
    %v355 = vsub.s32 %v352, %v354
    %v356 = vrot.slane %v348, %v355
    %v358 = vunpack.c.l.s4 1983009808
    %v359 = vunpack.c.0.s8 %v358
    %v360 = vlaneseq
    %v361 = vshrl.u32 %v360, 7
    %v362 = vsub.s32 %v359, %v361
    %v363 = vrot.slane %v349, %v362
    %v364 = vcombine.low %v340, %v356
    %v365 = vcombine.high %v340, %v356
    %v367 = vunpack.c.l.s4 1934713408
    %v368 = vunpack.c.0.s8 %v367
    %v369 = vlaneseq
    %v370 = vshrl.u32 %v369, 7
    %v371 = vsub.s32 %v368, %v370
    %v372 = vrot.slane %v364, %v371
    %v374 = vunpack.c.l.s4 1934713408
    %v375 = vunpack.c.0.s8 %v374
    %v376 = vlaneseq
    %v377 = vshrl.u32 %v376, 7
    %v378 = vsub.s32 %v375, %v377
    %v379 = vrot.slane %v365, %v378
    %v380 = vcombine.low %v347, %v363
    %v381 = vcombine.high %v347, %v363
    %v383 = vunpack.c.l.s4 1934713408
    %v384 = vunpack.c.0.s8 %v383
    %v385 = vlaneseq
    %v386 = vshrl.u32 %v385, 7
    %v387 = vsub.s32 %v384, %v386
    %v388 = vrot.slane %v380, %v387
    %v390 = vunpack.c.l.s4 1934713408
    %v391 = vunpack.c.0.s8 %v390
    %v392 = vlaneseq
    %v393 = vshrl.u32 %v392, 7
    %v394 = vsub.s32 %v391, %v393
    %v395 = vrot.slane %v381, %v394
    %v396 = vcombine.high %v372, 0.0
    %v397 = vcombine.high %v379, 0.0
    %v398 = vcombine.high %v388, 0.0
    %v399 = vcombine.high %v395, 0.0
    %v400 = vcombine.low %v153, %v179
    %v401 = vcombine.high %v153, %v179
    %v403 = vunpack.c.l.s4 1983009808
    %v404 = vunpack.c.0.s8 %v403
    %v405 = vlaneseq
    %v406 = vshrl.u32 %v405, 7
    %v407 = vsub.s32 %v404, %v406
    %v408 = vrot.slane %v400, %v407
    %v410 = vunpack.c.l.s4 1983009808
    %v411 = vunpack.c.0.s8 %v410
    %v412 = vlaneseq
    %v413 = vshrl.u32 %v412, 7
    %v414 = vsub.s32 %v411, %v413
    %v415 = vrot.slane %v401, %v414
    %v416 = vcombine.low %v167, %v191
    %v417 = vcombine.high %v167, %v191
    %v419 = vunpack.c.l.s4 1983009808
    %v420 = vunpack.c.0.s8 %v419
    %v421 = vlaneseq
    %v422 = vshrl.u32 %v421, 7
    %v423 = vsub.s32 %v420, %v422
    %v424 = vrot.slane %v416, %v423
    %v426 = vunpack.c.l.s4 1983009808
    %v427 = vunpack.c.0.s8 %v426
    %v428 = vlaneseq
    %v429 = vshrl.u32 %v428, 7
    %v430 = vsub.s32 %v427, %v429
    %v431 = vrot.slane %v417, %v430
    %v432 = vcombine.low %v408, %v424
    %v433 = vcombine.high %v408, %v424
    %v435 = vunpack.c.l.s4 1934713408
    %v436 = vunpack.c.0.s8 %v435
    %v437 = vlaneseq
    %v438 = vshrl.u32 %v437, 7
    %v439 = vsub.s32 %v436, %v438
    %v440 = vrot.slane %v432, %v439
    %v442 = vunpack.c.l.s4 1934713408
    %v443 = vunpack.c.0.s8 %v442
    %v444 = vlaneseq
    %v445 = vshrl.u32 %v444, 7
    %v446 = vsub.s32 %v443, %v445
    %v447 = vrot.slane %v433, %v446
    %v448 = vcombine.low %v415, %v431
    %v449 = vcombine.high %v415, %v431
    %v451 = vunpack.c.l.s4 1934713408
    %v452 = vunpack.c.0.s8 %v451
    %v453 = vlaneseq
    %v454 = vshrl.u32 %v453, 7
    %v455 = vsub.s32 %v452, %v454
    %v456 = vrot.slane %v448, %v455
    %v458 = vunpack.c.l.s4 1934713408
    %v459 = vunpack.c.0.s8 %v458
    %v460 = vlaneseq
    %v461 = vshrl.u32 %v460, 7
    %v462 = vsub.s32 %v459, %v461
    %v463 = vrot.slane %v449, %v462
    %v464 = vcombine.high %v440, 0.0
    %v465 = vcombine.high %v447, 0.0
    %v466 = vcombine.high %v456, 0.0
    %v467 = vcombine.high %v463, 0.0
    %v468 = vcombine.low %v236, %v243
    %v470 = vunpack.c.l.s4 1983009808
    %v471 = vunpack.c.0.s8 %v470
    %v472 = vlaneseq
    %v473 = vshrl.u32 %v472, 7
    %v474 = vsub.s32 %v471, %v473
    %v475 = vrot.slane %v468, %v474
    %v476 = vcombine.low %v260, %v261
    %v478 = vunpack.c.l.s4 1983009808
    %v479 = vunpack.c.0.s8 %v478
    %v480 = vlaneseq
    %v481 = vshrl.u32 %v480, 7
    %v482 = vsub.s32 %v479, %v481
    %v483 = vrot.slane %v476, %v482
    %v484 = vcombine.low %v252, %v259
    %v486 = vunpack.c.l.s4 1983009808
    %v487 = vunpack.c.0.s8 %v486
    %v488 = vlaneseq
    %v489 = vshrl.u32 %v488, 7
    %v490 = vsub.s32 %v487, %v489
    %v491 = vrot.slane %v484, %v490
    %v492 = vcombine.low %v262, %v263
    %v494 = vunpack.c.l.s4 1983009808
    %v495 = vunpack.c.0.s8 %v494
    %v496 = vlaneseq
    %v497 = vshrl.u32 %v496, 7
    %v498 = vsub.s32 %v495, %v497
    %v499 = vrot.slane %v492, %v498
    %v500 = vcombine.low %v475, %v483
    %v501 = vcombine.high %v475, %v483
    %v503 = vunpack.c.l.s4 1934713408
    %v504 = vunpack.c.0.s8 %v503
    %v505 = vlaneseq
    %v506 = vshrl.u32 %v505, 7
    %v507 = vsub.s32 %v504, %v506
    %v508 = vrot.slane %v500, %v507
    %v510 = vunpack.c.l.s4 1934713408
    %v511 = vunpack.c.0.s8 %v510
    %v512 = vlaneseq
    %v513 = vshrl.u32 %v512, 7
    %v514 = vsub.s32 %v511, %v513
    %v515 = vrot.slane %v501, %v514
    %v516 = vcombine.low %v491, %v499
    %v517 = vcombine.high %v491, %v499
    %v519 = vunpack.c.l.s4 1934713408
    %v520 = vunpack.c.0.s8 %v519
    %v521 = vlaneseq
    %v522 = vshrl.u32 %v521, 7
    %v523 = vsub.s32 %v520, %v522
    %v524 = vrot.slane %v516, %v523
    %v526 = vunpack.c.l.s4 1934713408
    %v527 = vunpack.c.0.s8 %v526
    %v528 = vlaneseq
    %v529 = vshrl.u32 %v528, 7
    %v530 = vsub.s32 %v527, %v529
    %v531 = vrot.slane %v517, %v530
    %v532 = vcombine.low %v508, %v524
    %v533 = vcombine.high %v508, %v524
    %v534 = vcombine.low %v515, %v531
    %v535 = vcombine.high %v515, %v531
    %v536 = vcombine.low %v304, %v311
    %v538 = vunpack.c.l.s4 1983009808
    %v539 = vunpack.c.0.s8 %v538
    %v540 = vlaneseq
    %v541 = vshrl.u32 %v540, 7
    %v542 = vsub.s32 %v539, %v541
    %v543 = vrot.slane %v536, %v542
    %v544 = vcombine.low %v328, %v329
    %v546 = vunpack.c.l.s4 1983009808
    %v547 = vunpack.c.0.s8 %v546
    %v548 = vlaneseq
    %v549 = vshrl.u32 %v548, 7
    %v550 = vsub.s32 %v547, %v549
    %v551 = vrot.slane %v544, %v550
    %v552 = vcombine.low %v320, %v327
    %v554 = vunpack.c.l.s4 1983009808
    %v555 = vunpack.c.0.s8 %v554
    %v556 = vlaneseq
    %v557 = vshrl.u32 %v556, 7
    %v558 = vsub.s32 %v555, %v557
    %v559 = vrot.slane %v552, %v558
    %v560 = vcombine.low %v330, %v331
    %v562 = vunpack.c.l.s4 1983009808
    %v563 = vunpack.c.0.s8 %v562
    %v564 = vlaneseq
    %v565 = vshrl.u32 %v564, 7
    %v566 = vsub.s32 %v563, %v565
    %v567 = vrot.slane %v560, %v566
    %v568 = vcombine.low %v543, %v551
    %v569 = vcombine.high %v543, %v551
    %v571 = vunpack.c.l.s4 1934713408
    %v572 = vunpack.c.0.s8 %v571
    %v573 = vlaneseq
    %v574 = vshrl.u32 %v573, 7
    %v575 = vsub.s32 %v572, %v574
    %v576 = vrot.slane %v568, %v575
    %v578 = vunpack.c.l.s4 1934713408
    %v579 = vunpack.c.0.s8 %v578
    %v580 = vlaneseq
    %v581 = vshrl.u32 %v580, 7
    %v582 = vsub.s32 %v579, %v581
    %v583 = vrot.slane %v569, %v582
    %v584 = vcombine.low %v559, %v567
    %v585 = vcombine.high %v559, %v567
    %v587 = vunpack.c.l.s4 1934713408
    %v588 = vunpack.c.0.s8 %v587
    %v589 = vlaneseq
    %v590 = vshrl.u32 %v589, 7
    %v591 = vsub.s32 %v588, %v590
    %v592 = vrot.slane %v584, %v591
    %v594 = vunpack.c.l.s4 1934713408
    %v595 = vunpack.c.0.s8 %v594
    %v596 = vlaneseq
    %v597 = vshrl.u32 %v596, 7
    %v598 = vsub.s32 %v595, %v597
    %v599 = vrot.slane %v585, %v598
    %v600 = vcombine.low %v576, %v592
    %v601 = vcombine.high %v576, %v592
    %v602 = vcombine.low %v583, %v599
    %v603 = vcombine.high %v583, %v599
    %v604 = vcombine.low %v372, %v379
    %v606 = vunpack.c.l.s4 1983009808
    %v607 = vunpack.c.0.s8 %v606
    %v608 = vlaneseq
    %v609 = vshrl.u32 %v608, 7
    %v610 = vsub.s32 %v607, %v609
    %v611 = vrot.slane %v604, %v610
    %v612 = vcombine.low %v396, %v397
    %v614 = vunpack.c.l.s4 1983009808
    %v615 = vunpack.c.0.s8 %v614
    %v616 = vlaneseq
    %v617 = vshrl.u32 %v616, 7
    %v618 = vsub.s32 %v615, %v617
    %v619 = vrot.slane %v612, %v618
    %v620 = vcombine.low %v388, %v395
    %v622 = vunpack.c.l.s4 1983009808
    %v623 = vunpack.c.0.s8 %v622
    %v624 = vlaneseq
    %v625 = vshrl.u32 %v624, 7
    %v626 = vsub.s32 %v623, %v625
    %v627 = vrot.slane %v620, %v626
    %v628 = vcombine.low %v398, %v399
    %v630 = vunpack.c.l.s4 1983009808
    %v631 = vunpack.c.0.s8 %v630
    %v632 = vlaneseq
    %v633 = vshrl.u32 %v632, 7
    %v634 = vsub.s32 %v631, %v633
    %v635 = vrot.slane %v628, %v634
    %v636 = vcombine.low %v611, %v619
    %v637 = vcombine.high %v611, %v619
    %v639 = vunpack.c.l.s4 1934713408
    %v640 = vunpack.c.0.s8 %v639
    %v641 = vlaneseq
    %v642 = vshrl.u32 %v641, 7
    %v643 = vsub.s32 %v640, %v642
    %v644 = vrot.slane %v636, %v643
    %v646 = vunpack.c.l.s4 1934713408
    %v647 = vunpack.c.0.s8 %v646
    %v648 = vlaneseq
    %v649 = vshrl.u32 %v648, 7
    %v650 = vsub.s32 %v647, %v649
    %v651 = vrot.slane %v637, %v650
    %v652 = vcombine.low %v627, %v635
    %v653 = vcombine.high %v627, %v635
    %v655 = vunpack.c.l.s4 1934713408
    %v656 = vunpack.c.0.s8 %v655
    %v657 = vlaneseq
    %v658 = vshrl.u32 %v657, 7
    %v659 = vsub.s32 %v656, %v658
    %v660 = vrot.slane %v652, %v659
    %v662 = vunpack.c.l.s4 1934713408
    %v663 = vunpack.c.0.s8 %v662
    %v664 = vlaneseq
    %v665 = vshrl.u32 %v664, 7
    %v666 = vsub.s32 %v663, %v665
    %v667 = vrot.slane %v653, %v666
    %v668 = vcombine.low %v644, %v660
    %v669 = vcombine.high %v644, %v660
    %v670 = vcombine.low %v651, %v667
    %v671 = vcombine.high %v651, %v667
    %v672 = vcombine.low %v440, %v447
    %v674 = vunpack.c.l.s4 1983009808
    %v675 = vunpack.c.0.s8 %v674
    %v676 = vlaneseq
    %v677 = vshrl.u32 %v676, 7
    %v678 = vsub.s32 %v675, %v677
    %v679 = vrot.slane %v672, %v678
    %v680 = vcombine.low %v464, %v465
    %v682 = vunpack.c.l.s4 1983009808
    %v683 = vunpack.c.0.s8 %v682
    %v684 = vlaneseq
    %v685 = vshrl.u32 %v684, 7
    %v686 = vsub.s32 %v683, %v685
    %v687 = vrot.slane %v680, %v686
    %v688 = vcombine.low %v456, %v463
    %v690 = vunpack.c.l.s4 1983009808
    %v691 = vunpack.c.0.s8 %v690
    %v692 = vlaneseq
    %v693 = vshrl.u32 %v692, 7
    %v694 = vsub.s32 %v691, %v693
    %v695 = vrot.slane %v688, %v694
    %v696 = vcombine.low %v466, %v467
    %v698 = vunpack.c.l.s4 1983009808
    %v699 = vunpack.c.0.s8 %v698
    %v700 = vlaneseq
    %v701 = vshrl.u32 %v700, 7
    %v702 = vsub.s32 %v699, %v701
    %v703 = vrot.slane %v696, %v702
    %v704 = vcombine.low %v679, %v687
    %v705 = vcombine.high %v679, %v687
    %v707 = vunpack.c.l.s4 1934713408
    %v708 = vunpack.c.0.s8 %v707
    %v709 = vlaneseq
    %v710 = vshrl.u32 %v709, 7
    %v711 = vsub.s32 %v708, %v710
    %v712 = vrot.slane %v704, %v711
    %v714 = vunpack.c.l.s4 1934713408
    %v715 = vunpack.c.0.s8 %v714
    %v716 = vlaneseq
    %v717 = vshrl.u32 %v716, 7
    %v718 = vsub.s32 %v715, %v717
    %v719 = vrot.slane %v705, %v718
    %v720 = vcombine.low %v695, %v703
    %v721 = vcombine.high %v695, %v703
    %v723 = vunpack.c.l.s4 1934713408
    %v724 = vunpack.c.0.s8 %v723
    %v725 = vlaneseq
    %v726 = vshrl.u32 %v725, 7
    %v727 = vsub.s32 %v724, %v726
    %v728 = vrot.slane %v720, %v727
    %v730 = vunpack.c.l.s4 1934713408
    %v731 = vunpack.c.0.s8 %v730
    %v732 = vlaneseq
    %v733 = vshrl.u32 %v732, 7
    %v734 = vsub.s32 %v731, %v733
    %v735 = vrot.slane %v721, %v734
    %v736 = vcombine.low %v712, %v728
    %v737 = vcombine.high %v712, %v728
    %v738 = vcombine.low %v719, %v735
    %v739 = vcombine.high %v719, %v735
    %740 = vrot.lane.b32.xlu0 %v138, 96
    %v741 = vpop.permute.xlu0 %740
    %742 = vrot.lane.b32.xlu0 %v143, 96
    %v743 = vpop.permute.xlu0 %742
    %744 = vrot.lane.b32.xlu0 %v148, 96
    %v745 = vpop.permute.xlu0 %744
    %746 = vrot.lane.b32.xlu0 %v153, 96
    %v747 = vpop.permute.xlu0 %746
    %748 = vrot.lane.b32.xlu0 %v161, 96
    %v749 = vpop.permute.xlu0 %748
    %750 = vrot.lane.b32.xlu0 %v163, 96
    %v751 = vpop.permute.xlu0 %750
    %752 = vrot.lane.b32.xlu0 %v165, 96
    %v753 = vpop.permute.xlu0 %752
    %754 = vrot.lane.b32.xlu0 %v167, 96
    %v755 = vpop.permute.xlu0 %754
    %756 = vrot.lane.b32.xlu0 %v173, 96
    %v757 = vpop.permute.xlu0 %756
    %758 = vrot.lane.b32.xlu0 %v175, 96
    %v759 = vpop.permute.xlu0 %758
    %760 = vrot.lane.b32.xlu0 %v177, 96
    %v761 = vpop.permute.xlu0 %760
    %762 = vrot.lane.b32.xlu0 %v179, 96
    %v763 = vpop.permute.xlu0 %762
    %764 = vrot.lane.b32.xlu0 %v185, 96
    %v765 = vpop.permute.xlu0 %764
    %766 = vrot.lane.b32.xlu0 %v187, 96
    %v767 = vpop.permute.xlu0 %766
    %768 = vrot.lane.b32.xlu0 %v189, 96
    %v769 = vpop.permute.xlu0 %768
    %770 = vrot.lane.b32.xlu0 %v191, 96
    %v771 = vpop.permute.xlu0 %770
    %v788 = vcombine.low %v741, %v757
    %v789 = vcombine.high %v741, %v757
    %v791 = vunpack.c.l.s4 1983009808
    %v792 = vunpack.c.0.s8 %v791
    %v793 = vlaneseq
    %v794 = vshrl.u32 %v793, 7
    %v795 = vsub.s32 %v792, %v794
    %v796 = vrot.slane %v788, %v795
    %v798 = vunpack.c.l.s4 1983009808
    %v799 = vunpack.c.0.s8 %v798
    %v800 = vlaneseq
    %v801 = vshrl.u32 %v800, 7
    %v802 = vsub.s32 %v799, %v801
    %v803 = vrot.slane %v789, %v802
    %v804 = vcombine.low %v749, %v765
    %v805 = vcombine.high %v749, %v765
    %v807 = vunpack.c.l.s4 1983009808
    %v808 = vunpack.c.0.s8 %v807
    %v809 = vlaneseq
    %v810 = vshrl.u32 %v809, 7
    %v811 = vsub.s32 %v808, %v810
    %v812 = vrot.slane %v804, %v811
    %v814 = vunpack.c.l.s4 1983009808
    %v815 = vunpack.c.0.s8 %v814
    %v816 = vlaneseq
    %v817 = vshrl.u32 %v816, 7
    %v818 = vsub.s32 %v815, %v817
    %v819 = vrot.slane %v805, %v818
    %v820 = vcombine.low %v796, %v812
    %v821 = vcombine.high %v796, %v812
    %v823 = vunpack.c.l.s4 1934713408
    %v824 = vunpack.c.0.s8 %v823
    %v825 = vlaneseq
    %v826 = vshrl.u32 %v825, 7
    %v827 = vsub.s32 %v824, %v826
    %v828 = vrot.slane %v820, %v827
    %v830 = vunpack.c.l.s4 1934713408
    %v831 = vunpack.c.0.s8 %v830
    %v832 = vlaneseq
    %v833 = vshrl.u32 %v832, 7
    %v834 = vsub.s32 %v831, %v833
    %v835 = vrot.slane %v821, %v834
    %v836 = vcombine.low %v803, %v819
    %v837 = vcombine.high %v803, %v819
    %v839 = vunpack.c.l.s4 1934713408
    %v840 = vunpack.c.0.s8 %v839
    %v841 = vlaneseq
    %v842 = vshrl.u32 %v841, 7
    %v843 = vsub.s32 %v840, %v842
    %v844 = vrot.slane %v836, %v843
    %v846 = vunpack.c.l.s4 1934713408
    %v847 = vunpack.c.0.s8 %v846
    %v848 = vlaneseq
    %v849 = vshrl.u32 %v848, 7
    %v850 = vsub.s32 %v847, %v849
    %v851 = vrot.slane %v837, %v850
    %v852 = vcombine.high %v828, 0.0
    %v853 = vcombine.high %v835, 0.0
    %v854 = vcombine.high %v844, 0.0
    %v855 = vcombine.high %v851, 0.0
    %v856 = vcombine.low %v743, %v759
    %v857 = vcombine.high %v743, %v759
    %v859 = vunpack.c.l.s4 1983009808
    %v860 = vunpack.c.0.s8 %v859
    %v861 = vlaneseq
    %v862 = vshrl.u32 %v861, 7
    %v863 = vsub.s32 %v860, %v862
    %v864 = vrot.slane %v856, %v863
    %v866 = vunpack.c.l.s4 1983009808
    %v867 = vunpack.c.0.s8 %v866
    %v868 = vlaneseq
    %v869 = vshrl.u32 %v868, 7
    %v870 = vsub.s32 %v867, %v869
    %v871 = vrot.slane %v857, %v870
    %v872 = vcombine.low %v751, %v767
    %v873 = vcombine.high %v751, %v767
    %v875 = vunpack.c.l.s4 1983009808
    %v876 = vunpack.c.0.s8 %v875
    %v877 = vlaneseq
    %v878 = vshrl.u32 %v877, 7
    %v879 = vsub.s32 %v876, %v878
    %v880 = vrot.slane %v872, %v879
    %v882 = vunpack.c.l.s4 1983009808
    %v883 = vunpack.c.0.s8 %v882
    %v884 = vlaneseq
    %v885 = vshrl.u32 %v884, 7
    %v886 = vsub.s32 %v883, %v885
    %v887 = vrot.slane %v873, %v886
    %v888 = vcombine.low %v864, %v880
    %v889 = vcombine.high %v864, %v880
    %v891 = vunpack.c.l.s4 1934713408
    %v892 = vunpack.c.0.s8 %v891
    %v893 = vlaneseq
    %v894 = vshrl.u32 %v893, 7
    %v895 = vsub.s32 %v892, %v894
    %v896 = vrot.slane %v888, %v895
    %v898 = vunpack.c.l.s4 1934713408
    %v899 = vunpack.c.0.s8 %v898
    %v900 = vlaneseq
    %v901 = vshrl.u32 %v900, 7
    %v902 = vsub.s32 %v899, %v901
    %v903 = vrot.slane %v889, %v902
    %v904 = vcombine.low %v871, %v887
    %v905 = vcombine.high %v871, %v887
    %v907 = vunpack.c.l.s4 1934713408
    %v908 = vunpack.c.0.s8 %v907
    %v909 = vlaneseq
    %v910 = vshrl.u32 %v909, 7
    %v911 = vsub.s32 %v908, %v910
    %v912 = vrot.slane %v904, %v911
    %v914 = vunpack.c.l.s4 1934713408
    %v915 = vunpack.c.0.s8 %v914
    %v916 = vlaneseq
    %v917 = vshrl.u32 %v916, 7
    %v918 = vsub.s32 %v915, %v917
    %v919 = vrot.slane %v905, %v918
    %v920 = vcombine.high %v896, 0.0
    %v921 = vcombine.high %v903, 0.0
    %v922 = vcombine.high %v912, 0.0
    %v923 = vcombine.high %v919, 0.0
    %v924 = vcombine.low %v745, %v761
    %v925 = vcombine.high %v745, %v761
    %v927 = vunpack.c.l.s4 1983009808
    %v928 = vunpack.c.0.s8 %v927
    %v929 = vlaneseq
    %v930 = vshrl.u32 %v929, 7
    %v931 = vsub.s32 %v928, %v930
    %v932 = vrot.slane %v924, %v931
    %v934 = vunpack.c.l.s4 1983009808
    %v935 = vunpack.c.0.s8 %v934
    %v936 = vlaneseq
    %v937 = vshrl.u32 %v936, 7
    %v938 = vsub.s32 %v935, %v937
    %v939 = vrot.slane %v925, %v938
    %v940 = vcombine.low %v753, %v769
    %v941 = vcombine.high %v753, %v769
    %v943 = vunpack.c.l.s4 1983009808
    %v944 = vunpack.c.0.s8 %v943
    %v945 = vlaneseq
    %v946 = vshrl.u32 %v945, 7
    %v947 = vsub.s32 %v944, %v946
    %v948 = vrot.slane %v940, %v947
    %v950 = vunpack.c.l.s4 1983009808
    %v951 = vunpack.c.0.s8 %v950
    %v952 = vlaneseq
    %v953 = vshrl.u32 %v952, 7
    %v954 = vsub.s32 %v951, %v953
    %v955 = vrot.slane %v941, %v954
    %v956 = vcombine.low %v932, %v948
    %v957 = vcombine.high %v932, %v948
    %v959 = vunpack.c.l.s4 1934713408
    %v960 = vunpack.c.0.s8 %v959
    %v961 = vlaneseq
    %v962 = vshrl.u32 %v961, 7
    %v963 = vsub.s32 %v960, %v962
    %v964 = vrot.slane %v956, %v963
    %v966 = vunpack.c.l.s4 1934713408
    %v967 = vunpack.c.0.s8 %v966
    %v968 = vlaneseq
    %v969 = vshrl.u32 %v968, 7
    %v970 = vsub.s32 %v967, %v969
    %v971 = vrot.slane %v957, %v970
    %v972 = vcombine.low %v939, %v955
    %v973 = vcombine.high %v939, %v955
    %v975 = vunpack.c.l.s4 1934713408
    %v976 = vunpack.c.0.s8 %v975
    %v977 = vlaneseq
    %v978 = vshrl.u32 %v977, 7
    %v979 = vsub.s32 %v976, %v978
    %v980 = vrot.slane %v972, %v979
    %v982 = vunpack.c.l.s4 1934713408
    %v983 = vunpack.c.0.s8 %v982
    %v984 = vlaneseq
    %v985 = vshrl.u32 %v984, 7
    %v986 = vsub.s32 %v983, %v985
    %v987 = vrot.slane %v973, %v986
    %v988 = vcombine.high %v964, 0.0
    %v989 = vcombine.high %v971, 0.0
    %v990 = vcombine.high %v980, 0.0
    %v991 = vcombine.high %v987, 0.0
    %v992 = vcombine.low %v747, %v763
    %v993 = vcombine.high %v747, %v763
    %v995 = vunpack.c.l.s4 1983009808
    %v996 = vunpack.c.0.s8 %v995
    %v997 = vlaneseq
    %v998 = vshrl.u32 %v997, 7
    %v999 = vsub.s32 %v996, %v998
    %v1000 = vrot.slane %v992, %v999
    %v1002 = vunpack.c.l.s4 1983009808
    %v1003 = vunpack.c.0.s8 %v1002
    %v1004 = vlaneseq
    %v1005 = vshrl.u32 %v1004, 7
    %v1006 = vsub.s32 %v1003, %v1005
    %v1007 = vrot.slane %v993, %v1006
    %v1008 = vcombine.low %v755, %v771
    %v1009 = vcombine.high %v755, %v771
    %v1011 = vunpack.c.l.s4 1983009808
    %v1012 = vunpack.c.0.s8 %v1011
    %v1013 = vlaneseq
    %v1014 = vshrl.u32 %v1013, 7
    %v1015 = vsub.s32 %v1012, %v1014
    %v1016 = vrot.slane %v1008, %v1015
    %v1018 = vunpack.c.l.s4 1983009808
    %v1019 = vunpack.c.0.s8 %v1018
    %v1020 = vlaneseq
    %v1021 = vshrl.u32 %v1020, 7
    %v1022 = vsub.s32 %v1019, %v1021
    %v1023 = vrot.slane %v1009, %v1022
    %v1024 = vcombine.low %v1000, %v1016
    %v1025 = vcombine.high %v1000, %v1016
    %v1027 = vunpack.c.l.s4 1934713408
    %v1028 = vunpack.c.0.s8 %v1027
    %v1029 = vlaneseq
    %v1030 = vshrl.u32 %v1029, 7
    %v1031 = vsub.s32 %v1028, %v1030
    %v1032 = vrot.slane %v1024, %v1031
    %v1034 = vunpack.c.l.s4 1934713408
    %v1035 = vunpack.c.0.s8 %v1034
    %v1036 = vlaneseq
    %v1037 = vshrl.u32 %v1036, 7
    %v1038 = vsub.s32 %v1035, %v1037
    %v1039 = vrot.slane %v1025, %v1038
    %v1040 = vcombine.low %v1007, %v1023
    %v1041 = vcombine.high %v1007, %v1023
    %v1043 = vunpack.c.l.s4 1934713408
    %v1044 = vunpack.c.0.s8 %v1043
    %v1045 = vlaneseq
    %v1046 = vshrl.u32 %v1045, 7
    %v1047 = vsub.s32 %v1044, %v1046
    %v1048 = vrot.slane %v1040, %v1047
    %v1050 = vunpack.c.l.s4 1934713408
    %v1051 = vunpack.c.0.s8 %v1050
    %v1052 = vlaneseq
    %v1053 = vshrl.u32 %v1052, 7
    %v1054 = vsub.s32 %v1051, %v1053
    %v1055 = vrot.slane %v1041, %v1054
    %v1056 = vcombine.high %v1032, 0.0
    %v1057 = vcombine.high %v1039, 0.0
    %v1058 = vcombine.high %v1048, 0.0
    %v1059 = vcombine.high %v1055, 0.0
    %v1060 = vcombine.low %v828, %v835
    %v1062 = vunpack.c.l.s4 1983009808
    %v1063 = vunpack.c.0.s8 %v1062
    %v1064 = vlaneseq
    %v1065 = vshrl.u32 %v1064, 7
    %v1066 = vsub.s32 %v1063, %v1065
    %v1067 = vrot.slane %v1060, %v1066
    %v1068 = vcombine.low %v852, %v853
    %v1070 = vunpack.c.l.s4 1983009808
    %v1071 = vunpack.c.0.s8 %v1070
    %v1072 = vlaneseq
    %v1073 = vshrl.u32 %v1072, 7
    %v1074 = vsub.s32 %v1071, %v1073
    %v1075 = vrot.slane %v1068, %v1074
    %v1076 = vcombine.low %v844, %v851
    %v1078 = vunpack.c.l.s4 1983009808
    %v1079 = vunpack.c.0.s8 %v1078
    %v1080 = vlaneseq
    %v1081 = vshrl.u32 %v1080, 7
    %v1082 = vsub.s32 %v1079, %v1081
    %v1083 = vrot.slane %v1076, %v1082
    %v1084 = vcombine.low %v854, %v855
    %v1086 = vunpack.c.l.s4 1983009808
    %v1087 = vunpack.c.0.s8 %v1086
    %v1088 = vlaneseq
    %v1089 = vshrl.u32 %v1088, 7
    %v1090 = vsub.s32 %v1087, %v1089
    %v1091 = vrot.slane %v1084, %v1090
    %v1092 = vcombine.low %v1067, %v1075
    %v1093 = vcombine.high %v1067, %v1075
    %v1095 = vunpack.c.l.s4 1934713408
    %v1096 = vunpack.c.0.s8 %v1095
    %v1097 = vlaneseq
    %v1098 = vshrl.u32 %v1097, 7
    %v1099 = vsub.s32 %v1096, %v1098
    %v1100 = vrot.slane %v1092, %v1099
    %v1102 = vunpack.c.l.s4 1934713408
    %v1103 = vunpack.c.0.s8 %v1102
    %v1104 = vlaneseq
    %v1105 = vshrl.u32 %v1104, 7
    %v1106 = vsub.s32 %v1103, %v1105
    %v1107 = vrot.slane %v1093, %v1106
    %v1108 = vcombine.low %v1083, %v1091
    %v1109 = vcombine.high %v1083, %v1091
    %v1111 = vunpack.c.l.s4 1934713408
    %v1112 = vunpack.c.0.s8 %v1111
    %v1113 = vlaneseq
    %v1114 = vshrl.u32 %v1113, 7
    %v1115 = vsub.s32 %v1112, %v1114
    %v1116 = vrot.slane %v1108, %v1115
    %v1118 = vunpack.c.l.s4 1934713408
    %v1119 = vunpack.c.0.s8 %v1118
    %v1120 = vlaneseq
    %v1121 = vshrl.u32 %v1120, 7
    %v1122 = vsub.s32 %v1119, %v1121
    %v1123 = vrot.slane %v1109, %v1122
    %v1124 = vcombine.low %v1100, %v1116
    %v1125 = vcombine.high %v1100, %v1116
    %v1126 = vcombine.low %v1107, %v1123
    %v1127 = vcombine.high %v1107, %v1123
    %v1128 = vcombine.low %v896, %v903
    %v1130 = vunpack.c.l.s4 1983009808
    %v1131 = vunpack.c.0.s8 %v1130
    %v1132 = vlaneseq
    %v1133 = vshrl.u32 %v1132, 7
    %v1134 = vsub.s32 %v1131, %v1133
    %v1135 = vrot.slane %v1128, %v1134
    %v1136 = vcombine.low %v920, %v921
    %v1138 = vunpack.c.l.s4 1983009808
    %v1139 = vunpack.c.0.s8 %v1138
    %v1140 = vlaneseq
    %v1141 = vshrl.u32 %v1140, 7
    %v1142 = vsub.s32 %v1139, %v1141
    %v1143 = vrot.slane %v1136, %v1142
    %v1144 = vcombine.low %v912, %v919
    %v1146 = vunpack.c.l.s4 1983009808
    %v1147 = vunpack.c.0.s8 %v1146
    %v1148 = vlaneseq
    %v1149 = vshrl.u32 %v1148, 7
    %v1150 = vsub.s32 %v1147, %v1149
    %v1151 = vrot.slane %v1144, %v1150
    %v1152 = vcombine.low %v922, %v923
    %v1154 = vunpack.c.l.s4 1983009808
    %v1155 = vunpack.c.0.s8 %v1154
    %v1156 = vlaneseq
    %v1157 = vshrl.u32 %v1156, 7
    %v1158 = vsub.s32 %v1155, %v1157
    %v1159 = vrot.slane %v1152, %v1158
    %v1160 = vcombine.low %v1135, %v1143
    %v1161 = vcombine.high %v1135, %v1143
    %v1163 = vunpack.c.l.s4 1934713408
    %v1164 = vunpack.c.0.s8 %v1163
    %v1165 = vlaneseq
    %v1166 = vshrl.u32 %v1165, 7
    %v1167 = vsub.s32 %v1164, %v1166
    %v1168 = vrot.slane %v1160, %v1167
    %v1170 = vunpack.c.l.s4 1934713408
    %v1171 = vunpack.c.0.s8 %v1170
    %v1172 = vlaneseq
    %v1173 = vshrl.u32 %v1172, 7
    %v1174 = vsub.s32 %v1171, %v1173
    %v1175 = vrot.slane %v1161, %v1174
    %v1176 = vcombine.low %v1151, %v1159
    %v1177 = vcombine.high %v1151, %v1159
    %v1179 = vunpack.c.l.s4 1934713408
    %v1180 = vunpack.c.0.s8 %v1179
    %v1181 = vlaneseq
    %v1182 = vshrl.u32 %v1181, 7
    %v1183 = vsub.s32 %v1180, %v1182
    %v1184 = vrot.slane %v1176, %v1183
    %v1186 = vunpack.c.l.s4 1934713408
    %v1187 = vunpack.c.0.s8 %v1186
    %v1188 = vlaneseq
    %v1189 = vshrl.u32 %v1188, 7
    %v1190 = vsub.s32 %v1187, %v1189
    %v1191 = vrot.slane %v1177, %v1190
    %v1192 = vcombine.low %v1168, %v1184
    %v1193 = vcombine.high %v1168, %v1184
    %v1194 = vcombine.low %v1175, %v1191
    %v1195 = vcombine.high %v1175, %v1191
    %v1196 = vcombine.low %v964, %v971
    %v1198 = vunpack.c.l.s4 1983009808
    %v1199 = vunpack.c.0.s8 %v1198
    %v1200 = vlaneseq
    %v1201 = vshrl.u32 %v1200, 7
    %v1202 = vsub.s32 %v1199, %v1201
    %v1203 = vrot.slane %v1196, %v1202
    %v1204 = vcombine.low %v988, %v989
    %v1206 = vunpack.c.l.s4 1983009808
    %v1207 = vunpack.c.0.s8 %v1206
    %v1208 = vlaneseq
    %v1209 = vshrl.u32 %v1208, 7
    %v1210 = vsub.s32 %v1207, %v1209
    %v1211 = vrot.slane %v1204, %v1210
    %v1212 = vcombine.low %v980, %v987
    %v1214 = vunpack.c.l.s4 1983009808
    %v1215 = vunpack.c.0.s8 %v1214
    %v1216 = vlaneseq
    %v1217 = vshrl.u32 %v1216, 7
    %v1218 = vsub.s32 %v1215, %v1217
    %v1219 = vrot.slane %v1212, %v1218
    %v1220 = vcombine.low %v990, %v991
    %v1222 = vunpack.c.l.s4 1983009808
    %v1223 = vunpack.c.0.s8 %v1222
    %v1224 = vlaneseq
    %v1225 = vshrl.u32 %v1224, 7
    %v1226 = vsub.s32 %v1223, %v1225
    %v1227 = vrot.slane %v1220, %v1226
    %v1228 = vcombine.low %v1203, %v1211
    %v1229 = vcombine.high %v1203, %v1211
    %v1231 = vunpack.c.l.s4 1934713408
    %v1232 = vunpack.c.0.s8 %v1231
    %v1233 = vlaneseq
    %v1234 = vshrl.u32 %v1233, 7
    %v1235 = vsub.s32 %v1232, %v1234
    %v1236 = vrot.slane %v1228, %v1235
    %v1238 = vunpack.c.l.s4 1934713408
    %v1239 = vunpack.c.0.s8 %v1238
    %v1240 = vlaneseq
    %v1241 = vshrl.u32 %v1240, 7
    %v1242 = vsub.s32 %v1239, %v1241
    %v1243 = vrot.slane %v1229, %v1242
    %v1244 = vcombine.low %v1219, %v1227
    %v1245 = vcombine.high %v1219, %v1227
    %v1247 = vunpack.c.l.s4 1934713408
    %v1248 = vunpack.c.0.s8 %v1247
    %v1249 = vlaneseq
    %v1250 = vshrl.u32 %v1249, 7
    %v1251 = vsub.s32 %v1248, %v1250
    %v1252 = vrot.slane %v1244, %v1251
    %v1254 = vunpack.c.l.s4 1934713408
    %v1255 = vunpack.c.0.s8 %v1254
    %v1256 = vlaneseq
    %v1257 = vshrl.u32 %v1256, 7
    %v1258 = vsub.s32 %v1255, %v1257
    %v1259 = vrot.slane %v1245, %v1258
    %v1260 = vcombine.low %v1236, %v1252
    %v1261 = vcombine.high %v1236, %v1252
    %v1262 = vcombine.low %v1243, %v1259
    %v1263 = vcombine.high %v1243, %v1259
    %v1264 = vcombine.low %v1032, %v1039
    %v1266 = vunpack.c.l.s4 1983009808
    %v1267 = vunpack.c.0.s8 %v1266
    %v1268 = vlaneseq
    %v1269 = vshrl.u32 %v1268, 7
    %v1270 = vsub.s32 %v1267, %v1269
    %v1271 = vrot.slane %v1264, %v1270
    %v1272 = vcombine.low %v1056, %v1057
    %v1274 = vunpack.c.l.s4 1983009808
    %v1275 = vunpack.c.0.s8 %v1274
    %v1276 = vlaneseq
    %v1277 = vshrl.u32 %v1276, 7
    %v1278 = vsub.s32 %v1275, %v1277
    %v1279 = vrot.slane %v1272, %v1278
    %v1280 = vcombine.low %v1048, %v1055
    %v1282 = vunpack.c.l.s4 1983009808
    %v1283 = vunpack.c.0.s8 %v1282
    %v1284 = vlaneseq
    %v1285 = vshrl.u32 %v1284, 7
    %v1286 = vsub.s32 %v1283, %v1285
    %v1287 = vrot.slane %v1280, %v1286
    %v1288 = vcombine.low %v1058, %v1059
    %v1290 = vunpack.c.l.s4 1983009808
    %v1291 = vunpack.c.0.s8 %v1290
    %v1292 = vlaneseq
    %v1293 = vshrl.u32 %v1292, 7
    %v1294 = vsub.s32 %v1291, %v1293
    %v1295 = vrot.slane %v1288, %v1294
    %v1296 = vcombine.low %v1271, %v1279
    %v1297 = vcombine.high %v1271, %v1279
    %v1299 = vunpack.c.l.s4 1934713408
    %v1300 = vunpack.c.0.s8 %v1299
    %v1301 = vlaneseq
    %v1302 = vshrl.u32 %v1301, 7
    %v1303 = vsub.s32 %v1300, %v1302
    %v1304 = vrot.slane %v1296, %v1303
    %v1306 = vunpack.c.l.s4 1934713408
    %v1307 = vunpack.c.0.s8 %v1306
    %v1308 = vlaneseq
    %v1309 = vshrl.u32 %v1308, 7
    %v1310 = vsub.s32 %v1307, %v1309
    %v1311 = vrot.slane %v1297, %v1310
    %v1312 = vcombine.low %v1287, %v1295
    %v1313 = vcombine.high %v1287, %v1295
    %v1315 = vunpack.c.l.s4 1934713408
    %v1316 = vunpack.c.0.s8 %v1315
    %v1317 = vlaneseq
    %v1318 = vshrl.u32 %v1317, 7
    %v1319 = vsub.s32 %v1316, %v1318
    %v1320 = vrot.slane %v1312, %v1319
    %v1322 = vunpack.c.l.s4 1934713408
    %v1323 = vunpack.c.0.s8 %v1322
    %v1324 = vlaneseq
    %v1325 = vshrl.u32 %v1324, 7
    %v1326 = vsub.s32 %v1323, %v1325
    %v1327 = vrot.slane %v1313, %v1326
    %v1328 = vcombine.low %v1304, %v1320
    %v1329 = vcombine.high %v1304, %v1320
    %v1330 = vcombine.low %v1311, %v1327
    %v1331 = vcombine.high %v1311, %v1327
    %1332 = vrot.lane.b32.xlu0 %v138, 64
    %v1333 = vpop.permute.xlu0 %1332
    %1334 = vrot.lane.b32.xlu0 %v143, 64
    %v1335 = vpop.permute.xlu0 %1334
    %1336 = vrot.lane.b32.xlu0 %v148, 64
    %v1337 = vpop.permute.xlu0 %1336
    %1338 = vrot.lane.b32.xlu0 %v153, 64
    %v1339 = vpop.permute.xlu0 %1338
    %1340 = vrot.lane.b32.xlu0 %v161, 64
    %v1341 = vpop.permute.xlu0 %1340
    %1342 = vrot.lane.b32.xlu0 %v163, 64
    %v1343 = vpop.permute.xlu0 %1342
    %1344 = vrot.lane.b32.xlu0 %v165, 64
    %v1345 = vpop.permute.xlu0 %1344
    %1346 = vrot.lane.b32.xlu0 %v167, 64
    %v1347 = vpop.permute.xlu0 %1346
    %1348 = vrot.lane.b32.xlu0 %v173, 64
    %v1349 = vpop.permute.xlu0 %1348
    %1350 = vrot.lane.b32.xlu0 %v175, 64
    %v1351 = vpop.permute.xlu0 %1350
    %1352 = vrot.lane.b32.xlu0 %v177, 64
    %v1353 = vpop.permute.xlu0 %1352
    %1354 = vrot.lane.b32.xlu0 %v179, 64
    %v1355 = vpop.permute.xlu0 %1354
    %1356 = vrot.lane.b32.xlu0 %v185, 64
    %v1357 = vpop.permute.xlu0 %1356
    %1358 = vrot.lane.b32.xlu0 %v187, 64
    %v1359 = vpop.permute.xlu0 %1358
    %1360 = vrot.lane.b32.xlu0 %v189, 64
    %v1361 = vpop.permute.xlu0 %1360
    %1362 = vrot.lane.b32.xlu0 %v191, 64
    %v1363 = vpop.permute.xlu0 %1362
    %v1380 = vcombine.low %v1333, %v1349
    %v1381 = vcombine.high %v1333, %v1349
    %v1383 = vunpack.c.l.s4 1983009808
    %v1384 = vunpack.c.0.s8 %v1383
    %v1385 = vlaneseq
    %v1386 = vshrl.u32 %v1385, 7
    %v1387 = vsub.s32 %v1384, %v1386
    %v1388 = vrot.slane %v1380, %v1387
    %v1390 = vunpack.c.l.s4 1983009808
    %v1391 = vunpack.c.0.s8 %v1390
    %v1392 = vlaneseq
    %v1393 = vshrl.u32 %v1392, 7
    %v1394 = vsub.s32 %v1391, %v1393
    %v1395 = vrot.slane %v1381, %v1394
    %v1396 = vcombine.low %v1341, %v1357
    %v1397 = vcombine.high %v1341, %v1357
    %v1399 = vunpack.c.l.s4 1983009808
    %v1400 = vunpack.c.0.s8 %v1399
    %v1401 = vlaneseq
    %v1402 = vshrl.u32 %v1401, 7
    %v1403 = vsub.s32 %v1400, %v1402
    %v1404 = vrot.slane %v1396, %v1403
    %v1406 = vunpack.c.l.s4 1983009808
    %v1407 = vunpack.c.0.s8 %v1406
    %v1408 = vlaneseq
    %v1409 = vshrl.u32 %v1408, 7
    %v1410 = vsub.s32 %v1407, %v1409
    %v1411 = vrot.slane %v1397, %v1410
    %v1412 = vcombine.low %v1388, %v1404
    %v1413 = vcombine.high %v1388, %v1404
    %v1415 = vunpack.c.l.s4 1934713408
    %v1416 = vunpack.c.0.s8 %v1415
    %v1417 = vlaneseq
    %v1418 = vshrl.u32 %v1417, 7
    %v1419 = vsub.s32 %v1416, %v1418
    %v1420 = vrot.slane %v1412, %v1419
    %v1422 = vunpack.c.l.s4 1934713408
    %v1423 = vunpack.c.0.s8 %v1422
    %v1424 = vlaneseq
    %v1425 = vshrl.u32 %v1424, 7
    %v1426 = vsub.s32 %v1423, %v1425
    %v1427 = vrot.slane %v1413, %v1426
    %v1428 = vcombine.low %v1395, %v1411
    %v1429 = vcombine.high %v1395, %v1411
    %v1431 = vunpack.c.l.s4 1934713408
    %v1432 = vunpack.c.0.s8 %v1431
    %v1433 = vlaneseq
    %v1434 = vshrl.u32 %v1433, 7
    %v1435 = vsub.s32 %v1432, %v1434
    %v1436 = vrot.slane %v1428, %v1435
    %v1438 = vunpack.c.l.s4 1934713408
    %v1439 = vunpack.c.0.s8 %v1438
    %v1440 = vlaneseq
    %v1441 = vshrl.u32 %v1440, 7
    %v1442 = vsub.s32 %v1439, %v1441
    %v1443 = vrot.slane %v1429, %v1442
    %v1444 = vcombine.high %v1420, 0.0
    %v1445 = vcombine.high %v1427, 0.0
    %v1446 = vcombine.high %v1436, 0.0
    %v1447 = vcombine.high %v1443, 0.0
    %v1448 = vcombine.low %v1335, %v1351
    %v1449 = vcombine.high %v1335, %v1351
    %v1451 = vunpack.c.l.s4 1983009808
    %v1452 = vunpack.c.0.s8 %v1451
    %v1453 = vlaneseq
    %v1454 = vshrl.u32 %v1453, 7
    %v1455 = vsub.s32 %v1452, %v1454
    %v1456 = vrot.slane %v1448, %v1455
    %v1458 = vunpack.c.l.s4 1983009808
    %v1459 = vunpack.c.0.s8 %v1458
    %v1460 = vlaneseq
    %v1461 = vshrl.u32 %v1460, 7
    %v1462 = vsub.s32 %v1459, %v1461
    %v1463 = vrot.slane %v1449, %v1462
    %v1464 = vcombine.low %v1343, %v1359
    %v1465 = vcombine.high %v1343, %v1359
    %v1467 = vunpack.c.l.s4 1983009808
    %v1468 = vunpack.c.0.s8 %v1467
    %v1469 = vlaneseq
    %v1470 = vshrl.u32 %v1469, 7
    %v1471 = vsub.s32 %v1468, %v1470
    %v1472 = vrot.slane %v1464, %v1471
    %v1474 = vunpack.c.l.s4 1983009808
    %v1475 = vunpack.c.0.s8 %v1474
    %v1476 = vlaneseq
    %v1477 = vshrl.u32 %v1476, 7
    %v1478 = vsub.s32 %v1475, %v1477
    %v1479 = vrot.slane %v1465, %v1478
    %v1480 = vcombine.low %v1456, %v1472
    %v1481 = vcombine.high %v1456, %v1472
    %v1483 = vunpack.c.l.s4 1934713408
    %v1484 = vunpack.c.0.s8 %v1483
    %v1485 = vlaneseq
    %v1486 = vshrl.u32 %v1485, 7
    %v1487 = vsub.s32 %v1484, %v1486
    %v1488 = vrot.slane %v1480, %v1487
    %v1490 = vunpack.c.l.s4 1934713408
    %v1491 = vunpack.c.0.s8 %v1490
    %v1492 = vlaneseq
    %v1493 = vshrl.u32 %v1492, 7
    %v1494 = vsub.s32 %v1491, %v1493
    %v1495 = vrot.slane %v1481, %v1494
    %v1496 = vcombine.low %v1463, %v1479
    %v1497 = vcombine.high %v1463, %v1479
    %v1499 = vunpack.c.l.s4 1934713408
    %v1500 = vunpack.c.0.s8 %v1499
    %v1501 = vlaneseq
    %v1502 = vshrl.u32 %v1501, 7
    %v1503 = vsub.s32 %v1500, %v1502
    %v1504 = vrot.slane %v1496, %v1503
    %v1506 = vunpack.c.l.s4 1934713408
    %v1507 = vunpack.c.0.s8 %v1506
    %v1508 = vlaneseq
    %v1509 = vshrl.u32 %v1508, 7
    %v1510 = vsub.s32 %v1507, %v1509
    %v1511 = vrot.slane %v1497, %v1510
    %v1512 = vcombine.high %v1488, 0.0
    %v1513 = vcombine.high %v1495, 0.0
    %v1514 = vcombine.high %v1504, 0.0
    %v1515 = vcombine.high %v1511, 0.0
    %v1516 = vcombine.low %v1337, %v1353
    %v1517 = vcombine.high %v1337, %v1353
    %v1519 = vunpack.c.l.s4 1983009808
    %v1520 = vunpack.c.0.s8 %v1519
    %v1521 = vlaneseq
    %v1522 = vshrl.u32 %v1521, 7
    %v1523 = vsub.s32 %v1520, %v1522
    %v1524 = vrot.slane %v1516, %v1523
    %v1526 = vunpack.c.l.s4 1983009808
    %v1527 = vunpack.c.0.s8 %v1526
    %v1528 = vlaneseq
    %v1529 = vshrl.u32 %v1528, 7
    %v1530 = vsub.s32 %v1527, %v1529
    %v1531 = vrot.slane %v1517, %v1530
    %v1532 = vcombine.low %v1345, %v1361
    %v1533 = vcombine.high %v1345, %v1361
    %v1535 = vunpack.c.l.s4 1983009808
    %v1536 = vunpack.c.0.s8 %v1535
    %v1537 = vlaneseq
    %v1538 = vshrl.u32 %v1537, 7
    %v1539 = vsub.s32 %v1536, %v1538
    %v1540 = vrot.slane %v1532, %v1539
    %v1542 = vunpack.c.l.s4 1983009808
    %v1543 = vunpack.c.0.s8 %v1542
    %v1544 = vlaneseq
    %v1545 = vshrl.u32 %v1544, 7
    %v1546 = vsub.s32 %v1543, %v1545
    %v1547 = vrot.slane %v1533, %v1546
    %v1548 = vcombine.low %v1524, %v1540
    %v1549 = vcombine.high %v1524, %v1540
    %v1551 = vunpack.c.l.s4 1934713408
    %v1552 = vunpack.c.0.s8 %v1551
    %v1553 = vlaneseq
    %v1554 = vshrl.u32 %v1553, 7
    %v1555 = vsub.s32 %v1552, %v1554
    %v1556 = vrot.slane %v1548, %v1555
    %v1558 = vunpack.c.l.s4 1934713408
    %v1559 = vunpack.c.0.s8 %v1558
    %v1560 = vlaneseq
    %v1561 = vshrl.u32 %v1560, 7
    %v1562 = vsub.s32 %v1559, %v1561
    %v1563 = vrot.slane %v1549, %v1562
    %v1564 = vcombine.low %v1531, %v1547
    %v1565 = vcombine.high %v1531, %v1547
    %v1567 = vunpack.c.l.s4 1934713408
    %v1568 = vunpack.c.0.s8 %v1567
    %v1569 = vlaneseq
    %v1570 = vshrl.u32 %v1569, 7
    %v1571 = vsub.s32 %v1568, %v1570
    %v1572 = vrot.slane %v1564, %v1571
    %v1574 = vunpack.c.l.s4 1934713408
    %v1575 = vunpack.c.0.s8 %v1574
    %v1576 = vlaneseq
    %v1577 = vshrl.u32 %v1576, 7
    %v1578 = vsub.s32 %v1575, %v1577
    %v1579 = vrot.slane %v1565, %v1578
    %v1580 = vcombine.high %v1556, 0.0
    %v1581 = vcombine.high %v1563, 0.0
    %v1582 = vcombine.high %v1572, 0.0
    %v1583 = vcombine.high %v1579, 0.0
    %v1584 = vcombine.low %v1339, %v1355
    %v1585 = vcombine.high %v1339, %v1355
    %v1587 = vunpack.c.l.s4 1983009808
    %v1588 = vunpack.c.0.s8 %v1587
    %v1589 = vlaneseq
    %v1590 = vshrl.u32 %v1589, 7
    %v1591 = vsub.s32 %v1588, %v1590
    %v1592 = vrot.slane %v1584, %v1591
    %v1594 = vunpack.c.l.s4 1983009808
    %v1595 = vunpack.c.0.s8 %v1594
    %v1596 = vlaneseq
    %v1597 = vshrl.u32 %v1596, 7
    %v1598 = vsub.s32 %v1595, %v1597
    %v1599 = vrot.slane %v1585, %v1598
    %v1600 = vcombine.low %v1347, %v1363
    %v1601 = vcombine.high %v1347, %v1363
    %v1603 = vunpack.c.l.s4 1983009808
    %v1604 = vunpack.c.0.s8 %v1603
    %v1605 = vlaneseq
    %v1606 = vshrl.u32 %v1605, 7
    %v1607 = vsub.s32 %v1604, %v1606
    %v1608 = vrot.slane %v1600, %v1607
    %v1610 = vunpack.c.l.s4 1983009808
    %v1611 = vunpack.c.0.s8 %v1610
    %v1612 = vlaneseq
    %v1613 = vshrl.u32 %v1612, 7
    %v1614 = vsub.s32 %v1611, %v1613
    %v1615 = vrot.slane %v1601, %v1614
    %v1616 = vcombine.low %v1592, %v1608
    %v1617 = vcombine.high %v1592, %v1608
    %v1619 = vunpack.c.l.s4 1934713408
    %v1620 = vunpack.c.0.s8 %v1619
    %v1621 = vlaneseq
    %v1622 = vshrl.u32 %v1621, 7
    %v1623 = vsub.s32 %v1620, %v1622
    %v1624 = vrot.slane %v1616, %v1623
    %v1626 = vunpack.c.l.s4 1934713408
    %v1627 = vunpack.c.0.s8 %v1626
    %v1628 = vlaneseq
    %v1629 = vshrl.u32 %v1628, 7
    %v1630 = vsub.s32 %v1627, %v1629
    %v1631 = vrot.slane %v1617, %v1630
    %v1632 = vcombine.low %v1599, %v1615
    %v1633 = vcombine.high %v1599, %v1615
    %v1635 = vunpack.c.l.s4 1934713408
    %v1636 = vunpack.c.0.s8 %v1635
    %v1637 = vlaneseq
    %v1638 = vshrl.u32 %v1637, 7
    %v1639 = vsub.s32 %v1636, %v1638
    %v1640 = vrot.slane %v1632, %v1639
    %v1642 = vunpack.c.l.s4 1934713408
    %v1643 = vunpack.c.0.s8 %v1642
    %v1644 = vlaneseq
    %v1645 = vshrl.u32 %v1644, 7
    %v1646 = vsub.s32 %v1643, %v1645
    %v1647 = vrot.slane %v1633, %v1646
    %v1648 = vcombine.high %v1624, 0.0
    %v1649 = vcombine.high %v1631, 0.0
    %v1650 = vcombine.high %v1640, 0.0
    %v1651 = vcombine.high %v1647, 0.0
    %v1652 = vcombine.low %v1420, %v1427
    %v1654 = vunpack.c.l.s4 1983009808
    %v1655 = vunpack.c.0.s8 %v1654
    %v1656 = vlaneseq
    %v1657 = vshrl.u32 %v1656, 7
    %v1658 = vsub.s32 %v1655, %v1657
    %v1659 = vrot.slane %v1652, %v1658
    %v1660 = vcombine.low %v1444, %v1445
    %v1662 = vunpack.c.l.s4 1983009808
    %v1663 = vunpack.c.0.s8 %v1662
    %v1664 = vlaneseq
    %v1665 = vshrl.u32 %v1664, 7
    %v1666 = vsub.s32 %v1663, %v1665
    %v1667 = vrot.slane %v1660, %v1666
    %v1668 = vcombine.low %v1436, %v1443
    %v1670 = vunpack.c.l.s4 1983009808
    %v1671 = vunpack.c.0.s8 %v1670
    %v1672 = vlaneseq
    %v1673 = vshrl.u32 %v1672, 7
    %v1674 = vsub.s32 %v1671, %v1673
    %v1675 = vrot.slane %v1668, %v1674
    %v1676 = vcombine.low %v1446, %v1447
    %v1678 = vunpack.c.l.s4 1983009808
    %v1679 = vunpack.c.0.s8 %v1678
    %v1680 = vlaneseq
    %v1681 = vshrl.u32 %v1680, 7
    %v1682 = vsub.s32 %v1679, %v1681
    %v1683 = vrot.slane %v1676, %v1682
    %v1684 = vcombine.low %v1659, %v1667
    %v1685 = vcombine.high %v1659, %v1667
    %v1687 = vunpack.c.l.s4 1934713408
    %v1688 = vunpack.c.0.s8 %v1687
    %v1689 = vlaneseq
    %v1690 = vshrl.u32 %v1689, 7
    %v1691 = vsub.s32 %v1688, %v1690
    %v1692 = vrot.slane %v1684, %v1691
    %v1694 = vunpack.c.l.s4 1934713408
    %v1695 = vunpack.c.0.s8 %v1694
    %v1696 = vlaneseq
    %v1697 = vshrl.u32 %v1696, 7
    %v1698 = vsub.s32 %v1695, %v1697
    %v1699 = vrot.slane %v1685, %v1698
    %v1700 = vcombine.low %v1675, %v1683
    %v1701 = vcombine.high %v1675, %v1683
    %v1703 = vunpack.c.l.s4 1934713408
    %v1704 = vunpack.c.0.s8 %v1703
    %v1705 = vlaneseq
    %v1706 = vshrl.u32 %v1705, 7
    %v1707 = vsub.s32 %v1704, %v1706
    %v1708 = vrot.slane %v1700, %v1707
    %v1710 = vunpack.c.l.s4 1934713408
    %v1711 = vunpack.c.0.s8 %v1710
    %v1712 = vlaneseq
    %v1713 = vshrl.u32 %v1712, 7
    %v1714 = vsub.s32 %v1711, %v1713
    %v1715 = vrot.slane %v1701, %v1714
    %v1716 = vcombine.low %v1692, %v1708
    %v1717 = vcombine.high %v1692, %v1708
    %v1718 = vcombine.low %v1699, %v1715
    %v1719 = vcombine.high %v1699, %v1715
    %v1720 = vcombine.low %v1488, %v1495
    %v1722 = vunpack.c.l.s4 1983009808
    %v1723 = vunpack.c.0.s8 %v1722
    %v1724 = vlaneseq
    %v1725 = vshrl.u32 %v1724, 7
    %v1726 = vsub.s32 %v1723, %v1725
    %v1727 = vrot.slane %v1720, %v1726
    %v1728 = vcombine.low %v1512, %v1513
    %v1730 = vunpack.c.l.s4 1983009808
    %v1731 = vunpack.c.0.s8 %v1730
    %v1732 = vlaneseq
    %v1733 = vshrl.u32 %v1732, 7
    %v1734 = vsub.s32 %v1731, %v1733
    %v1735 = vrot.slane %v1728, %v1734
    %v1736 = vcombine.low %v1504, %v1511
    %v1738 = vunpack.c.l.s4 1983009808
    %v1739 = vunpack.c.0.s8 %v1738
    %v1740 = vlaneseq
    %v1741 = vshrl.u32 %v1740, 7
    %v1742 = vsub.s32 %v1739, %v1741
    %v1743 = vrot.slane %v1736, %v1742
    %v1744 = vcombine.low %v1514, %v1515
    %v1746 = vunpack.c.l.s4 1983009808
    %v1747 = vunpack.c.0.s8 %v1746
    %v1748 = vlaneseq
    %v1749 = vshrl.u32 %v1748, 7
    %v1750 = vsub.s32 %v1747, %v1749
    %v1751 = vrot.slane %v1744, %v1750
    %v1752 = vcombine.low %v1727, %v1735
    %v1753 = vcombine.high %v1727, %v1735
    %v1755 = vunpack.c.l.s4 1934713408
    %v1756 = vunpack.c.0.s8 %v1755
    %v1757 = vlaneseq
    %v1758 = vshrl.u32 %v1757, 7
    %v1759 = vsub.s32 %v1756, %v1758
    %v1760 = vrot.slane %v1752, %v1759
    %v1762 = vunpack.c.l.s4 1934713408
    %v1763 = vunpack.c.0.s8 %v1762
    %v1764 = vlaneseq
    %v1765 = vshrl.u32 %v1764, 7
    %v1766 = vsub.s32 %v1763, %v1765
    %v1767 = vrot.slane %v1753, %v1766
    %v1768 = vcombine.low %v1743, %v1751
    %v1769 = vcombine.high %v1743, %v1751
    %v1771 = vunpack.c.l.s4 1934713408
    %v1772 = vunpack.c.0.s8 %v1771
    %v1773 = vlaneseq
    %v1774 = vshrl.u32 %v1773, 7
    %v1775 = vsub.s32 %v1772, %v1774
    %v1776 = vrot.slane %v1768, %v1775
    %v1778 = vunpack.c.l.s4 1934713408
    %v1779 = vunpack.c.0.s8 %v1778
    %v1780 = vlaneseq
    %v1781 = vshrl.u32 %v1780, 7
    %v1782 = vsub.s32 %v1779, %v1781
    %v1783 = vrot.slane %v1769, %v1782
    %v1784 = vcombine.low %v1760, %v1776
    %v1785 = vcombine.high %v1760, %v1776
    %v1786 = vcombine.low %v1767, %v1783
    %v1787 = vcombine.high %v1767, %v1783
    %v1788 = vcombine.low %v1556, %v1563
    %v1790 = vunpack.c.l.s4 1983009808
    %v1791 = vunpack.c.0.s8 %v1790
    %v1792 = vlaneseq
    %v1793 = vshrl.u32 %v1792, 7
    %v1794 = vsub.s32 %v1791, %v1793
    %v1795 = vrot.slane %v1788, %v1794
    %v1796 = vcombine.low %v1580, %v1581
    %v1798 = vunpack.c.l.s4 1983009808
    %v1799 = vunpack.c.0.s8 %v1798
    %v1800 = vlaneseq
    %v1801 = vshrl.u32 %v1800, 7
    %v1802 = vsub.s32 %v1799, %v1801
    %v1803 = vrot.slane %v1796, %v1802
    %v1804 = vcombine.low %v1572, %v1579
    %v1806 = vunpack.c.l.s4 1983009808
    %v1807 = vunpack.c.0.s8 %v1806
    %v1808 = vlaneseq
    %v1809 = vshrl.u32 %v1808, 7
    %v1810 = vsub.s32 %v1807, %v1809
    %v1811 = vrot.slane %v1804, %v1810
    %v1812 = vcombine.low %v1582, %v1583
    %v1814 = vunpack.c.l.s4 1983009808
    %v1815 = vunpack.c.0.s8 %v1814
    %v1816 = vlaneseq
    %v1817 = vshrl.u32 %v1816, 7
    %v1818 = vsub.s32 %v1815, %v1817
    %v1819 = vrot.slane %v1812, %v1818
    %v1820 = vcombine.low %v1795, %v1803
    %v1821 = vcombine.high %v1795, %v1803
    %v1823 = vunpack.c.l.s4 1934713408
    %v1824 = vunpack.c.0.s8 %v1823
    %v1825 = vlaneseq
    %v1826 = vshrl.u32 %v1825, 7
    %v1827 = vsub.s32 %v1824, %v1826
    %v1828 = vrot.slane %v1820, %v1827
    %v1830 = vunpack.c.l.s4 1934713408
    %v1831 = vunpack.c.0.s8 %v1830
    %v1832 = vlaneseq
    %v1833 = vshrl.u32 %v1832, 7
    %v1834 = vsub.s32 %v1831, %v1833
    %v1835 = vrot.slane %v1821, %v1834
    %v1836 = vcombine.low %v1811, %v1819
    %v1837 = vcombine.high %v1811, %v1819
    %v1839 = vunpack.c.l.s4 1934713408
    %v1840 = vunpack.c.0.s8 %v1839
    %v1841 = vlaneseq
    %v1842 = vshrl.u32 %v1841, 7
    %v1843 = vsub.s32 %v1840, %v1842
    %v1844 = vrot.slane %v1836, %v1843
    %v1846 = vunpack.c.l.s4 1934713408
    %v1847 = vunpack.c.0.s8 %v1846
    %v1848 = vlaneseq
    %v1849 = vshrl.u32 %v1848, 7
    %v1850 = vsub.s32 %v1847, %v1849
    %v1851 = vrot.slane %v1837, %v1850
    %v1852 = vcombine.low %v1828, %v1844
    %v1853 = vcombine.high %v1828, %v1844
    %v1854 = vcombine.low %v1835, %v1851
    %v1855 = vcombine.high %v1835, %v1851
    %v1856 = vcombine.low %v1624, %v1631
    %v1858 = vunpack.c.l.s4 1983009808
    %v1859 = vunpack.c.0.s8 %v1858
    %v1860 = vlaneseq
    %v1861 = vshrl.u32 %v1860, 7
    %v1862 = vsub.s32 %v1859, %v1861
    %v1863 = vrot.slane %v1856, %v1862
    %v1864 = vcombine.low %v1648, %v1649
    %v1866 = vunpack.c.l.s4 1983009808
    %v1867 = vunpack.c.0.s8 %v1866
    %v1868 = vlaneseq
    %v1869 = vshrl.u32 %v1868, 7
    %v1870 = vsub.s32 %v1867, %v1869
    %v1871 = vrot.slane %v1864, %v1870
    %v1872 = vcombine.low %v1640, %v1647
    %v1874 = vunpack.c.l.s4 1983009808
    %v1875 = vunpack.c.0.s8 %v1874
    %v1876 = vlaneseq
    %v1877 = vshrl.u32 %v1876, 7
    %v1878 = vsub.s32 %v1875, %v1877
    %v1879 = vrot.slane %v1872, %v1878
    %v1880 = vcombine.low %v1650, %v1651
    %v1882 = vunpack.c.l.s4 1983009808
    %v1883 = vunpack.c.0.s8 %v1882
    %v1884 = vlaneseq
    %v1885 = vshrl.u32 %v1884, 7
    %v1886 = vsub.s32 %v1883, %v1885
    %v1887 = vrot.slane %v1880, %v1886
    %v1888 = vcombine.low %v1863, %v1871
    %v1889 = vcombine.high %v1863, %v1871
    %v1891 = vunpack.c.l.s4 1934713408
    %v1892 = vunpack.c.0.s8 %v1891
    %v1893 = vlaneseq
    %v1894 = vshrl.u32 %v1893, 7
    %v1895 = vsub.s32 %v1892, %v1894
    %v1896 = vrot.slane %v1888, %v1895
    %v1898 = vunpack.c.l.s4 1934713408
    %v1899 = vunpack.c.0.s8 %v1898
    %v1900 = vlaneseq
    %v1901 = vshrl.u32 %v1900, 7
    %v1902 = vsub.s32 %v1899, %v1901
    %v1903 = vrot.slane %v1889, %v1902
    %v1904 = vcombine.low %v1879, %v1887
    %v1905 = vcombine.high %v1879, %v1887
    %v1907 = vunpack.c.l.s4 1934713408
    %v1908 = vunpack.c.0.s8 %v1907
    %v1909 = vlaneseq
    %v1910 = vshrl.u32 %v1909, 7
    %v1911 = vsub.s32 %v1908, %v1910
    %v1912 = vrot.slane %v1904, %v1911
    %v1914 = vunpack.c.l.s4 1934713408
    %v1915 = vunpack.c.0.s8 %v1914
    %v1916 = vlaneseq
    %v1917 = vshrl.u32 %v1916, 7
    %v1918 = vsub.s32 %v1915, %v1917
    %v1919 = vrot.slane %v1905, %v1918
    %v1920 = vcombine.low %v1896, %v1912
    %v1921 = vcombine.high %v1896, %v1912
    %v1922 = vcombine.low %v1903, %v1919
    %v1923 = vcombine.high %v1903, %v1919
    %vm1924 = vcmask 64512
    %v1926 = vsel %vm1924, %v532, 0
    %v1929 = vsel %vm1924, %v600, 0
    %v1932 = vsel %vm1924, %v1124, 0
    %v1935 = vsel %vm1924, %v1192, 0
    %1937 = vmatprep.subr.mxu0 0.0
    %1938 = vmatpush1.xpose.msra.mxu0 %v1932
    %1939 = vmatprep.subr.mxu0 0.0
    %1940 = vmatpush1.xpose.msra.mxu0 %v1935
    %1941 = vmatprep.subr.mxu0 0.0
    %1942 = vmatpush1.xpose.msra.mxu0 0.0
    %1943 = vmatprep.subr.mxu0 0.0
    %1944 = vmatpush1.xpose.msra.mxu0 0.0
    %1945 = vmatprep.subr.mxu0 0.0
    %1946 = vmatpush1.xpose.msra.mxu0 0.0
    %1947 = vmatprep.subr.mxu0 0.0
    %1948 = vmatpush1.xpose.msra.mxu0 0.0
    %1949 = vmatprep.subr.mxu0 0.0
    %1950 = vmatpush1.xpose.msra.mxu0 0.0
    %1951 = vmatprep.subr.mxu0 0.0
    %1952 = vmatpush1.xpose.msra.mxu0 0.0
    %1953 = vmatprep.subr.mxu0 0.0
    %1954 = vmatpush1.xpose.msra.mxu0 0.0
    %1955 = vmatprep.subr.mxu0 0.0
    %1956 = vmatpush1.xpose.msra.mxu0 0.0
    %1957 = vmatprep.subr.mxu0 0.0
    %1958 = vmatpush1.xpose.msra.mxu0 0.0
    %1959 = vmatprep.subr.mxu0 0.0
    %1960 = vmatpush1.xpose.msra.mxu0 0.0
    %1961 = vmatprep.subr.mxu0 0.0
    %1962 = vmatpush1.xpose.msra.mxu0 0.0
    %1963 = vmatprep.subr.mxu0 0.0
    %1964 = vmatpush1.xpose.msra.mxu0 0.0
    %1965 = vmatprep.subr.mxu0 0.0
    %1966 = vmatpush1.xpose.msra.mxu0 0.0
    %1967 = vmatprep.subr.mxu0 0.0
    %1968 = vmatpush1.xpose.msra.mxu0 0.0
    %1969 = vmatprep.subr.mxu0 0.0
    %1970 = vmatpush1.xpose.msra.mxu0 0.0
    %1971 = vmatprep.subr.mxu0 0.0
    %1972 = vmatpush1.xpose.msra.mxu0 0.0
    %1973 = vmatprep.subr.mxu0 0.0
    %1974 = vmatpush1.xpose.msra.mxu0 0.0
    %1975 = vmatprep.subr.mxu0 0.0
    %1976 = vmatpush1.xpose.msra.mxu0 0.0
    %1977 = vmatprep.subr.mxu0 0.0
    %1978 = vmatpush1.xpose.msra.mxu0 0.0
    %1979 = vmatprep.subr.mxu0 0.0
    %1980 = vmatpush1.xpose.msra.mxu0 0.0
    %1981 = vmatprep.subr.mxu0 0.0
    %1982 = vmatpush1.xpose.msra.mxu0 0.0
    %1983 = vmatprep.subr.mxu0 0.0
    %1984 = vmatpush1.xpose.msra.mxu0 0.0
    %1985 = vmatprep.subr.mxu0 0.0
    %1986 = vmatpush1.xpose.msra.mxu0 0.0
    %1987 = vmatprep.subr.mxu0 0.0
    %1988 = vmatpush1.xpose.msra.mxu0 0.0
    %1989 = vmatprep.subr.mxu0 0.0
    %1990 = vmatpush1.xpose.msra.mxu0 0.0
    %1991 = vmatprep.subr.mxu0 0.0
    %1992 = vmatpush1.xpose.msra.mxu0 0.0
    %1993 = vmatprep.subr.mxu0 0.0
    %1994 = vmatpush1.xpose.msra.mxu0 0.0
    %1995 = vmatprep.subr.mxu0 0.0
    %1996 = vmatpush1.xpose.msra.mxu0 0.0
    %1997 = vmatprep.subr.mxu0 0.0
    %1998 = vmatpush1.xpose.msra.mxu0 0.0
    %1999 = vmatprep.subr.mxu0 0.0
    %2000 = vmatpush1.xpose.msra.mxu0 0.0
    %2001 = vmatprep.mubr.f32.mxu0 0.0
    %2002 = vmatmul.mubr.f32.gmra.mrb[0].mxu0 %v1926
    %v2003 = vpop.f32.mrb[0].mxu0
    %v2004 = vadd.f32 0.0, %v2003
    %v2005 = vpop.f32.mrb[0].mxu0
    %2006 = vmatprep.mubr.f32.mxu0 0.0
    %2007 = vmatmul.mubr.f32.gmra.mrb[0].mxu0 %v1929
    %v2008 = vpop.f32.mrb[0].mxu0
    %v2009 = vadd.f32 0.0, %v2008
    %v2010 = vpop.f32.mrb[0].mxu0
    %2011 = vdwg.mxu0
    %v2013 = vsel %vm1924, %v533, 0
    %v2016 = vsel %vm1924, %v601, 0
    %v2019 = vsel %vm1924, %v1125, 0
    %v2022 = vsel %vm1924, %v1193, 0
    %2024 = vmatprep.subr.mxu0 0.0
    %2025 = vmatpush1.xpose.msra.mxu0 %v2019
    %2026 = vmatprep.subr.mxu0 0.0
    %2027 = vmatpush1.xpose.msra.mxu0 %v2022
    %2028 = vmatprep.subr.mxu0 0.0
    %2029 = vmatpush1.xpose.msra.mxu0 0.0
    %2030 = vmatprep.subr.mxu0 0.0
    %2031 = vmatpush1.xpose.msra.mxu0 0.0
    %2032 = vmatprep.subr.mxu0 0.0
    %2033 = vmatpush1.xpose.msra.mxu0 0.0
    %2034 = vmatprep.subr.mxu0 0.0
    %2035 = vmatpush1.xpose.msra.mxu0 0.0
    %2036 = vmatprep.subr.mxu0 0.0
    %2037 = vmatpush1.xpose.msra.mxu0 0.0
    %2038 = vmatprep.subr.mxu0 0.0
    %2039 = vmatpush1.xpose.msra.mxu0 0.0
    %2040 = vmatprep.subr.mxu0 0.0
    %2041 = vmatpush1.xpose.msra.mxu0 0.0
    %2042 = vmatprep.subr.mxu0 0.0
    %2043 = vmatpush1.xpose.msra.mxu0 0.0
    %2044 = vmatprep.subr.mxu0 0.0
    %2045 = vmatpush1.xpose.msra.mxu0 0.0
    %2046 = vmatprep.subr.mxu0 0.0
    %2047 = vmatpush1.xpose.msra.mxu0 0.0
    %2048 = vmatprep.subr.mxu0 0.0
    %2049 = vmatpush1.xpose.msra.mxu0 0.0
    %2050 = vmatprep.subr.mxu0 0.0
    %2051 = vmatpush1.xpose.msra.mxu0 0.0
    %2052 = vmatprep.subr.mxu0 0.0
    %2053 = vmatpush1.xpose.msra.mxu0 0.0
    %2054 = vmatprep.subr.mxu0 0.0
    %2055 = vmatpush1.xpose.msra.mxu0 0.0
    %2056 = vmatprep.subr.mxu0 0.0
    %2057 = vmatpush1.xpose.msra.mxu0 0.0
    %2058 = vmatprep.subr.mxu0 0.0
    %2059 = vmatpush1.xpose.msra.mxu0 0.0
    %2060 = vmatprep.subr.mxu0 0.0
    %2061 = vmatpush1.xpose.msra.mxu0 0.0
    %2062 = vmatprep.subr.mxu0 0.0
    %2063 = vmatpush1.xpose.msra.mxu0 0.0
    %2064 = vmatprep.subr.mxu0 0.0
    %2065 = vmatpush1.xpose.msra.mxu0 0.0
    %2066 = vmatprep.subr.mxu0 0.0
    %2067 = vmatpush1.xpose.msra.mxu0 0.0
    %2068 = vmatprep.subr.mxu0 0.0
    %2069 = vmatpush1.xpose.msra.mxu0 0.0
    %2070 = vmatprep.subr.mxu0 0.0
    %2071 = vmatpush1.xpose.msra.mxu0 0.0
    %2072 = vmatprep.subr.mxu0 0.0
    %2073 = vmatpush1.xpose.msra.mxu0 0.0
    %2074 = vmatprep.subr.mxu0 0.0
    %2075 = vmatpush1.xpose.msra.mxu0 0.0
    %2076 = vmatprep.subr.mxu0 0.0
    %2077 = vmatpush1.xpose.msra.mxu0 0.0
    %2078 = vmatprep.subr.mxu0 0.0
    %2079 = vmatpush1.xpose.msra.mxu0 0.0
    %2080 = vmatprep.subr.mxu0 0.0
    %2081 = vmatpush1.xpose.msra.mxu0 0.0
    %2082 = vmatprep.subr.mxu0 0.0
    %2083 = vmatpush1.xpose.msra.mxu0 0.0
    %2084 = vmatprep.subr.mxu0 0.0
    %2085 = vmatpush1.xpose.msra.mxu0 0.0
    %2086 = vmatprep.subr.mxu0 0.0
    %2087 = vmatpush1.xpose.msra.mxu0 0.0
    %2088 = vmatprep.mubr.f32.mxu0 0.0
    %2089 = vmatmul.mubr.f32.gmra.mrb[0].mxu0 %v2013
    %v2090 = vpop.f32.mrb[0].mxu0
    %v2091 = vadd.f32 0.0, %v2090
    %v2092 = vpop.f32.mrb[0].mxu0
    %2093 = vmatprep.mubr.f32.mxu0 0.0
    %2094 = vmatmul.mubr.f32.gmra.mrb[0].mxu0 %v2016
    %v2095 = vpop.f32.mrb[0].mxu0
    %v2096 = vadd.f32 0.0, %v2095
    %v2097 = vpop.f32.mrb[0].mxu0
    %2098 = vdwg.mxu0
    %v2100 = vsel %vm1924, %v534, 0
    %v2103 = vsel %vm1924, %v602, 0
    %v2106 = vsel %vm1924, %v1126, 0
    %v2109 = vsel %vm1924, %v1194, 0
    %2111 = vmatprep.subr.mxu0 0.0
    %2112 = vmatpush1.xpose.msra.mxu0 %v2106
    %2113 = vmatprep.subr.mxu0 0.0
    %2114 = vmatpush1.xpose.msra.mxu0 %v2109
    %2115 = vmatprep.subr.mxu0 0.0
    %2116 = vmatpush1.xpose.msra.mxu0 0.0
    %2117 = vmatprep.subr.mxu0 0.0
    %2118 = vmatpush1.xpose.msra.mxu0 0.0
    %2119 = vmatprep.subr.mxu0 0.0
    %2120 = vmatpush1.xpose.msra.mxu0 0.0
    %2121 = vmatprep.subr.mxu0 0.0
    %2122 = vmatpush1.xpose.msra.mxu0 0.0
    %2123 = vmatprep.subr.mxu0 0.0
    %2124 = vmatpush1.xpose.msra.mxu0 0.0
    %2125 = vmatprep.subr.mxu0 0.0
    %2126 = vmatpush1.xpose.msra.mxu0 0.0
    %2127 = vmatprep.subr.mxu0 0.0
    %2128 = vmatpush1.xpose.msra.mxu0 0.0
    %2129 = vmatprep.subr.mxu0 0.0
    %2130 = vmatpush1.xpose.msra.mxu0 0.0
    %2131 = vmatprep.subr.mxu0 0.0
    %2132 = vmatpush1.xpose.msra.mxu0 0.0
    %2133 = vmatprep.subr.mxu0 0.0
    %2134 = vmatpush1.xpose.msra.mxu0 0.0
    %2135 = vmatprep.subr.mxu0 0.0
    %2136 = vmatpush1.xpose.msra.mxu0 0.0
    %2137 = vmatprep.subr.mxu0 0.0
    %2138 = vmatpush1.xpose.msra.mxu0 0.0
    %2139 = vmatprep.subr.mxu0 0.0
    %2140 = vmatpush1.xpose.msra.mxu0 0.0
    %2141 = vmatprep.subr.mxu0 0.0
    %2142 = vmatpush1.xpose.msra.mxu0 0.0
    %2143 = vmatprep.subr.mxu0 0.0
    %2144 = vmatpush1.xpose.msra.mxu0 0.0
    %2145 = vmatprep.subr.mxu0 0.0
    %2146 = vmatpush1.xpose.msra.mxu0 0.0
    %2147 = vmatprep.subr.mxu0 0.0
    %2148 = vmatpush1.xpose.msra.mxu0 0.0
    %2149 = vmatprep.subr.mxu0 0.0
    %2150 = vmatpush1.xpose.msra.mxu0 0.0
    %2151 = vmatprep.subr.mxu0 0.0
    %2152 = vmatpush1.xpose.msra.mxu0 0.0
    %2153 = vmatprep.subr.mxu0 0.0
    %2154 = vmatpush1.xpose.msra.mxu0 0.0
    %2155 = vmatprep.subr.mxu0 0.0
    %2156 = vmatpush1.xpose.msra.mxu0 0.0
    %2157 = vmatprep.subr.mxu0 0.0
    %2158 = vmatpush1.xpose.msra.mxu0 0.0
    %2159 = vmatprep.subr.mxu0 0.0
    %2160 = vmatpush1.xpose.msra.mxu0 0.0
    %2161 = vmatprep.subr.mxu0 0.0
    %2162 = vmatpush1.xpose.msra.mxu0 0.0
    %2163 = vmatprep.subr.mxu0 0.0
    %2164 = vmatpush1.xpose.msra.mxu0 0.0
    %2165 = vmatprep.subr.mxu0 0.0
    %2166 = vmatpush1.xpose.msra.mxu0 0.0
    %2167 = vmatprep.subr.mxu0 0.0
    %2168 = vmatpush1.xpose.msra.mxu0 0.0
    %2169 = vmatprep.subr.mxu0 0.0
    %2170 = vmatpush1.xpose.msra.mxu0 0.0
    %2171 = vmatprep.subr.mxu0 0.0
    %2172 = vmatpush1.xpose.msra.mxu0 0.0
    %2173 = vmatprep.subr.mxu0 0.0
    %2174 = vmatpush1.xpose.msra.mxu0 0.0
    %2175 = vmatprep.mubr.f32.mxu0 0.0
    %2176 = vmatmul.mubr.f32.gmra.mrb[0].mxu0 %v2100
    %v2177 = vpop.f32.mrb[0].mxu0
    %v2178 = vadd.f32 0.0, %v2177
    %v2179 = vpop.f32.mrb[0].mxu0
    %2180 = vmatprep.mubr.f32.mxu0 0.0
    %2181 = vmatmul.mubr.f32.gmra.mrb[0].mxu0 %v2103
    %v2182 = vpop.f32.mrb[0].mxu0
    %v2183 = vadd.f32 0.0, %v2182
    %v2184 = vpop.f32.mrb[0].mxu0
    %2185 = vdwg.mxu0
    %v2187 = vsel %vm1924, %v535, 0
    %v2190 = vsel %vm1924, %v603, 0
    %v2193 = vsel %vm1924, %v1127, 0
    %v2196 = vsel %vm1924, %v1195, 0
    %2198 = vmatprep.subr.mxu0 0.0
    %2199 = vmatpush1.xpose.msra.mxu0 %v2193
    %2200 = vmatprep.subr.mxu0 0.0
    %2201 = vmatpush1.xpose.msra.mxu0 %v2196
    %2202 = vmatprep.subr.mxu0 0.0
    %2203 = vmatpush1.xpose.msra.mxu0 0.0
    %2204 = vmatprep.subr.mxu0 0.0
    %2205 = vmatpush1.xpose.msra.mxu0 0.0
    %2206 = vmatprep.subr.mxu0 0.0
    %2207 = vmatpush1.xpose.msra.mxu0 0.0
    %2208 = vmatprep.subr.mxu0 0.0
    %2209 = vmatpush1.xpose.msra.mxu0 0.0
    %2210 = vmatprep.subr.mxu0 0.0
    %2211 = vmatpush1.xpose.msra.mxu0 0.0
    %2212 = vmatprep.subr.mxu0 0.0
    %2213 = vmatpush1.xpose.msra.mxu0 0.0
    %2214 = vmatprep.subr.mxu0 0.0
    %2215 = vmatpush1.xpose.msra.mxu0 0.0
    %2216 = vmatprep.subr.mxu0 0.0
    %2217 = vmatpush1.xpose.msra.mxu0 0.0
    %2218 = vmatprep.subr.mxu0 0.0
    %2219 = vmatpush1.xpose.msra.mxu0 0.0
    %2220 = vmatprep.subr.mxu0 0.0
    %2221 = vmatpush1.xpose.msra.mxu0 0.0
    %2222 = vmatprep.subr.mxu0 0.0
    %2223 = vmatpush1.xpose.msra.mxu0 0.0
    %2224 = vmatprep.subr.mxu0 0.0
    %2225 = vmatpush1.xpose.msra.mxu0 0.0
    %2226 = vmatprep.subr.mxu0 0.0
    %2227 = vmatpush1.xpose.msra.mxu0 0.0
    %2228 = vmatprep.subr.mxu0 0.0
    %2229 = vmatpush1.xpose.msra.mxu0 0.0
    %2230 = vmatprep.subr.mxu0 0.0
    %2231 = vmatpush1.xpose.msra.mxu0 0.0
    %2232 = vmatprep.subr.mxu0 0.0
    %2233 = vmatpush1.xpose.msra.mxu0 0.0
    %2234 = vmatprep.subr.mxu0 0.0
    %2235 = vmatpush1.xpose.msra.mxu0 0.0
    %2236 = vmatprep.subr.mxu0 0.0
    %2237 = vmatpush1.xpose.msra.mxu0 0.0
    %2238 = vmatprep.subr.mxu0 0.0
    %2239 = vmatpush1.xpose.msra.mxu0 0.0
    %2240 = vmatprep.subr.mxu0 0.0
    %2241 = vmatpush1.xpose.msra.mxu0 0.0
    %2242 = vmatprep.subr.mxu0 0.0
    %2243 = vmatpush1.xpose.msra.mxu0 0.0
    %2244 = vmatprep.subr.mxu0 0.0
    %2245 = vmatpush1.xpose.msra.mxu0 0.0
    %2246 = vmatprep.subr.mxu0 0.0
    %2247 = vmatpush1.xpose.msra.mxu0 0.0
    %2248 = vmatprep.subr.mxu0 0.0
    %2249 = vmatpush1.xpose.msra.mxu0 0.0
    %2250 = vmatprep.subr.mxu0 0.0
    %2251 = vmatpush1.xpose.msra.mxu0 0.0
    %2252 = vmatprep.subr.mxu0 0.0
    %2253 = vmatpush1.xpose.msra.mxu0 0.0
    %2254 = vmatprep.subr.mxu0 0.0
    %2255 = vmatpush1.xpose.msra.mxu0 0.0
    %2256 = vmatprep.subr.mxu0 0.0
    %2257 = vmatpush1.xpose.msra.mxu0 0.0
    %2258 = vmatprep.subr.mxu0 0.0
    %2259 = vmatpush1.xpose.msra.mxu0 0.0
    %2260 = vmatprep.subr.mxu0 0.0
    %2261 = vmatpush1.xpose.msra.mxu0 0.0
    %2262 = vmatprep.mubr.f32.mxu0 0.0
    %2263 = vmatmul.mubr.f32.gmra.mrb[0].mxu0 %v2187
    %v2264 = vpop.f32.mrb[0].mxu0
    %v2265 = vadd.f32 0.0, %v2264
    %v2266 = vpop.f32.mrb[0].mxu0
    %2267 = vmatprep.mubr.f32.mxu0 0.0
    %2268 = vmatmul.mubr.f32.gmra.mrb[0].mxu0 %v2190
    %v2269 = vpop.f32.mrb[0].mxu0
    %v2270 = vadd.f32 0.0, %v2269
    %v2271 = vpop.f32.mrb[0].mxu0
    %2272 = vdwg.mxu0
    %v2274 = vsel %vm1924, %v668, 0
    %v2277 = vsel %vm1924, %v736, 0
    %v2280 = vsel %vm1924, %v1260, 0
    %v2283 = vsel %vm1924, %v1328, 0
    %2285 = vmatprep.subr.mxu0 0.0
    %2286 = vmatpush1.xpose.msra.mxu0 %v2280
    %2287 = vmatprep.subr.mxu0 0.0
    %2288 = vmatpush1.xpose.msra.mxu0 %v2283
    %2289 = vmatprep.subr.mxu0 0.0
    %2290 = vmatpush1.xpose.msra.mxu0 0.0
    %2291 = vmatprep.subr.mxu0 0.0
    %2292 = vmatpush1.xpose.msra.mxu0 0.0
    %2293 = vmatprep.subr.mxu0 0.0
    %2294 = vmatpush1.xpose.msra.mxu0 0.0
    %2295 = vmatprep.subr.mxu0 0.0
    %2296 = vmatpush1.xpose.msra.mxu0 0.0
    %2297 = vmatprep.subr.mxu0 0.0
    %2298 = vmatpush1.xpose.msra.mxu0 0.0
    %2299 = vmatprep.subr.mxu0 0.0
    %2300 = vmatpush1.xpose.msra.mxu0 0.0
    %2301 = vmatprep.subr.mxu0 0.0
    %2302 = vmatpush1.xpose.msra.mxu0 0.0
    %2303 = vmatprep.subr.mxu0 0.0
    %2304 = vmatpush1.xpose.msra.mxu0 0.0
    %2305 = vmatprep.subr.mxu0 0.0
    %2306 = vmatpush1.xpose.msra.mxu0 0.0
    %2307 = vmatprep.subr.mxu0 0.0
    %2308 = vmatpush1.xpose.msra.mxu0 0.0
    %2309 = vmatprep.subr.mxu0 0.0
    %2310 = vmatpush1.xpose.msra.mxu0 0.0
    %2311 = vmatprep.subr.mxu0 0.0
    %2312 = vmatpush1.xpose.msra.mxu0 0.0
    %2313 = vmatprep.subr.mxu0 0.0
    %2314 = vmatpush1.xpose.msra.mxu0 0.0
    %2315 = vmatprep.subr.mxu0 0.0
    %2316 = vmatpush1.xpose.msra.mxu0 0.0
    %2317 = vmatprep.subr.mxu0 0.0
    %2318 = vmatpush1.xpose.msra.mxu0 0.0
    %2319 = vmatprep.subr.mxu0 0.0
    %2320 = vmatpush1.xpose.msra.mxu0 0.0
    %2321 = vmatprep.subr.mxu0 0.0
    %2322 = vmatpush1.xpose.msra.mxu0 0.0
    %2323 = vmatprep.subr.mxu0 0.0
    %2324 = vmatpush1.xpose.msra.mxu0 0.0
    %2325 = vmatprep.subr.mxu0 0.0
    %2326 = vmatpush1.xpose.msra.mxu0 0.0
    %2327 = vmatprep.subr.mxu0 0.0
    %2328 = vmatpush1.xpose.msra.mxu0 0.0
    %2329 = vmatprep.subr.mxu0 0.0
    %2330 = vmatpush1.xpose.msra.mxu0 0.0
    %2331 = vmatprep.subr.mxu0 0.0
    %2332 = vmatpush1.xpose.msra.mxu0 0.0
    %2333 = vmatprep.subr.mxu0 0.0
    %2334 = vmatpush1.xpose.msra.mxu0 0.0
    %2335 = vmatprep.subr.mxu0 0.0
    %2336 = vmatpush1.xpose.msra.mxu0 0.0
    %2337 = vmatprep.subr.mxu0 0.0
    %2338 = vmatpush1.xpose.msra.mxu0 0.0
    %2339 = vmatprep.subr.mxu0 0.0
    %2340 = vmatpush1.xpose.msra.mxu0 0.0
    %2341 = vmatprep.subr.mxu0 0.0
    %2342 = vmatpush1.xpose.msra.mxu0 0.0
    %2343 = vmatprep.subr.mxu0 0.0
    %2344 = vmatpush1.xpose.msra.mxu0 0.0
    %2345 = vmatprep.subr.mxu0 0.0
    %2346 = vmatpush1.xpose.msra.mxu0 0.0
    %2347 = vmatprep.subr.mxu0 0.0
    %2348 = vmatpush1.xpose.msra.mxu0 0.0
    %2349 = vmatprep.mubr.f32.mxu0 0.0
    %2350 = vmatmul.mubr.f32.gmra.mrb[0].mxu0 %v2274
    %v2351 = vpop.f32.mrb[0].mxu0
    %v2352 = vadd.f32 0.0, %v2351
    %v2353 = vpop.f32.mrb[0].mxu0
    %2354 = vmatprep.mubr.f32.mxu0 0.0
    %2355 = vmatmul.mubr.f32.gmra.mrb[0].mxu0 %v2277
    %v2356 = vpop.f32.mrb[0].mxu0
    %v2357 = vadd.f32 0.0, %v2356
    %v2358 = vpop.f32.mrb[0].mxu0
    %2359 = vdwg.mxu0
    %v2361 = vsel %vm1924, %v669, 0
    %v2364 = vsel %vm1924, %v737, 0
    %v2367 = vsel %vm1924, %v1261, 0
    %v2370 = vsel %vm1924, %v1329, 0
    %2372 = vmatprep.subr.mxu0 0.0
    %2373 = vmatpush1.xpose.msra.mxu0 %v2367
    %2374 = vmatprep.subr.mxu0 0.0
    %2375 = vmatpush1.xpose.msra.mxu0 %v2370
    %2376 = vmatprep.subr.mxu0 0.0
    %2377 = vmatpush1.xpose.msra.mxu0 0.0
    %2378 = vmatprep.subr.mxu0 0.0
    %2379 = vmatpush1.xpose.msra.mxu0 0.0
    %2380 = vmatprep.subr.mxu0 0.0
    %2381 = vmatpush1.xpose.msra.mxu0 0.0
    %2382 = vmatprep.subr.mxu0 0.0
    %2383 = vmatpush1.xpose.msra.mxu0 0.0
    %2384 = vmatprep.subr.mxu0 0.0
    %2385 = vmatpush1.xpose.msra.mxu0 0.0
    %2386 = vmatprep.subr.mxu0 0.0
    %2387 = vmatpush1.xpose.msra.mxu0 0.0
    %2388 = vmatprep.subr.mxu0 0.0
    %2389 = vmatpush1.xpose.msra.mxu0 0.0
    %2390 = vmatprep.subr.mxu0 0.0
    %2391 = vmatpush1.xpose.msra.mxu0 0.0
    %2392 = vmatprep.subr.mxu0 0.0
    %2393 = vmatpush1.xpose.msra.mxu0 0.0
    %2394 = vmatprep.subr.mxu0 0.0
    %2395 = vmatpush1.xpose.msra.mxu0 0.0
    %2396 = vmatprep.subr.mxu0 0.0
    %2397 = vmatpush1.xpose.msra.mxu0 0.0
    %2398 = vmatprep.subr.mxu0 0.0
    %2399 = vmatpush1.xpose.msra.mxu0 0.0
    %2400 = vmatprep.subr.mxu0 0.0
    %2401 = vmatpush1.xpose.msra.mxu0 0.0
    %2402 = vmatprep.subr.mxu0 0.0
    %2403 = vmatpush1.xpose.msra.mxu0 0.0
    %2404 = vmatprep.subr.mxu0 0.0
    %2405 = vmatpush1.xpose.msra.mxu0 0.0
    %2406 = vmatprep.subr.mxu0 0.0
    %2407 = vmatpush1.xpose.msra.mxu0 0.0
    %2408 = vmatprep.subr.mxu0 0.0
    %2409 = vmatpush1.xpose.msra.mxu0 0.0
    %2410 = vmatprep.subr.mxu0 0.0
    %2411 = vmatpush1.xpose.msra.mxu0 0.0
    %2412 = vmatprep.subr.mxu0 0.0
    %2413 = vmatpush1.xpose.msra.mxu0 0.0
    %2414 = vmatprep.subr.mxu0 0.0
    %2415 = vmatpush1.xpose.msra.mxu0 0.0
    %2416 = vmatprep.subr.mxu0 0.0
    %2417 = vmatpush1.xpose.msra.mxu0 0.0
    %2418 = vmatprep.subr.mxu0 0.0
    %2419 = vmatpush1.xpose.msra.mxu0 0.0
    %2420 = vmatprep.subr.mxu0 0.0
    %2421 = vmatpush1.xpose.msra.mxu0 0.0
    %2422 = vmatprep.subr.mxu0 0.0
    %2423 = vmatpush1.xpose.msra.mxu0 0.0
    %2424 = vmatprep.subr.mxu0 0.0
    %2425 = vmatpush1.xpose.msra.mxu0 0.0
    %2426 = vmatprep.subr.mxu0 0.0
    %2427 = vmatpush1.xpose.msra.mxu0 0.0
    %2428 = vmatprep.subr.mxu0 0.0
    %2429 = vmatpush1.xpose.msra.mxu0 0.0
    %2430 = vmatprep.subr.mxu0 0.0
    %2431 = vmatpush1.xpose.msra.mxu0 0.0
    %2432 = vmatprep.subr.mxu0 0.0
    %2433 = vmatpush1.xpose.msra.mxu0 0.0
    %2434 = vmatprep.subr.mxu0 0.0
    %2435 = vmatpush1.xpose.msra.mxu0 0.0
    %2436 = vmatprep.mubr.f32.mxu0 0.0
    %2437 = vmatmul.mubr.f32.gmra.mrb[0].mxu0 %v2361
    %v2438 = vpop.f32.mrb[0].mxu0
    %v2439 = vadd.f32 0.0, %v2438
    %v2440 = vpop.f32.mrb[0].mxu0
    %2441 = vmatprep.mubr.f32.mxu0 0.0
    %2442 = vmatmul.mubr.f32.gmra.mrb[0].mxu0 %v2364
    %v2443 = vpop.f32.mrb[0].mxu0
    %v2444 = vadd.f32 0.0, %v2443
    %v2445 = vpop.f32.mrb[0].mxu0
    %2446 = vdwg.mxu0
    %v2448 = vsel %vm1924, %v670, 0
    %v2451 = vsel %vm1924, %v738, 0
    %v2454 = vsel %vm1924, %v1262, 0
    %v2457 = vsel %vm1924, %v1330, 0
    %2459 = vmatprep.subr.mxu0 0.0
    %2460 = vmatpush1.xpose.msra.mxu0 %v2454
    %2461 = vmatprep.subr.mxu0 0.0
    %2462 = vmatpush1.xpose.msra.mxu0 %v2457
    %2463 = vmatprep.subr.mxu0 0.0
    %2464 = vmatpush1.xpose.msra.mxu0 0.0
    %2465 = vmatprep.subr.mxu0 0.0
    %2466 = vmatpush1.xpose.msra.mxu0 0.0
    %2467 = vmatprep.subr.mxu0 0.0
    %2468 = vmatpush1.xpose.msra.mxu0 0.0
    %2469 = vmatprep.subr.mxu0 0.0
    %2470 = vmatpush1.xpose.msra.mxu0 0.0
    %2471 = vmatprep.subr.mxu0 0.0
    %2472 = vmatpush1.xpose.msra.mxu0 0.0
    %2473 = vmatprep.subr.mxu0 0.0
    %2474 = vmatpush1.xpose.msra.mxu0 0.0
    %2475 = vmatprep.subr.mxu0 0.0
    %2476 = vmatpush1.xpose.msra.mxu0 0.0
    %2477 = vmatprep.subr.mxu0 0.0
    %2478 = vmatpush1.xpose.msra.mxu0 0.0
    %2479 = vmatprep.subr.mxu0 0.0
    %2480 = vmatpush1.xpose.msra.mxu0 0.0
    %2481 = vmatprep.subr.mxu0 0.0
    %2482 = vmatpush1.xpose.msra.mxu0 0.0
    %2483 = vmatprep.subr.mxu0 0.0
    %2484 = vmatpush1.xpose.msra.mxu0 0.0
    %2485 = vmatprep.subr.mxu0 0.0
    %2486 = vmatpush1.xpose.msra.mxu0 0.0
    %2487 = vmatprep.subr.mxu0 0.0
    %2488 = vmatpush1.xpose.msra.mxu0 0.0
    %2489 = vmatprep.subr.mxu0 0.0
    %2490 = vmatpush1.xpose.msra.mxu0 0.0
    %2491 = vmatprep.subr.mxu0 0.0
    %2492 = vmatpush1.xpose.msra.mxu0 0.0
    %2493 = vmatprep.subr.mxu0 0.0
    %2494 = vmatpush1.xpose.msra.mxu0 0.0
    %2495 = vmatprep.subr.mxu0 0.0
    %2496 = vmatpush1.xpose.msra.mxu0 0.0
    %2497 = vmatprep.subr.mxu0 0.0
    %2498 = vmatpush1.xpose.msra.mxu0 0.0
    %2499 = vmatprep.subr.mxu0 0.0
    %2500 = vmatpush1.xpose.msra.mxu0 0.0
    %2501 = vmatprep.subr.mxu0 0.0
    %2502 = vmatpush1.xpose.msra.mxu0 0.0
    %2503 = vmatprep.subr.mxu0 0.0
    %2504 = vmatpush1.xpose.msra.mxu0 0.0
    %2505 = vmatprep.subr.mxu0 0.0
    %2506 = vmatpush1.xpose.msra.mxu0 0.0
    %2507 = vmatprep.subr.mxu0 0.0
    %2508 = vmatpush1.xpose.msra.mxu0 0.0
    %2509 = vmatprep.subr.mxu0 0.0
    %2510 = vmatpush1.xpose.msra.mxu0 0.0
    %2511 = vmatprep.subr.mxu0 0.0
    %2512 = vmatpush1.xpose.msra.mxu0 0.0
    %2513 = vmatprep.subr.mxu0 0.0
    %2514 = vmatpush1.xpose.msra.mxu0 0.0
    %2515 = vmatprep.subr.mxu0 0.0
    %2516 = vmatpush1.xpose.msra.mxu0 0.0
    %2517 = vmatprep.subr.mxu0 0.0
    %2518 = vmatpush1.xpose.msra.mxu0 0.0
    %2519 = vmatprep.subr.mxu0 0.0
    %2520 = vmatpush1.xpose.msra.mxu0 0.0
    %2521 = vmatprep.subr.mxu0 0.0
    %2522 = vmatpush1.xpose.msra.mxu0 0.0
    %2523 = vmatprep.mubr.f32.mxu0 0.0
    %2524 = vmatmul.mubr.f32.gmra.mrb[0].mxu0 %v2448
    %v2525 = vpop.f32.mrb[0].mxu0
    %v2526 = vadd.f32 0.0, %v2525
    %v2527 = vpop.f32.mrb[0].mxu0
    %2528 = vmatprep.mubr.f32.mxu0 0.0
    %2529 = vmatmul.mubr.f32.gmra.mrb[0].mxu0 %v2451
    %v2530 = vpop.f32.mrb[0].mxu0
    %v2531 = vadd.f32 0.0, %v2530
    %v2532 = vpop.f32.mrb[0].mxu0
    %2533 = vdwg.mxu0
    %v2535 = vsel %vm1924, %v671, 0
    %v2538 = vsel %vm1924, %v739, 0
    %v2541 = vsel %vm1924, %v1263, 0
    %v2544 = vsel %vm1924, %v1331, 0
    %2546 = vmatprep.subr.mxu0 0.0
    %2547 = vmatpush1.xpose.msra.mxu0 %v2541
    %2548 = vmatprep.subr.mxu0 0.0
    %2549 = vmatpush1.xpose.msra.mxu0 %v2544
    %2550 = vmatprep.subr.mxu0 0.0
    %2551 = vmatpush1.xpose.msra.mxu0 0.0
    %2552 = vmatprep.subr.mxu0 0.0
    %2553 = vmatpush1.xpose.msra.mxu0 0.0
    %2554 = vmatprep.subr.mxu0 0.0
    %2555 = vmatpush1.xpose.msra.mxu0 0.0
    %2556 = vmatprep.subr.mxu0 0.0
    %2557 = vmatpush1.xpose.msra.mxu0 0.0
    %2558 = vmatprep.subr.mxu0 0.0
    %2559 = vmatpush1.xpose.msra.mxu0 0.0
    %2560 = vmatprep.subr.mxu0 0.0
    %2561 = vmatpush1.xpose.msra.mxu0 0.0
    %2562 = vmatprep.subr.mxu0 0.0
    %2563 = vmatpush1.xpose.msra.mxu0 0.0
    %2564 = vmatprep.subr.mxu0 0.0
    %2565 = vmatpush1.xpose.msra.mxu0 0.0
    %2566 = vmatprep.subr.mxu0 0.0
    %2567 = vmatpush1.xpose.msra.mxu0 0.0
    %2568 = vmatprep.subr.mxu0 0.0
    %2569 = vmatpush1.xpose.msra.mxu0 0.0
    %2570 = vmatprep.subr.mxu0 0.0
    %2571 = vmatpush1.xpose.msra.mxu0 0.0
    %2572 = vmatprep.subr.mxu0 0.0
    %2573 = vmatpush1.xpose.msra.mxu0 0.0
    %2574 = vmatprep.subr.mxu0 0.0
    %2575 = vmatpush1.xpose.msra.mxu0 0.0
    %2576 = vmatprep.subr.mxu0 0.0
    %2577 = vmatpush1.xpose.msra.mxu0 0.0
    %2578 = vmatprep.subr.mxu0 0.0
    %2579 = vmatpush1.xpose.msra.mxu0 0.0
    %2580 = vmatprep.subr.mxu0 0.0
    %2581 = vmatpush1.xpose.msra.mxu0 0.0
    %2582 = vmatprep.subr.mxu0 0.0
    %2583 = vmatpush1.xpose.msra.mxu0 0.0
    %2584 = vmatprep.subr.mxu0 0.0
    %2585 = vmatpush1.xpose.msra.mxu0 0.0
    %2586 = vmatprep.subr.mxu0 0.0
    %2587 = vmatpush1.xpose.msra.mxu0 0.0
    %2588 = vmatprep.subr.mxu0 0.0
    %2589 = vmatpush1.xpose.msra.mxu0 0.0
    %2590 = vmatprep.subr.mxu0 0.0
    %2591 = vmatpush1.xpose.msra.mxu0 0.0
    %2592 = vmatprep.subr.mxu0 0.0
    %2593 = vmatpush1.xpose.msra.mxu0 0.0
    %2594 = vmatprep.subr.mxu0 0.0
    %2595 = vmatpush1.xpose.msra.mxu0 0.0
    %2596 = vmatprep.subr.mxu0 0.0
    %2597 = vmatpush1.xpose.msra.mxu0 0.0
    %2598 = vmatprep.subr.mxu0 0.0
    %2599 = vmatpush1.xpose.msra.mxu0 0.0
    %2600 = vmatprep.subr.mxu0 0.0
    %2601 = vmatpush1.xpose.msra.mxu0 0.0
    %2602 = vmatprep.subr.mxu0 0.0
    %2603 = vmatpush1.xpose.msra.mxu0 0.0
    %2604 = vmatprep.subr.mxu0 0.0
    %2605 = vmatpush1.xpose.msra.mxu0 0.0
    %2606 = vmatprep.subr.mxu0 0.0
    %2607 = vmatpush1.xpose.msra.mxu0 0.0
    %2608 = vmatprep.subr.mxu0 0.0
    %2609 = vmatpush1.xpose.msra.mxu0 0.0
    %2610 = vmatprep.mubr.f32.mxu0 0.0
    %2611 = vmatmul.mubr.f32.gmra.mrb[0].mxu0 %v2535
    %v2612 = vpop.f32.mrb[0].mxu0
    %v2613 = vadd.f32 0.0, %v2612
    %v2614 = vpop.f32.mrb[0].mxu0
    %2615 = vmatprep.mubr.f32.mxu0 0.0
    %2616 = vmatmul.mubr.f32.gmra.mrb[0].mxu0 %v2538
    %v2617 = vpop.f32.mrb[0].mxu0
    %v2618 = vadd.f32 0.0, %v2617
    %v2619 = vpop.f32.mrb[0].mxu0
    %2620 = vdwg.mxu0
    %vm2621 = vcmask 130048
    %v2622 = vsel %vm2621, %v2004, -inf
    %2623 = vmax.xlane.f32.xlu0 %v2622
    %v2624 = vpop.xlane.xlu0 %2623
    %v2625 = vsel %vm2621, %v2009, -inf
    %2626 = vmax.xlane.f32.xlu0 %v2625
    %v2627 = vpop.xlane.xlu0 %2626
    %v2628 = vsel %vm2621, %v2091, -inf
    %2629 = vmax.xlane.f32.xlu0 %v2628
    %v2630 = vpop.xlane.xlu0 %2629
    %v2631 = vsel %vm2621, %v2096, -inf
    %2632 = vmax.xlane.f32.xlu0 %v2631
    %v2633 = vpop.xlane.xlu0 %2632
    %v2634 = vsel %vm2621, %v2178, -inf
    %2635 = vmax.xlane.f32.xlu0 %v2634
    %v2636 = vpop.xlane.xlu0 %2635
    %v2637 = vsel %vm2621, %v2183, -inf
    %2638 = vmax.xlane.f32.xlu0 %v2637
    %v2639 = vpop.xlane.xlu0 %2638
    %v2640 = vsel %vm2621, %v2265, -inf
    %2641 = vmax.xlane.f32.xlu0 %v2640
    %v2642 = vpop.xlane.xlu0 %2641
    %v2643 = vsel %vm2621, %v2270, -inf
    %2644 = vmax.xlane.f32.xlu0 %v2643
    %v2645 = vpop.xlane.xlu0 %2644
    %v2646 = vsel %vm2621, %v2352, -inf
    %2647 = vmax.xlane.f32.xlu0 %v2646
    %v2648 = vpop.xlane.xlu0 %2647
    %v2649 = vsel %vm2621, %v2357, -inf
    %2650 = vmax.xlane.f32.xlu0 %v2649
    %v2651 = vpop.xlane.xlu0 %2650
    %v2652 = vsel %vm2621, %v2439, -inf
    %2653 = vmax.xlane.f32.xlu0 %v2652
    %v2654 = vpop.xlane.xlu0 %2653
    %v2655 = vsel %vm2621, %v2444, -inf
    %2656 = vmax.xlane.f32.xlu0 %v2655
    %v2657 = vpop.xlane.xlu0 %2656
    %v2658 = vsel %vm2621, %v2526, -inf
    %2659 = vmax.xlane.f32.xlu0 %v2658
    %v2660 = vpop.xlane.xlu0 %2659
    %v2661 = vsel %vm2621, %v2531, -inf
    %2662 = vmax.xlane.f32.xlu0 %v2661
    %v2663 = vpop.xlane.xlu0 %2662
    %v2664 = vsel %vm2621, %v2613, -inf
    %2665 = vmax.xlane.f32.xlu0 %v2664
    %v2666 = vpop.xlane.xlu0 %2665
    %v2667 = vsel %vm2621, %v2618, -inf
    %2668 = vmax.xlane.f32.xlu0 %v2667
    %v2669 = vpop.xlane.xlu0 %2668
    %v2670 = vsub.f32 %v2004, %v2624
    %v2671 = vsub.f32 %v2009, %v2627
    %v2672 = vsub.f32 %v2091, %v2630
    %v2673 = vsub.f32 %v2096, %v2633
    %v2674 = vsub.f32 %v2178, %v2636
    %v2675 = vsub.f32 %v2183, %v2639
    %v2676 = vsub.f32 %v2265, %v2642
    %v2677 = vsub.f32 %v2270, %v2645
    %v2678 = vsub.f32 %v2352, %v2648
    %v2679 = vsub.f32 %v2357, %v2651
    %v2680 = vsub.f32 %v2439, %v2654
    %v2681 = vsub.f32 %v2444, %v2657
    %v2682 = vsub.f32 %v2526, %v2660
    %v2683 = vsub.f32 %v2531, %v2663
    %v2684 = vsub.f32 %v2613, %v2666
    %v2685 = vsub.f32 %v2618, %v2669
    %v2686 = vmul.f32 %v2670, 1.442695
    %v2687 = vpow.pop %v2686
    %v2688 = vmul.f32 %v2671, 1.442695
    %v2689 = vpow.pop %v2688
    %v2690 = vmul.f32 %v2672, 1.442695
    %v2691 = vpow.pop %v2690
    %v2692 = vmul.f32 %v2673, 1.442695
    %v2693 = vpow.pop %v2692
    %v2694 = vmul.f32 %v2674, 1.442695
    %v2695 = vpow.pop %v2694
    %v2696 = vmul.f32 %v2675, 1.442695
    %v2697 = vpow.pop %v2696
    %v2698 = vmul.f32 %v2676, 1.442695
    %v2699 = vpow.pop %v2698
    %v2700 = vmul.f32 %v2677, 1.442695
    %v2701 = vpow.pop %v2700
    %v2702 = vmul.f32 %v2678, 1.442695
    %v2703 = vpow.pop %v2702
    %v2704 = vmul.f32 %v2679, 1.442695
    %v2705 = vpow.pop %v2704
    %v2706 = vmul.f32 %v2680, 1.442695
    %v2707 = vpow.pop %v2706
    %v2708 = vmul.f32 %v2681, 1.442695
    %v2709 = vpow.pop %v2708
    %v2710 = vmul.f32 %v2682, 1.442695
    %v2711 = vpow.pop %v2710
    %v2712 = vmul.f32 %v2683, 1.442695
    %v2713 = vpow.pop %v2712
    %v2714 = vmul.f32 %v2684, 1.442695
    %v2715 = vpow.pop %v2714
    %v2716 = vmul.f32 %v2685, 1.442695
    %v2717 = vpow.pop %v2716
    %v2718 = vsel %vm2621, %v2687, 0.0
    %2719 = vadd.xlane.f32.xlu0 %v2718
    %v2720 = vpop.xlane.xlu0 %2719
    %v2721 = vsel %vm2621, %v2689, 0.0
    %2722 = vadd.xlane.f32.xlu0 %v2721
    %v2723 = vpop.xlane.xlu0 %2722
    %v2724 = vsel %vm2621, %v2691, 0.0
    %2725 = vadd.xlane.f32.xlu0 %v2724
    %v2726 = vpop.xlane.xlu0 %2725
    %v2727 = vsel %vm2621, %v2693, 0.0
    %2728 = vadd.xlane.f32.xlu0 %v2727
    %v2729 = vpop.xlane.xlu0 %2728
    %v2730 = vsel %vm2621, %v2695, 0.0
    %2731 = vadd.xlane.f32.xlu0 %v2730
    %v2732 = vpop.xlane.xlu0 %2731
    %v2733 = vsel %vm2621, %v2697, 0.0
    %2734 = vadd.xlane.f32.xlu0 %v2733
    %v2735 = vpop.xlane.xlu0 %2734
    %v2736 = vsel %vm2621, %v2699, 0.0
    %2737 = vadd.xlane.f32.xlu0 %v2736
    %v2738 = vpop.xlane.xlu0 %2737
    %v2739 = vsel %vm2621, %v2701, 0.0
    %2740 = vadd.xlane.f32.xlu0 %v2739
    %v2741 = vpop.xlane.xlu0 %2740
    %v2742 = vsel %vm2621, %v2703, 0.0
    %2743 = vadd.xlane.f32.xlu0 %v2742
    %v2744 = vpop.xlane.xlu0 %2743
    %v2745 = vsel %vm2621, %v2705, 0.0
    %2746 = vadd.xlane.f32.xlu0 %v2745
    %v2747 = vpop.xlane.xlu0 %2746
    %v2748 = vsel %vm2621, %v2707, 0.0
    %2749 = vadd.xlane.f32.xlu0 %v2748
    %v2750 = vpop.xlane.xlu0 %2749
    %v2751 = vsel %vm2621, %v2709, 0.0
    %2752 = vadd.xlane.f32.xlu0 %v2751
    %v2753 = vpop.xlane.xlu0 %2752
    %v2754 = vsel %vm2621, %v2711, 0.0
    %2755 = vadd.xlane.f32.xlu0 %v2754
    %v2756 = vpop.xlane.xlu0 %2755
    %v2757 = vsel %vm2621, %v2713, 0.0
    %2758 = vadd.xlane.f32.xlu0 %v2757
    %v2759 = vpop.xlane.xlu0 %2758
    %v2760 = vsel %vm2621, %v2715, 0.0
    %2761 = vadd.xlane.f32.xlu0 %v2760
    %v2762 = vpop.xlane.xlu0 %2761
    %v2763 = vsel %vm2621, %v2717, 0.0
    %2764 = vadd.xlane.f32.xlu0 %v2763
    %v2765 = vpop.xlane.xlu0 %2764
    %v2766 = vrcp.pop %v2720
    %v2767 = vrcp.pop %v2723
    %v2768 = vrcp.pop %v2726
    %v2769 = vrcp.pop %v2729
    %v2770 = vrcp.pop %v2732
    %v2771 = vrcp.pop %v2735
    %v2772 = vrcp.pop %v2738
    %v2773 = vrcp.pop %v2741
    %v2774 = vrcp.pop %v2744
    %v2775 = vrcp.pop %v2747
    %v2776 = vrcp.pop %v2750
    %v2777 = vrcp.pop %v2753
    %v2778 = vrcp.pop %v2756
    %v2779 = vrcp.pop %v2759
    %v2780 = vrcp.pop %v2762
    %v2781 = vrcp.pop %v2765
    %v2782 = vmul.f32 %v2687, %v2766
    %v2783 = vmul.f32 %v2689, %v2767
    %v2784 = vmul.f32 %v2691, %v2768
    %v2785 = vmul.f32 %v2693, %v2769
    %v2786 = vmul.f32 %v2695, %v2770
    %v2787 = vmul.f32 %v2697, %v2771
    %v2788 = vmul.f32 %v2699, %v2772
    %v2789 = vmul.f32 %v2701, %v2773
    %v2790 = vmul.f32 %v2703, %v2774
    %v2791 = vmul.f32 %v2705, %v2775
    %v2792 = vmul.f32 %v2707, %v2776
    %v2793 = vmul.f32 %v2709, %v2777
    %v2794 = vmul.f32 %v2711, %v2778
    %v2795 = vmul.f32 %v2713, %v2779
    %v2796 = vmul.f32 %v2715, %v2780
    %v2797 = vmul.f32 %v2717, %v2781
    %v2799 = vsel %vm2621, %v2782, 0
    %v2802 = vsel %vm2621, %v2783, 0
    %2804 = vmatprep.subr.mxu0 0.0
    %2805 = vmatpush1.msra.mxu0 %v1716
    %2806 = vmatprep.subr.mxu0 0.0
    %2807 = vmatpush1.msra.mxu0 %v1784
    %2808 = vmatprep.subr.mxu0 0.0
    %2809 = vmatpush1.msra.mxu0 0.0
    %2810 = vmatprep.subr.mxu0 0.0
    %2811 = vmatpush1.msra.mxu0 0.0
    %2812 = vmatprep.subr.mxu0 0.0
    %2813 = vmatpush1.msra.mxu0 0.0
    %2814 = vmatprep.subr.mxu0 0.0
    %2815 = vmatpush1.msra.mxu0 0.0
    %2816 = vmatprep.subr.mxu0 0.0
    %2817 = vmatpush1.msra.mxu0 0.0
    %2818 = vmatprep.subr.mxu0 0.0
    %2819 = vmatpush1.msra.mxu0 0.0
    %2820 = vmatprep.subr.mxu0 0.0
    %2821 = vmatpush1.msra.mxu0 0.0
    %2822 = vmatprep.subr.mxu0 0.0
    %2823 = vmatpush1.msra.mxu0 0.0
    %2824 = vmatprep.subr.mxu0 0.0
    %2825 = vmatpush1.msra.mxu0 0.0
    %2826 = vmatprep.subr.mxu0 0.0
    %2827 = vmatpush1.msra.mxu0 0.0
    %2828 = vmatprep.subr.mxu0 0.0
    %2829 = vmatpush1.msra.mxu0 0.0
    %2830 = vmatprep.subr.mxu0 0.0
    %2831 = vmatpush1.msra.mxu0 0.0
    %2832 = vmatprep.subr.mxu0 0.0
    %2833 = vmatpush1.msra.mxu0 0.0
    %2834 = vmatprep.subr.mxu0 0.0
    %2835 = vmatpush1.msra.mxu0 0.0
    %2836 = vmatprep.subr.mxu0 0.0
    %2837 = vmatpush1.msra.mxu0 0.0
    %2838 = vmatprep.subr.mxu0 0.0
    %2839 = vmatpush1.msra.mxu0 0.0
    %2840 = vmatprep.subr.mxu0 0.0
    %2841 = vmatpush1.msra.mxu0 0.0
    %2842 = vmatprep.subr.mxu0 0.0
    %2843 = vmatpush1.msra.mxu0 0.0
    %2844 = vmatprep.subr.mxu0 0.0
    %2845 = vmatpush1.msra.mxu0 0.0
    %2846 = vmatprep.subr.mxu0 0.0
    %2847 = vmatpush1.msra.mxu0 0.0
    %2848 = vmatprep.subr.mxu0 0.0
    %2849 = vmatpush1.msra.mxu0 0.0
    %2850 = vmatprep.subr.mxu0 0.0
    %2851 = vmatpush1.msra.mxu0 0.0
    %2852 = vmatprep.subr.mxu0 0.0
    %2853 = vmatpush1.msra.mxu0 0.0
    %2854 = vmatprep.subr.mxu0 0.0
    %2855 = vmatpush1.msra.mxu0 0.0
    %2856 = vmatprep.subr.mxu0 0.0
    %2857 = vmatpush1.msra.mxu0 0.0
    %2858 = vmatprep.subr.mxu0 0.0
    %2859 = vmatpush1.msra.mxu0 0.0
    %2860 = vmatprep.subr.mxu0 0.0
    %2861 = vmatpush1.msra.mxu0 0.0
    %2862 = vmatprep.subr.mxu0 0.0
    %2863 = vmatpush1.msra.mxu0 0.0
    %2864 = vmatprep.subr.mxu0 0.0
    %2865 = vmatpush1.msra.mxu0 0.0
    %2866 = vmatprep.subr.mxu0 0.0
    %2867 = vmatpush1.msra.mxu0 0.0
    %2868 = vmatprep.mubr.f32.mxu0 0.0
    %2869 = vmatmul.mubr.f32.gmra.mrb[0].mxu0 %v2799
    %v2870 = vpop.f32.mrb[0].mxu0
    %v2871 = vadd.f32 0.0, %v2870
    %v2872 = vpop.f32.mrb[0].mxu0
    %2873 = vmatprep.mubr.f32.mxu0 0.0
    %2874 = vmatmul.mubr.f32.gmra.mrb[0].mxu0 %v2802
    %v2875 = vpop.f32.mrb[0].mxu0
    %v2876 = vadd.f32 0.0, %v2875
    %v2877 = vpop.f32.mrb[0].mxu0
    %2878 = vdwg.mxu0
    %v2880 = vsel %vm2621, %v2784, 0
    %v2883 = vsel %vm2621, %v2785, 0
    %2885 = vmatprep.subr.mxu0 0.0
    %2886 = vmatpush1.msra.mxu0 %v1717
    %2887 = vmatprep.subr.mxu0 0.0
    %2888 = vmatpush1.msra.mxu0 %v1785
    %2889 = vmatprep.subr.mxu0 0.0
    %2890 = vmatpush1.msra.mxu0 0.0
    %2891 = vmatprep.subr.mxu0 0.0
    %2892 = vmatpush1.msra.mxu0 0.0
    %2893 = vmatprep.subr.mxu0 0.0
    %2894 = vmatpush1.msra.mxu0 0.0
    %2895 = vmatprep.subr.mxu0 0.0
    %2896 = vmatpush1.msra.mxu0 0.0
    %2897 = vmatprep.subr.mxu0 0.0
    %2898 = vmatpush1.msra.mxu0 0.0
    %2899 = vmatprep.subr.mxu0 0.0
    %2900 = vmatpush1.msra.mxu0 0.0
    %2901 = vmatprep.subr.mxu0 0.0
    %2902 = vmatpush1.msra.mxu0 0.0
    %2903 = vmatprep.subr.mxu0 0.0
    %2904 = vmatpush1.msra.mxu0 0.0
    %2905 = vmatprep.subr.mxu0 0.0
    %2906 = vmatpush1.msra.mxu0 0.0
    %2907 = vmatprep.subr.mxu0 0.0
    %2908 = vmatpush1.msra.mxu0 0.0
    %2909 = vmatprep.subr.mxu0 0.0
    %2910 = vmatpush1.msra.mxu0 0.0
    %2911 = vmatprep.subr.mxu0 0.0
    %2912 = vmatpush1.msra.mxu0 0.0
    %2913 = vmatprep.subr.mxu0 0.0
    %2914 = vmatpush1.msra.mxu0 0.0
    %2915 = vmatprep.subr.mxu0 0.0
    %2916 = vmatpush1.msra.mxu0 0.0
    %2917 = vmatprep.subr.mxu0 0.0
    %2918 = vmatpush1.msra.mxu0 0.0
    %2919 = vmatprep.subr.mxu0 0.0
    %2920 = vmatpush1.msra.mxu0 0.0
    %2921 = vmatprep.subr.mxu0 0.0
    %2922 = vmatpush1.msra.mxu0 0.0
    %2923 = vmatprep.subr.mxu0 0.0
    %2924 = vmatpush1.msra.mxu0 0.0
    %2925 = vmatprep.subr.mxu0 0.0
    %2926 = vmatpush1.msra.mxu0 0.0
    %2927 = vmatprep.subr.mxu0 0.0
    %2928 = vmatpush1.msra.mxu0 0.0
    %2929 = vmatprep.subr.mxu0 0.0
    %2930 = vmatpush1.msra.mxu0 0.0
    %2931 = vmatprep.subr.mxu0 0.0
    %2932 = vmatpush1.msra.mxu0 0.0
    %2933 = vmatprep.subr.mxu0 0.0
    %2934 = vmatpush1.msra.mxu0 0.0
    %2935 = vmatprep.subr.mxu0 0.0
    %2936 = vmatpush1.msra.mxu0 0.0
    %2937 = vmatprep.subr.mxu0 0.0
    %2938 = vmatpush1.msra.mxu0 0.0
    %2939 = vmatprep.subr.mxu0 0.0
    %2940 = vmatpush1.msra.mxu0 0.0
    %2941 = vmatprep.subr.mxu0 0.0
    %2942 = vmatpush1.msra.mxu0 0.0
    %2943 = vmatprep.subr.mxu0 0.0
    %2944 = vmatpush1.msra.mxu0 0.0
    %2945 = vmatprep.subr.mxu0 0.0
    %2946 = vmatpush1.msra.mxu0 0.0
    %2947 = vmatprep.subr.mxu0 0.0
    %2948 = vmatpush1.msra.mxu0 0.0
    %2949 = vmatprep.mubr.f32.mxu0 0.0
    %2950 = vmatmul.mubr.f32.gmra.mrb[0].mxu0 %v2880
    %v2951 = vpop.f32.mrb[0].mxu0
    %v2952 = vadd.f32 0.0, %v2951
    %v2953 = vpop.f32.mrb[0].mxu0
    %2954 = vmatprep.mubr.f32.mxu0 0.0
    %2955 = vmatmul.mubr.f32.gmra.mrb[0].mxu0 %v2883
    %v2956 = vpop.f32.mrb[0].mxu0
    %v2957 = vadd.f32 0.0, %v2956
    %v2958 = vpop.f32.mrb[0].mxu0
    %2959 = vdwg.mxu0
    %v2961 = vsel %vm2621, %v2786, 0
    %v2964 = vsel %vm2621, %v2787, 0
    %2966 = vmatprep.subr.mxu0 0.0
    %2967 = vmatpush1.msra.mxu0 %v1718
    %2968 = vmatprep.subr.mxu0 0.0
    %2969 = vmatpush1.msra.mxu0 %v1786
    %2970 = vmatprep.subr.mxu0 0.0
    %2971 = vmatpush1.msra.mxu0 0.0
    %2972 = vmatprep.subr.mxu0 0.0
    %2973 = vmatpush1.msra.mxu0 0.0
    %2974 = vmatprep.subr.mxu0 0.0
    %2975 = vmatpush1.msra.mxu0 0.0
    %2976 = vmatprep.subr.mxu0 0.0
    %2977 = vmatpush1.msra.mxu0 0.0
    %2978 = vmatprep.subr.mxu0 0.0
    %2979 = vmatpush1.msra.mxu0 0.0
    %2980 = vmatprep.subr.mxu0 0.0
    %2981 = vmatpush1.msra.mxu0 0.0
    %2982 = vmatprep.subr.mxu0 0.0
    %2983 = vmatpush1.msra.mxu0 0.0
    %2984 = vmatprep.subr.mxu0 0.0
    %2985 = vmatpush1.msra.mxu0 0.0
    %2986 = vmatprep.subr.mxu0 0.0
    %2987 = vmatpush1.msra.mxu0 0.0
    %2988 = vmatprep.subr.mxu0 0.0
    %2989 = vmatpush1.msra.mxu0 0.0
    %2990 = vmatprep.subr.mxu0 0.0
    %2991 = vmatpush1.msra.mxu0 0.0
    %2992 = vmatprep.subr.mxu0 0.0
    %2993 = vmatpush1.msra.mxu0 0.0
    %2994 = vmatprep.subr.mxu0 0.0
    %2995 = vmatpush1.msra.mxu0 0.0
    %2996 = vmatprep.subr.mxu0 0.0
    %2997 = vmatpush1.msra.mxu0 0.0
    %2998 = vmatprep.subr.mxu0 0.0
    %2999 = vmatpush1.msra.mxu0 0.0
    %3000 = vmatprep.subr.mxu0 0.0
    %3001 = vmatpush1.msra.mxu0 0.0
    %3002 = vmatprep.subr.mxu0 0.0
    %3003 = vmatpush1.msra.mxu0 0.0
    %3004 = vmatprep.subr.mxu0 0.0
    %3005 = vmatpush1.msra.mxu0 0.0
    %3006 = vmatprep.subr.mxu0 0.0
    %3007 = vmatpush1.msra.mxu0 0.0
    %3008 = vmatprep.subr.mxu0 0.0
    %3009 = vmatpush1.msra.mxu0 0.0
    %3010 = vmatprep.subr.mxu0 0.0
    %3011 = vmatpush1.msra.mxu0 0.0
    %3012 = vmatprep.subr.mxu0 0.0
    %3013 = vmatpush1.msra.mxu0 0.0
    %3014 = vmatprep.subr.mxu0 0.0
    %3015 = vmatpush1.msra.mxu0 0.0
    %3016 = vmatprep.subr.mxu0 0.0
    %3017 = vmatpush1.msra.mxu0 0.0
    %3018 = vmatprep.subr.mxu0 0.0
    %3019 = vmatpush1.msra.mxu0 0.0
    %3020 = vmatprep.subr.mxu0 0.0
    %3021 = vmatpush1.msra.mxu0 0.0
    %3022 = vmatprep.subr.mxu0 0.0
    %3023 = vmatpush1.msra.mxu0 0.0
    %3024 = vmatprep.subr.mxu0 0.0
    %3025 = vmatpush1.msra.mxu0 0.0
    %3026 = vmatprep.subr.mxu0 0.0
    %3027 = vmatpush1.msra.mxu0 0.0
    %3028 = vmatprep.subr.mxu0 0.0
    %3029 = vmatpush1.msra.mxu0 0.0
    %3030 = vmatprep.mubr.f32.mxu0 0.0
    %3031 = vmatmul.mubr.f32.gmra.mrb[0].mxu0 %v2961
    %v3032 = vpop.f32.mrb[0].mxu0
    %v3033 = vadd.f32 0.0, %v3032
    %v3034 = vpop.f32.mrb[0].mxu0
    %3035 = vmatprep.mubr.f32.mxu0 0.0
    %3036 = vmatmul.mubr.f32.gmra.mrb[0].mxu0 %v2964
    %v3037 = vpop.f32.mrb[0].mxu0
    %v3038 = vadd.f32 0.0, %v3037
    %v3039 = vpop.f32.mrb[0].mxu0
    %3040 = vdwg.mxu0
    %v3042 = vsel %vm2621, %v2788, 0
    %v3045 = vsel %vm2621, %v2789, 0
    %3047 = vmatprep.subr.mxu0 0.0
    %3048 = vmatpush1.msra.mxu0 %v1719
    %3049 = vmatprep.subr.mxu0 0.0
    %3050 = vmatpush1.msra.mxu0 %v1787
    %3051 = vmatprep.subr.mxu0 0.0
    %3052 = vmatpush1.msra.mxu0 0.0
    %3053 = vmatprep.subr.mxu0 0.0
    %3054 = vmatpush1.msra.mxu0 0.0
    %3055 = vmatprep.subr.mxu0 0.0
    %3056 = vmatpush1.msra.mxu0 0.0
    %3057 = vmatprep.subr.mxu0 0.0
    %3058 = vmatpush1.msra.mxu0 0.0
    %3059 = vmatprep.subr.mxu0 0.0
    %3060 = vmatpush1.msra.mxu0 0.0
    %3061 = vmatprep.subr.mxu0 0.0
    %3062 = vmatpush1.msra.mxu0 0.0
    %3063 = vmatprep.subr.mxu0 0.0
    %3064 = vmatpush1.msra.mxu0 0.0
    %3065 = vmatprep.subr.mxu0 0.0
    %3066 = vmatpush1.msra.mxu0 0.0
    %3067 = vmatprep.subr.mxu0 0.0
    %3068 = vmatpush1.msra.mxu0 0.0
    %3069 = vmatprep.subr.mxu0 0.0
    %3070 = vmatpush1.msra.mxu0 0.0
    %3071 = vmatprep.subr.mxu0 0.0
    %3072 = vmatpush1.msra.mxu0 0.0
    %3073 = vmatprep.subr.mxu0 0.0
    %3074 = vmatpush1.msra.mxu0 0.0
    %3075 = vmatprep.subr.mxu0 0.0
    %3076 = vmatpush1.msra.mxu0 0.0
    %3077 = vmatprep.subr.mxu0 0.0
    %3078 = vmatpush1.msra.mxu0 0.0
    %3079 = vmatprep.subr.mxu0 0.0
    %3080 = vmatpush1.msra.mxu0 0.0
    %3081 = vmatprep.subr.mxu0 0.0
    %3082 = vmatpush1.msra.mxu0 0.0
    %3083 = vmatprep.subr.mxu0 0.0
    %3084 = vmatpush1.msra.mxu0 0.0
    %3085 = vmatprep.subr.mxu0 0.0
    %3086 = vmatpush1.msra.mxu0 0.0
    %3087 = vmatprep.subr.mxu0 0.0
    %3088 = vmatpush1.msra.mxu0 0.0
    %3089 = vmatprep.subr.mxu0 0.0
    %3090 = vmatpush1.msra.mxu0 0.0
    %3091 = vmatprep.subr.mxu0 0.0
    %3092 = vmatpush1.msra.mxu0 0.0
    %3093 = vmatprep.subr.mxu0 0.0
    %3094 = vmatpush1.msra.mxu0 0.0
    %3095 = vmatprep.subr.mxu0 0.0
    %3096 = vmatpush1.msra.mxu0 0.0
    %3097 = vmatprep.subr.mxu0 0.0
    %3098 = vmatpush1.msra.mxu0 0.0
    %3099 = vmatprep.subr.mxu0 0.0
    %3100 = vmatpush1.msra.mxu0 0.0
    %3101 = vmatprep.subr.mxu0 0.0
    %3102 = vmatpush1.msra.mxu0 0.0
    %3103 = vmatprep.subr.mxu0 0.0
    %3104 = vmatpush1.msra.mxu0 0.0
    %3105 = vmatprep.subr.mxu0 0.0
    %3106 = vmatpush1.msra.mxu0 0.0
    %3107 = vmatprep.subr.mxu0 0.0
    %3108 = vmatpush1.msra.mxu0 0.0
    %3109 = vmatprep.subr.mxu0 0.0
    %3110 = vmatpush1.msra.mxu0 0.0
    %3111 = vmatprep.mubr.f32.mxu0 0.0
    %3112 = vmatmul.mubr.f32.gmra.mrb[0].mxu0 %v3042
    %v3113 = vpop.f32.mrb[0].mxu0
    %v3114 = vadd.f32 0.0, %v3113
    %v3115 = vpop.f32.mrb[0].mxu0
    %3116 = vmatprep.mubr.f32.mxu0 0.0
    %3117 = vmatmul.mubr.f32.gmra.mrb[0].mxu0 %v3045
    %v3118 = vpop.f32.mrb[0].mxu0
    %v3119 = vadd.f32 0.0, %v3118
    %v3120 = vpop.f32.mrb[0].mxu0
    %3121 = vdwg.mxu0
    %v3123 = vsel %vm2621, %v2790, 0
    %v3126 = vsel %vm2621, %v2791, 0
    %3128 = vmatprep.subr.mxu0 0.0
    %3129 = vmatpush1.msra.mxu0 %v1852
    %3130 = vmatprep.subr.mxu0 0.0
    %3131 = vmatpush1.msra.mxu0 %v1920
    %3132 = vmatprep.subr.mxu0 0.0
    %3133 = vmatpush1.msra.mxu0 0.0
    %3134 = vmatprep.subr.mxu0 0.0
    %3135 = vmatpush1.msra.mxu0 0.0
    %3136 = vmatprep.subr.mxu0 0.0
    %3137 = vmatpush1.msra.mxu0 0.0
    %3138 = vmatprep.subr.mxu0 0.0
    %3139 = vmatpush1.msra.mxu0 0.0
    %3140 = vmatprep.subr.mxu0 0.0
    %3141 = vmatpush1.msra.mxu0 0.0
    %3142 = vmatprep.subr.mxu0 0.0
    %3143 = vmatpush1.msra.mxu0 0.0
    %3144 = vmatprep.subr.mxu0 0.0
    %3145 = vmatpush1.msra.mxu0 0.0
    %3146 = vmatprep.subr.mxu0 0.0
    %3147 = vmatpush1.msra.mxu0 0.0
    %3148 = vmatprep.subr.mxu0 0.0
    %3149 = vmatpush1.msra.mxu0 0.0
    %3150 = vmatprep.subr.mxu0 0.0
    %3151 = vmatpush1.msra.mxu0 0.0
    %3152 = vmatprep.subr.mxu0 0.0
    %3153 = vmatpush1.msra.mxu0 0.0
    %3154 = vmatprep.subr.mxu0 0.0
    %3155 = vmatpush1.msra.mxu0 0.0
    %3156 = vmatprep.subr.mxu0 0.0
    %3157 = vmatpush1.msra.mxu0 0.0
    %3158 = vmatprep.subr.mxu0 0.0
    %3159 = vmatpush1.msra.mxu0 0.0
    %3160 = vmatprep.subr.mxu0 0.0
    %3161 = vmatpush1.msra.mxu0 0.0
    %3162 = vmatprep.subr.mxu0 0.0
    %3163 = vmatpush1.msra.mxu0 0.0
    %3164 = vmatprep.subr.mxu0 0.0
    %3165 = vmatpush1.msra.mxu0 0.0
    %3166 = vmatprep.subr.mxu0 0.0
    %3167 = vmatpush1.msra.mxu0 0.0
    %3168 = vmatprep.subr.mxu0 0.0
    %3169 = vmatpush1.msra.mxu0 0.0
    %3170 = vmatprep.subr.mxu0 0.0
    %3171 = vmatpush1.msra.mxu0 0.0
    %3172 = vmatprep.subr.mxu0 0.0
    %3173 = vmatpush1.msra.mxu0 0.0
    %3174 = vmatprep.subr.mxu0 0.0
    %3175 = vmatpush1.msra.mxu0 0.0
    %3176 = vmatprep.subr.mxu0 0.0
    %3177 = vmatpush1.msra.mxu0 0.0
    %3178 = vmatprep.subr.mxu0 0.0
    %3179 = vmatpush1.msra.mxu0 0.0
    %3180 = vmatprep.subr.mxu0 0.0
    %3181 = vmatpush1.msra.mxu0 0.0
    %3182 = vmatprep.subr.mxu0 0.0
    %3183 = vmatpush1.msra.mxu0 0.0
    %3184 = vmatprep.subr.mxu0 0.0
    %3185 = vmatpush1.msra.mxu0 0.0
    %3186 = vmatprep.subr.mxu0 0.0
    %3187 = vmatpush1.msra.mxu0 0.0
    %3188 = vmatprep.subr.mxu0 0.0
    %3189 = vmatpush1.msra.mxu0 0.0
    %3190 = vmatprep.subr.mxu0 0.0
    %3191 = vmatpush1.msra.mxu0 0.0
    %3192 = vmatprep.mubr.f32.mxu0 0.0
    %3193 = vmatmul.mubr.f32.gmra.mrb[0].mxu0 %v3123
    %v3194 = vpop.f32.mrb[0].mxu0
    %v3195 = vadd.f32 0.0, %v3194
    %v3196 = vpop.f32.mrb[0].mxu0
    %3197 = vmatprep.mubr.f32.mxu0 0.0
    %3198 = vmatmul.mubr.f32.gmra.mrb[0].mxu0 %v3126
    %v3199 = vpop.f32.mrb[0].mxu0
    %v3200 = vadd.f32 0.0, %v3199
    %v3201 = vpop.f32.mrb[0].mxu0
    %3202 = vdwg.mxu0
    %v3204 = vsel %vm2621, %v2792, 0
    %v3207 = vsel %vm2621, %v2793, 0
    %3209 = vmatprep.subr.mxu0 0.0
    %3210 = vmatpush1.msra.mxu0 %v1853
    %3211 = vmatprep.subr.mxu0 0.0
    %3212 = vmatpush1.msra.mxu0 %v1921
    %3213 = vmatprep.subr.mxu0 0.0
    %3214 = vmatpush1.msra.mxu0 0.0
    %3215 = vmatprep.subr.mxu0 0.0
    %3216 = vmatpush1.msra.mxu0 0.0
    %3217 = vmatprep.subr.mxu0 0.0
    %3218 = vmatpush1.msra.mxu0 0.0
    %3219 = vmatprep.subr.mxu0 0.0
    %3220 = vmatpush1.msra.mxu0 0.0
    %3221 = vmatprep.subr.mxu0 0.0
    %3222 = vmatpush1.msra.mxu0 0.0
    %3223 = vmatprep.subr.mxu0 0.0
    %3224 = vmatpush1.msra.mxu0 0.0
    %3225 = vmatprep.subr.mxu0 0.0
    %3226 = vmatpush1.msra.mxu0 0.0
    %3227 = vmatprep.subr.mxu0 0.0
    %3228 = vmatpush1.msra.mxu0 0.0
    %3229 = vmatprep.subr.mxu0 0.0
    %3230 = vmatpush1.msra.mxu0 0.0
    %3231 = vmatprep.subr.mxu0 0.0
    %3232 = vmatpush1.msra.mxu0 0.0
    %3233 = vmatprep.subr.mxu0 0.0
    %3234 = vmatpush1.msra.mxu0 0.0
    %3235 = vmatprep.subr.mxu0 0.0
    %3236 = vmatpush1.msra.mxu0 0.0
    %3237 = vmatprep.subr.mxu0 0.0
    %3238 = vmatpush1.msra.mxu0 0.0
    %3239 = vmatprep.subr.mxu0 0.0
    %3240 = vmatpush1.msra.mxu0 0.0
    %3241 = vmatprep.subr.mxu0 0.0
    %3242 = vmatpush1.msra.mxu0 0.0
    %3243 = vmatprep.subr.mxu0 0.0
    %3244 = vmatpush1.msra.mxu0 0.0
    %3245 = vmatprep.subr.mxu0 0.0
    %3246 = vmatpush1.msra.mxu0 0.0
    %3247 = vmatprep.subr.mxu0 0.0
    %3248 = vmatpush1.msra.mxu0 0.0
    %3249 = vmatprep.subr.mxu0 0.0
    %3250 = vmatpush1.msra.mxu0 0.0
    %3251 = vmatprep.subr.mxu0 0.0
    %3252 = vmatpush1.msra.mxu0 0.0
    %3253 = vmatprep.subr.mxu0 0.0
    %3254 = vmatpush1.msra.mxu0 0.0
    %3255 = vmatprep.subr.mxu0 0.0
    %3256 = vmatpush1.msra.mxu0 0.0
    %3257 = vmatprep.subr.mxu0 0.0
    %3258 = vmatpush1.msra.mxu0 0.0
    %3259 = vmatprep.subr.mxu0 0.0
    %3260 = vmatpush1.msra.mxu0 0.0
    %3261 = vmatprep.subr.mxu0 0.0
    %3262 = vmatpush1.msra.mxu0 0.0
    %3263 = vmatprep.subr.mxu0 0.0
    %3264 = vmatpush1.msra.mxu0 0.0
    %3265 = vmatprep.subr.mxu0 0.0
    %3266 = vmatpush1.msra.mxu0 0.0
    %3267 = vmatprep.subr.mxu0 0.0
    %3268 = vmatpush1.msra.mxu0 0.0
    %3269 = vmatprep.subr.mxu0 0.0
    %3270 = vmatpush1.msra.mxu0 0.0
    %3271 = vmatprep.subr.mxu0 0.0
    %3272 = vmatpush1.msra.mxu0 0.0
    %3273 = vmatprep.mubr.f32.mxu0 0.0
    %3274 = vmatmul.mubr.f32.gmra.mrb[0].mxu0 %v3204
    %v3275 = vpop.f32.mrb[0].mxu0
    %v3276 = vadd.f32 0.0, %v3275
    %v3277 = vpop.f32.mrb[0].mxu0
    %3278 = vmatprep.mubr.f32.mxu0 0.0
    %3279 = vmatmul.mubr.f32.gmra.mrb[0].mxu0 %v3207
    %v3280 = vpop.f32.mrb[0].mxu0
    %v3281 = vadd.f32 0.0, %v3280
    %v3282 = vpop.f32.mrb[0].mxu0
    %3283 = vdwg.mxu0
    %v3285 = vsel %vm2621, %v2794, 0
    %v3288 = vsel %vm2621, %v2795, 0
    %3290 = vmatprep.subr.mxu0 0.0
    %3291 = vmatpush1.msra.mxu0 %v1854
    %3292 = vmatprep.subr.mxu0 0.0
    %3293 = vmatpush1.msra.mxu0 %v1922
    %3294 = vmatprep.subr.mxu0 0.0
    %3295 = vmatpush1.msra.mxu0 0.0
    %3296 = vmatprep.subr.mxu0 0.0
    %3297 = vmatpush1.msra.mxu0 0.0
    %3298 = vmatprep.subr.mxu0 0.0
    %3299 = vmatpush1.msra.mxu0 0.0
    %3300 = vmatprep.subr.mxu0 0.0
    %3301 = vmatpush1.msra.mxu0 0.0
    %3302 = vmatprep.subr.mxu0 0.0
    %3303 = vmatpush1.msra.mxu0 0.0
    %3304 = vmatprep.subr.mxu0 0.0
    %3305 = vmatpush1.msra.mxu0 0.0
    %3306 = vmatprep.subr.mxu0 0.0
    %3307 = vmatpush1.msra.mxu0 0.0
    %3308 = vmatprep.subr.mxu0 0.0
    %3309 = vmatpush1.msra.mxu0 0.0
    %3310 = vmatprep.subr.mxu0 0.0
    %3311 = vmatpush1.msra.mxu0 0.0
    %3312 = vmatprep.subr.mxu0 0.0
    %3313 = vmatpush1.msra.mxu0 0.0
    %3314 = vmatprep.subr.mxu0 0.0
    %3315 = vmatpush1.msra.mxu0 0.0
    %3316 = vmatprep.subr.mxu0 0.0
    %3317 = vmatpush1.msra.mxu0 0.0
    %3318 = vmatprep.subr.mxu0 0.0
    %3319 = vmatpush1.msra.mxu0 0.0
    %3320 = vmatprep.subr.mxu0 0.0
    %3321 = vmatpush1.msra.mxu0 0.0
    %3322 = vmatprep.subr.mxu0 0.0
    %3323 = vmatpush1.msra.mxu0 0.0
    %3324 = vmatprep.subr.mxu0 0.0
    %3325 = vmatpush1.msra.mxu0 0.0
    %3326 = vmatprep.subr.mxu0 0.0
    %3327 = vmatpush1.msra.mxu0 0.0
    %3328 = vmatprep.subr.mxu0 0.0
    %3329 = vmatpush1.msra.mxu0 0.0
    %3330 = vmatprep.subr.mxu0 0.0
    %3331 = vmatpush1.msra.mxu0 0.0
    %3332 = vmatprep.subr.mxu0 0.0
    %3333 = vmatpush1.msra.mxu0 0.0
    %3334 = vmatprep.subr.mxu0 0.0
    %3335 = vmatpush1.msra.mxu0 0.0
    %3336 = vmatprep.subr.mxu0 0.0
    %3337 = vmatpush1.msra.mxu0 0.0
    %3338 = vmatprep.subr.mxu0 0.0
    %3339 = vmatpush1.msra.mxu0 0.0
    %3340 = vmatprep.subr.mxu0 0.0
    %3341 = vmatpush1.msra.mxu0 0.0
    %3342 = vmatprep.subr.mxu0 0.0
    %3343 = vmatpush1.msra.mxu0 0.0
    %3344 = vmatprep.subr.mxu0 0.0
    %3345 = vmatpush1.msra.mxu0 0.0
    %3346 = vmatprep.subr.mxu0 0.0
    %3347 = vmatpush1.msra.mxu0 0.0
    %3348 = vmatprep.subr.mxu0 0.0
    %3349 = vmatpush1.msra.mxu0 0.0
    %3350 = vmatprep.subr.mxu0 0.0
    %3351 = vmatpush1.msra.mxu0 0.0
    %3352 = vmatprep.subr.mxu0 0.0
    %3353 = vmatpush1.msra.mxu0 0.0
    %3354 = vmatprep.mubr.f32.mxu0 0.0
    %3355 = vmatmul.mubr.f32.gmra.mrb[0].mxu0 %v3285
    %v3356 = vpop.f32.mrb[0].mxu0
    %v3357 = vadd.f32 0.0, %v3356
    %v3358 = vpop.f32.mrb[0].mxu0
    %3359 = vmatprep.mubr.f32.mxu0 0.0
    %3360 = vmatmul.mubr.f32.gmra.mrb[0].mxu0 %v3288
    %v3361 = vpop.f32.mrb[0].mxu0
    %v3362 = vadd.f32 0.0, %v3361
    %v3363 = vpop.f32.mrb[0].mxu0
    %3364 = vdwg.mxu0
    %v3366 = vsel %vm2621, %v2796, 0
    %v3369 = vsel %vm2621, %v2797, 0
    %3371 = vmatprep.subr.mxu0 0.0
    %3372 = vmatpush1.msra.mxu0 %v1855
    %3373 = vmatprep.subr.mxu0 0.0
    %3374 = vmatpush1.msra.mxu0 %v1923
    %3375 = vmatprep.subr.mxu0 0.0
    %3376 = vmatpush1.msra.mxu0 0.0
    %3377 = vmatprep.subr.mxu0 0.0
    %3378 = vmatpush1.msra.mxu0 0.0
    %3379 = vmatprep.subr.mxu0 0.0
    %3380 = vmatpush1.msra.mxu0 0.0
    %3381 = vmatprep.subr.mxu0 0.0
    %3382 = vmatpush1.msra.mxu0 0.0
    %3383 = vmatprep.subr.mxu0 0.0
    %3384 = vmatpush1.msra.mxu0 0.0
    %3385 = vmatprep.subr.mxu0 0.0
    %3386 = vmatpush1.msra.mxu0 0.0
    %3387 = vmatprep.subr.mxu0 0.0
    %3388 = vmatpush1.msra.mxu0 0.0
    %3389 = vmatprep.subr.mxu0 0.0
    %3390 = vmatpush1.msra.mxu0 0.0
    %3391 = vmatprep.subr.mxu0 0.0
    %3392 = vmatpush1.msra.mxu0 0.0
    %3393 = vmatprep.subr.mxu0 0.0
    %3394 = vmatpush1.msra.mxu0 0.0
    %3395 = vmatprep.subr.mxu0 0.0
    %3396 = vmatpush1.msra.mxu0 0.0
    %3397 = vmatprep.subr.mxu0 0.0
    %3398 = vmatpush1.msra.mxu0 0.0
    %3399 = vmatprep.subr.mxu0 0.0
    %3400 = vmatpush1.msra.mxu0 0.0
    %3401 = vmatprep.subr.mxu0 0.0
    %3402 = vmatpush1.msra.mxu0 0.0
    %3403 = vmatprep.subr.mxu0 0.0
    %3404 = vmatpush1.msra.mxu0 0.0
    %3405 = vmatprep.subr.mxu0 0.0
    %3406 = vmatpush1.msra.mxu0 0.0
    %3407 = vmatprep.subr.mxu0 0.0
    %3408 = vmatpush1.msra.mxu0 0.0
    %3409 = vmatprep.subr.mxu0 0.0
    %3410 = vmatpush1.msra.mxu0 0.0
    %3411 = vmatprep.subr.mxu0 0.0
    %3412 = vmatpush1.msra.mxu0 0.0
    %3413 = vmatprep.subr.mxu0 0.0
    %3414 = vmatpush1.msra.mxu0 0.0
    %3415 = vmatprep.subr.mxu0 0.0
    %3416 = vmatpush1.msra.mxu0 0.0
    %3417 = vmatprep.subr.mxu0 0.0
    %3418 = vmatpush1.msra.mxu0 0.0
    %3419 = vmatprep.subr.mxu0 0.0
    %3420 = vmatpush1.msra.mxu0 0.0
    %3421 = vmatprep.subr.mxu0 0.0
    %3422 = vmatpush1.msra.mxu0 0.0
    %3423 = vmatprep.subr.mxu0 0.0
    %3424 = vmatpush1.msra.mxu0 0.0
    %3425 = vmatprep.subr.mxu0 0.0
    %3426 = vmatpush1.msra.mxu0 0.0
    %3427 = vmatprep.subr.mxu0 0.0
    %3428 = vmatpush1.msra.mxu0 0.0
    %3429 = vmatprep.subr.mxu0 0.0
    %3430 = vmatpush1.msra.mxu0 0.0
    %3431 = vmatprep.subr.mxu0 0.0
    %3432 = vmatpush1.msra.mxu0 0.0
    %3433 = vmatprep.subr.mxu0 0.0
    %3434 = vmatpush1.msra.mxu0 0.0
    %3435 = vmatprep.mubr.f32.mxu0 0.0
    %3436 = vmatmul.mubr.f32.gmra.mrb[0].mxu0 %v3366
    %v3437 = vpop.f32.mrb[0].mxu0
    %v3438 = vadd.f32 0.0, %v3437
    %v3439 = vpop.f32.mrb[0].mxu0
    %3440 = vmatprep.mubr.f32.mxu0 0.0
    %3441 = vmatmul.mubr.f32.gmra.mrb[0].mxu0 %v3369
    %v3442 = vpop.f32.mrb[0].mxu0
    %v3443 = vadd.f32 0.0, %v3442
    %v3444 = vpop.f32.mrb[0].mxu0
    %3445 = vdwg.mxu0
    %v3446 = vcombine.low %v2871, %v3033
    %v3447 = vcombine.high %v2871, %v3033
    %v3449 = vunpack.c.l.s4 1983009808
    %v3450 = vunpack.c.0.s8 %v3449
    %v3451 = vlaneseq
    %v3452 = vshrl.u32 %v3451, 7
    %v3453 = vsub.s32 %v3450, %v3452
    %v3454 = vrot.slane %v3446, %v3453
    %v3456 = vunpack.c.l.s4 1983009808
    %v3457 = vunpack.c.0.s8 %v3456
    %v3458 = vlaneseq
    %v3459 = vshrl.u32 %v3458, 7
    %v3460 = vsub.s32 %v3457, %v3459
    %v3461 = vrot.slane %v3447, %v3460
    %v3462 = vcombine.low %v2952, %v3114
    %v3463 = vcombine.high %v2952, %v3114
    %v3465 = vunpack.c.l.s4 1983009808
    %v3466 = vunpack.c.0.s8 %v3465
    %v3467 = vlaneseq
    %v3468 = vshrl.u32 %v3467, 7
    %v3469 = vsub.s32 %v3466, %v3468
    %v3470 = vrot.slane %v3462, %v3469
    %v3472 = vunpack.c.l.s4 1983009808
    %v3473 = vunpack.c.0.s8 %v3472
    %v3474 = vlaneseq
    %v3475 = vshrl.u32 %v3474, 7
    %v3476 = vsub.s32 %v3473, %v3475
    %v3477 = vrot.slane %v3463, %v3476
    %v3478 = vcombine.low %v3454, %v3470
    %v3479 = vcombine.high %v3454, %v3470
    %v3481 = vunpack.c.l.s4 1934713408
    %v3482 = vunpack.c.0.s8 %v3481
    %v3483 = vlaneseq
    %v3484 = vshrl.u32 %v3483, 7
    %v3485 = vsub.s32 %v3482, %v3484
    %v3486 = vrot.slane %v3478, %v3485
    %v3488 = vunpack.c.l.s4 1934713408
    %v3489 = vunpack.c.0.s8 %v3488
    %v3490 = vlaneseq
    %v3491 = vshrl.u32 %v3490, 7
    %v3492 = vsub.s32 %v3489, %v3491
    %v3493 = vrot.slane %v3479, %v3492
    %v3494 = vcombine.low %v3461, %v3477
    %v3495 = vcombine.high %v3461, %v3477
    %v3497 = vunpack.c.l.s4 1934713408
    %v3498 = vunpack.c.0.s8 %v3497
    %v3499 = vlaneseq
    %v3500 = vshrl.u32 %v3499, 7
    %v3501 = vsub.s32 %v3498, %v3500
    %v3502 = vrot.slane %v3494, %v3501
    %v3504 = vunpack.c.l.s4 1934713408
    %v3505 = vunpack.c.0.s8 %v3504
    %v3506 = vlaneseq
    %v3507 = vshrl.u32 %v3506, 7
    %v3508 = vsub.s32 %v3505, %v3507
    %v3509 = vrot.slane %v3495, %v3508
    %v3510 = vcombine.high %v3486, 0.0
    %v3511 = vcombine.high %v3493, 0.0
    %v3512 = vcombine.high %v3502, 0.0
    %v3513 = vcombine.high %v3509, 0.0
    %v3514 = vcombine.low %v2876, %v3038
    %v3515 = vcombine.high %v2876, %v3038
    %v3517 = vunpack.c.l.s4 1983009808
    %v3518 = vunpack.c.0.s8 %v3517
    %v3519 = vlaneseq
    %v3520 = vshrl.u32 %v3519, 7
    %v3521 = vsub.s32 %v3518, %v3520
    %v3522 = vrot.slane %v3514, %v3521
    %v3524 = vunpack.c.l.s4 1983009808
    %v3525 = vunpack.c.0.s8 %v3524
    %v3526 = vlaneseq
    %v3527 = vshrl.u32 %v3526, 7
    %v3528 = vsub.s32 %v3525, %v3527
    %v3529 = vrot.slane %v3515, %v3528
    %v3530 = vcombine.low %v2957, %v3119
    %v3531 = vcombine.high %v2957, %v3119
    %v3533 = vunpack.c.l.s4 1983009808
    %v3534 = vunpack.c.0.s8 %v3533
    %v3535 = vlaneseq
    %v3536 = vshrl.u32 %v3535, 7
    %v3537 = vsub.s32 %v3534, %v3536
    %v3538 = vrot.slane %v3530, %v3537
    %v3540 = vunpack.c.l.s4 1983009808
    %v3541 = vunpack.c.0.s8 %v3540
    %v3542 = vlaneseq
    %v3543 = vshrl.u32 %v3542, 7
    %v3544 = vsub.s32 %v3541, %v3543
    %v3545 = vrot.slane %v3531, %v3544
    %v3546 = vcombine.low %v3522, %v3538
    %v3547 = vcombine.high %v3522, %v3538
    %v3549 = vunpack.c.l.s4 1934713408
    %v3550 = vunpack.c.0.s8 %v3549
    %v3551 = vlaneseq
    %v3552 = vshrl.u32 %v3551, 7
    %v3553 = vsub.s32 %v3550, %v3552
    %v3554 = vrot.slane %v3546, %v3553
    %v3556 = vunpack.c.l.s4 1934713408
    %v3557 = vunpack.c.0.s8 %v3556
    %v3558 = vlaneseq
    %v3559 = vshrl.u32 %v3558, 7
    %v3560 = vsub.s32 %v3557, %v3559
    %v3561 = vrot.slane %v3547, %v3560
    %v3562 = vcombine.low %v3529, %v3545
    %v3563 = vcombine.high %v3529, %v3545
    %v3565 = vunpack.c.l.s4 1934713408
    %v3566 = vunpack.c.0.s8 %v3565
    %v3567 = vlaneseq
    %v3568 = vshrl.u32 %v3567, 7
    %v3569 = vsub.s32 %v3566, %v3568
    %v3570 = vrot.slane %v3562, %v3569
    %v3572 = vunpack.c.l.s4 1934713408
    %v3573 = vunpack.c.0.s8 %v3572
    %v3574 = vlaneseq
    %v3575 = vshrl.u32 %v3574, 7
    %v3576 = vsub.s32 %v3573, %v3575
    %v3577 = vrot.slane %v3563, %v3576
    %v3578 = vcombine.high %v3554, 0.0
    %v3579 = vcombine.high %v3561, 0.0
    %v3580 = vcombine.high %v3570, 0.0
    %v3581 = vcombine.high %v3577, 0.0
    %v3582 = vcombine.low %v3195, %v3357
    %v3583 = vcombine.high %v3195, %v3357
    %v3585 = vunpack.c.l.s4 1983009808
    %v3586 = vunpack.c.0.s8 %v3585
    %v3587 = vlaneseq
    %v3588 = vshrl.u32 %v3587, 7
    %v3589 = vsub.s32 %v3586, %v3588
    %v3590 = vrot.slane %v3582, %v3589
    %v3592 = vunpack.c.l.s4 1983009808
    %v3593 = vunpack.c.0.s8 %v3592
    %v3594 = vlaneseq
    %v3595 = vshrl.u32 %v3594, 7
    %v3596 = vsub.s32 %v3593, %v3595
    %v3597 = vrot.slane %v3583, %v3596
    %v3598 = vcombine.low %v3276, %v3438
    %v3599 = vcombine.high %v3276, %v3438
    %v3601 = vunpack.c.l.s4 1983009808
    %v3602 = vunpack.c.0.s8 %v3601
    %v3603 = vlaneseq
    %v3604 = vshrl.u32 %v3603, 7
    %v3605 = vsub.s32 %v3602, %v3604
    %v3606 = vrot.slane %v3598, %v3605
    %v3608 = vunpack.c.l.s4 1983009808
    %v3609 = vunpack.c.0.s8 %v3608
    %v3610 = vlaneseq
    %v3611 = vshrl.u32 %v3610, 7
    %v3612 = vsub.s32 %v3609, %v3611
    %v3613 = vrot.slane %v3599, %v3612
    %v3614 = vcombine.low %v3590, %v3606
    %v3615 = vcombine.high %v3590, %v3606
    %v3617 = vunpack.c.l.s4 1934713408
    %v3618 = vunpack.c.0.s8 %v3617
    %v3619 = vlaneseq
    %v3620 = vshrl.u32 %v3619, 7
    %v3621 = vsub.s32 %v3618, %v3620
    %v3622 = vrot.slane %v3614, %v3621
    %v3624 = vunpack.c.l.s4 1934713408
    %v3625 = vunpack.c.0.s8 %v3624
    %v3626 = vlaneseq
    %v3627 = vshrl.u32 %v3626, 7
    %v3628 = vsub.s32 %v3625, %v3627
    %v3629 = vrot.slane %v3615, %v3628
    %v3630 = vcombine.low %v3597, %v3613
    %v3631 = vcombine.high %v3597, %v3613
    %v3633 = vunpack.c.l.s4 1934713408
    %v3634 = vunpack.c.0.s8 %v3633
    %v3635 = vlaneseq
    %v3636 = vshrl.u32 %v3635, 7
    %v3637 = vsub.s32 %v3634, %v3636
    %v3638 = vrot.slane %v3630, %v3637
    %v3640 = vunpack.c.l.s4 1934713408
    %v3641 = vunpack.c.0.s8 %v3640
    %v3642 = vlaneseq
    %v3643 = vshrl.u32 %v3642, 7
    %v3644 = vsub.s32 %v3641, %v3643
    %v3645 = vrot.slane %v3631, %v3644
    %v3646 = vcombine.high %v3622, 0.0
    %v3647 = vcombine.high %v3629, 0.0
    %v3648 = vcombine.high %v3638, 0.0
    %v3649 = vcombine.high %v3645, 0.0
    %v3650 = vcombine.low %v3200, %v3362
    %v3651 = vcombine.high %v3200, %v3362
    %v3653 = vunpack.c.l.s4 1983009808
    %v3654 = vunpack.c.0.s8 %v3653
    %v3655 = vlaneseq
    %v3656 = vshrl.u32 %v3655, 7
    %v3657 = vsub.s32 %v3654, %v3656
    %v3658 = vrot.slane %v3650, %v3657
    %v3660 = vunpack.c.l.s4 1983009808
    %v3661 = vunpack.c.0.s8 %v3660
    %v3662 = vlaneseq
    %v3663 = vshrl.u32 %v3662, 7
    %v3664 = vsub.s32 %v3661, %v3663
    %v3665 = vrot.slane %v3651, %v3664
    %v3666 = vcombine.low %v3281, %v3443
    %v3667 = vcombine.high %v3281, %v3443
    %v3669 = vunpack.c.l.s4 1983009808
    %v3670 = vunpack.c.0.s8 %v3669
    %v3671 = vlaneseq
    %v3672 = vshrl.u32 %v3671, 7
    %v3673 = vsub.s32 %v3670, %v3672
    %v3674 = vrot.slane %v3666, %v3673
    %v3676 = vunpack.c.l.s4 1983009808
    %v3677 = vunpack.c.0.s8 %v3676
    %v3678 = vlaneseq
    %v3679 = vshrl.u32 %v3678, 7
    %v3680 = vsub.s32 %v3677, %v3679
    %v3681 = vrot.slane %v3667, %v3680
    %v3682 = vcombine.low %v3658, %v3674
    %v3683 = vcombine.high %v3658, %v3674
    %v3685 = vunpack.c.l.s4 1934713408
    %v3686 = vunpack.c.0.s8 %v3685
    %v3687 = vlaneseq
    %v3688 = vshrl.u32 %v3687, 7
    %v3689 = vsub.s32 %v3686, %v3688
    %v3690 = vrot.slane %v3682, %v3689
    %v3692 = vunpack.c.l.s4 1934713408
    %v3693 = vunpack.c.0.s8 %v3692
    %v3694 = vlaneseq
    %v3695 = vshrl.u32 %v3694, 7
    %v3696 = vsub.s32 %v3693, %v3695
    %v3697 = vrot.slane %v3683, %v3696
    %v3698 = vcombine.low %v3665, %v3681
    %v3699 = vcombine.high %v3665, %v3681
    %v3701 = vunpack.c.l.s4 1934713408
    %v3702 = vunpack.c.0.s8 %v3701
    %v3703 = vlaneseq
    %v3704 = vshrl.u32 %v3703, 7
    %v3705 = vsub.s32 %v3702, %v3704
    %v3706 = vrot.slane %v3698, %v3705
    %v3708 = vunpack.c.l.s4 1934713408
    %v3709 = vunpack.c.0.s8 %v3708
    %v3710 = vlaneseq
    %v3711 = vshrl.u32 %v3710, 7
    %v3712 = vsub.s32 %v3709, %v3711
    %v3713 = vrot.slane %v3699, %v3712
    %v3714 = vcombine.high %v3690, 0.0
    %v3715 = vcombine.high %v3697, 0.0
    %v3716 = vcombine.high %v3706, 0.0
    %v3717 = vcombine.high %v3713, 0.0
    %v3718 = vcombine.low %v3486, %v3493
    %v3720 = vunpack.c.l.s4 1983009808
    %v3721 = vunpack.c.0.s8 %v3720
    %v3722 = vlaneseq
    %v3723 = vshrl.u32 %v3722, 7
    %v3724 = vsub.s32 %v3721, %v3723
    %v3725 = vrot.slane %v3718, %v3724
    %v3726 = vcombine.low %v3510, %v3511
    %v3728 = vunpack.c.l.s4 1983009808
    %v3729 = vunpack.c.0.s8 %v3728
    %v3730 = vlaneseq
    %v3731 = vshrl.u32 %v3730, 7
    %v3732 = vsub.s32 %v3729, %v3731
    %v3733 = vrot.slane %v3726, %v3732
    %v3734 = vcombine.low %v3502, %v3509
    %v3736 = vunpack.c.l.s4 1983009808
    %v3737 = vunpack.c.0.s8 %v3736
    %v3738 = vlaneseq
    %v3739 = vshrl.u32 %v3738, 7
    %v3740 = vsub.s32 %v3737, %v3739
    %v3741 = vrot.slane %v3734, %v3740
    %v3742 = vcombine.low %v3512, %v3513
    %v3744 = vunpack.c.l.s4 1983009808
    %v3745 = vunpack.c.0.s8 %v3744
    %v3746 = vlaneseq
    %v3747 = vshrl.u32 %v3746, 7
    %v3748 = vsub.s32 %v3745, %v3747
    %v3749 = vrot.slane %v3742, %v3748
    %v3750 = vcombine.low %v3725, %v3733
    %v3751 = vcombine.high %v3725, %v3733
    %v3753 = vunpack.c.l.s4 1934713408
    %v3754 = vunpack.c.0.s8 %v3753
    %v3755 = vlaneseq
    %v3756 = vshrl.u32 %v3755, 7
    %v3757 = vsub.s32 %v3754, %v3756
    %v3758 = vrot.slane %v3750, %v3757
    %v3760 = vunpack.c.l.s4 1934713408
    %v3761 = vunpack.c.0.s8 %v3760
    %v3762 = vlaneseq
    %v3763 = vshrl.u32 %v3762, 7
    %v3764 = vsub.s32 %v3761, %v3763
    %v3765 = vrot.slane %v3751, %v3764
    %v3766 = vcombine.low %v3741, %v3749
    %v3767 = vcombine.high %v3741, %v3749
    %v3769 = vunpack.c.l.s4 1934713408
    %v3770 = vunpack.c.0.s8 %v3769
    %v3771 = vlaneseq
    %v3772 = vshrl.u32 %v3771, 7
    %v3773 = vsub.s32 %v3770, %v3772
    %v3774 = vrot.slane %v3766, %v3773
    %v3776 = vunpack.c.l.s4 1934713408
    %v3777 = vunpack.c.0.s8 %v3776
    %v3778 = vlaneseq
    %v3779 = vshrl.u32 %v3778, 7
    %v3780 = vsub.s32 %v3777, %v3779
    %v3781 = vrot.slane %v3767, %v3780
    %v3782 = vcombine.low %v3758, %v3774
    %v3783 = vcombine.high %v3758, %v3774
    %v3784 = vcombine.low %v3765, %v3781
    %v3785 = vcombine.high %v3765, %v3781
    %v3786 = vcombine.low %v3554, %v3561
    %v3788 = vunpack.c.l.s4 1983009808
    %v3789 = vunpack.c.0.s8 %v3788
    %v3790 = vlaneseq
    %v3791 = vshrl.u32 %v3790, 7
    %v3792 = vsub.s32 %v3789, %v3791
    %v3793 = vrot.slane %v3786, %v3792
    %v3794 = vcombine.low %v3578, %v3579
    %v3796 = vunpack.c.l.s4 1983009808
    %v3797 = vunpack.c.0.s8 %v3796
    %v3798 = vlaneseq
    %v3799 = vshrl.u32 %v3798, 7
    %v3800 = vsub.s32 %v3797, %v3799
    %v3801 = vrot.slane %v3794, %v3800
    %v3802 = vcombine.low %v3570, %v3577
    %v3804 = vunpack.c.l.s4 1983009808
    %v3805 = vunpack.c.0.s8 %v3804
    %v3806 = vlaneseq
    %v3807 = vshrl.u32 %v3806, 7
    %v3808 = vsub.s32 %v3805, %v3807
    %v3809 = vrot.slane %v3802, %v3808
    %v3810 = vcombine.low %v3580, %v3581
    %v3812 = vunpack.c.l.s4 1983009808
    %v3813 = vunpack.c.0.s8 %v3812
    %v3814 = vlaneseq
    %v3815 = vshrl.u32 %v3814, 7
    %v3816 = vsub.s32 %v3813, %v3815
    %v3817 = vrot.slane %v3810, %v3816
    %v3818 = vcombine.low %v3793, %v3801
    %v3819 = vcombine.high %v3793, %v3801
    %v3821 = vunpack.c.l.s4 1934713408
    %v3822 = vunpack.c.0.s8 %v3821
    %v3823 = vlaneseq
    %v3824 = vshrl.u32 %v3823, 7
    %v3825 = vsub.s32 %v3822, %v3824
    %v3826 = vrot.slane %v3818, %v3825
    %v3828 = vunpack.c.l.s4 1934713408
    %v3829 = vunpack.c.0.s8 %v3828
    %v3830 = vlaneseq
    %v3831 = vshrl.u32 %v3830, 7
    %v3832 = vsub.s32 %v3829, %v3831
    %v3833 = vrot.slane %v3819, %v3832
    %v3834 = vcombine.low %v3809, %v3817
    %v3835 = vcombine.high %v3809, %v3817
    %v3837 = vunpack.c.l.s4 1934713408
    %v3838 = vunpack.c.0.s8 %v3837
    %v3839 = vlaneseq
    %v3840 = vshrl.u32 %v3839, 7
    %v3841 = vsub.s32 %v3838, %v3840
    %v3842 = vrot.slane %v3834, %v3841
    %v3844 = vunpack.c.l.s4 1934713408
    %v3845 = vunpack.c.0.s8 %v3844
    %v3846 = vlaneseq
    %v3847 = vshrl.u32 %v3846, 7
    %v3848 = vsub.s32 %v3845, %v3847
    %v3849 = vrot.slane %v3835, %v3848
    %v3850 = vcombine.low %v3826, %v3842
    %v3851 = vcombine.high %v3826, %v3842
    %v3852 = vcombine.low %v3833, %v3849
    %v3853 = vcombine.high %v3833, %v3849
    %v3854 = vcombine.low %v3622, %v3629
    %v3856 = vunpack.c.l.s4 1983009808
    %v3857 = vunpack.c.0.s8 %v3856
    %v3858 = vlaneseq
    %v3859 = vshrl.u32 %v3858, 7
    %v3860 = vsub.s32 %v3857, %v3859
    %v3861 = vrot.slane %v3854, %v3860
    %v3862 = vcombine.low %v3646, %v3647
    %v3864 = vunpack.c.l.s4 1983009808
    %v3865 = vunpack.c.0.s8 %v3864
    %v3866 = vlaneseq
    %v3867 = vshrl.u32 %v3866, 7
    %v3868 = vsub.s32 %v3865, %v3867
    %v3869 = vrot.slane %v3862, %v3868
    %v3870 = vcombine.low %v3638, %v3645
    %v3872 = vunpack.c.l.s4 1983009808
    %v3873 = vunpack.c.0.s8 %v3872
    %v3874 = vlaneseq
    %v3875 = vshrl.u32 %v3874, 7
    %v3876 = vsub.s32 %v3873, %v3875
    %v3877 = vrot.slane %v3870, %v3876
    %v3878 = vcombine.low %v3648, %v3649
    %v3880 = vunpack.c.l.s4 1983009808
    %v3881 = vunpack.c.0.s8 %v3880
    %v3882 = vlaneseq
    %v3883 = vshrl.u32 %v3882, 7
    %v3884 = vsub.s32 %v3881, %v3883
    %v3885 = vrot.slane %v3878, %v3884
    %v3886 = vcombine.low %v3861, %v3869
    %v3887 = vcombine.high %v3861, %v3869
    %v3889 = vunpack.c.l.s4 1934713408
    %v3890 = vunpack.c.0.s8 %v3889
    %v3891 = vlaneseq
    %v3892 = vshrl.u32 %v3891, 7
    %v3893 = vsub.s32 %v3890, %v3892
    %v3894 = vrot.slane %v3886, %v3893
    %v3896 = vunpack.c.l.s4 1934713408
    %v3897 = vunpack.c.0.s8 %v3896
    %v3898 = vlaneseq
    %v3899 = vshrl.u32 %v3898, 7
    %v3900 = vsub.s32 %v3897, %v3899
    %v3901 = vrot.slane %v3887, %v3900
    %v3902 = vcombine.low %v3877, %v3885
    %v3903 = vcombine.high %v3877, %v3885
    %v3905 = vunpack.c.l.s4 1934713408
    %v3906 = vunpack.c.0.s8 %v3905
    %v3907 = vlaneseq
    %v3908 = vshrl.u32 %v3907, 7
    %v3909 = vsub.s32 %v3906, %v3908
    %v3910 = vrot.slane %v3902, %v3909
    %v3912 = vunpack.c.l.s4 1934713408
    %v3913 = vunpack.c.0.s8 %v3912
    %v3914 = vlaneseq
    %v3915 = vshrl.u32 %v3914, 7
    %v3916 = vsub.s32 %v3913, %v3915
    %v3917 = vrot.slane %v3903, %v3916
    %v3918 = vcombine.low %v3894, %v3910
    %v3919 = vcombine.high %v3894, %v3910
    %v3920 = vcombine.low %v3901, %v3917
    %v3921 = vcombine.high %v3901, %v3917
    %v3922 = vcombine.low %v3690, %v3697
    %v3924 = vunpack.c.l.s4 1983009808
    %v3925 = vunpack.c.0.s8 %v3924
    %v3926 = vlaneseq
    %v3927 = vshrl.u32 %v3926, 7
    %v3928 = vsub.s32 %v3925, %v3927
    %v3929 = vrot.slane %v3922, %v3928
    %v3930 = vcombine.low %v3714, %v3715
    %v3932 = vunpack.c.l.s4 1983009808
    %v3933 = vunpack.c.0.s8 %v3932
    %v3934 = vlaneseq
    %v3935 = vshrl.u32 %v3934, 7
    %v3936 = vsub.s32 %v3933, %v3935
    %v3937 = vrot.slane %v3930, %v3936
    %v3938 = vcombine.low %v3706, %v3713
    %v3940 = vunpack.c.l.s4 1983009808
    %v3941 = vunpack.c.0.s8 %v3940
    %v3942 = vlaneseq
    %v3943 = vshrl.u32 %v3942, 7
    %v3944 = vsub.s32 %v3941, %v3943
    %v3945 = vrot.slane %v3938, %v3944
    %v3946 = vcombine.low %v3716, %v3717
    %v3948 = vunpack.c.l.s4 1983009808
    %v3949 = vunpack.c.0.s8 %v3948
    %v3950 = vlaneseq
    %v3951 = vshrl.u32 %v3950, 7
    %v3952 = vsub.s32 %v3949, %v3951
    %v3953 = vrot.slane %v3946, %v3952
    %v3954 = vcombine.low %v3929, %v3937
    %v3955 = vcombine.high %v3929, %v3937
    %v3957 = vunpack.c.l.s4 1934713408
    %v3958 = vunpack.c.0.s8 %v3957
    %v3959 = vlaneseq
    %v3960 = vshrl.u32 %v3959, 7
    %v3961 = vsub.s32 %v3958, %v3960
    %v3962 = vrot.slane %v3954, %v3961
    %v3964 = vunpack.c.l.s4 1934713408
    %v3965 = vunpack.c.0.s8 %v3964
    %v3966 = vlaneseq
    %v3967 = vshrl.u32 %v3966, 7
    %v3968 = vsub.s32 %v3965, %v3967
    %v3969 = vrot.slane %v3955, %v3968
    %v3970 = vcombine.low %v3945, %v3953
    %v3971 = vcombine.high %v3945, %v3953
    %v3973 = vunpack.c.l.s4 1934713408
    %v3974 = vunpack.c.0.s8 %v3973
    %v3975 = vlaneseq
    %v3976 = vshrl.u32 %v3975, 7
    %v3977 = vsub.s32 %v3974, %v3976
    %v3978 = vrot.slane %v3970, %v3977
    %v3980 = vunpack.c.l.s4 1934713408
    %v3981 = vunpack.c.0.s8 %v3980
    %v3982 = vlaneseq
    %v3983 = vshrl.u32 %v3982, 7
    %v3984 = vsub.s32 %v3981, %v3983
    %v3985 = vrot.slane %v3971, %v3984
    %v3986 = vcombine.low %v3962, %v3978
    %v3987 = vcombine.high %v3962, %v3978
    %v3988 = vcombine.low %v3969, %v3985
    %v3989 = vcombine.high %v3969, %v3985
    %3994 = vrot.lane.b32.xlu0 %v3783, 8
    %v3995 = vpop.permute.xlu0 %3994
    %3996 = vrot.lane.b32.xlu0 %v3851, 8
    %v3997 = vpop.permute.xlu0 %3996
    %3998 = vrot.lane.b32.xlu0 %v3919, 8
    %v3999 = vpop.permute.xlu0 %3998
    %4000 = vrot.lane.b32.xlu0 %v3987, 8
    %v4001 = vpop.permute.xlu0 %4000
    %4010 = vrot.lane.b32.xlu0 %v3784, 16
    %v4011 = vpop.permute.xlu0 %4010
    %4012 = vrot.lane.b32.xlu0 %v3852, 16
    %v4013 = vpop.permute.xlu0 %4012
    %4014 = vrot.lane.b32.xlu0 %v3920, 16
    %v4015 = vpop.permute.xlu0 %4014
    %4016 = vrot.lane.b32.xlu0 %v3988, 16
    %v4017 = vpop.permute.xlu0 %4016
    %4026 = vrot.lane.b32.xlu0 %v3785, 24
    %v4027 = vpop.permute.xlu0 %4026
    %4028 = vrot.lane.b32.xlu0 %v3853, 24
    %v4029 = vpop.permute.xlu0 %4028
    %4030 = vrot.lane.b32.xlu0 %v3921, 24
    %v4031 = vpop.permute.xlu0 %4030
    %4032 = vrot.lane.b32.xlu0 %v3989, 24
    %v4033 = vpop.permute.xlu0 %4032
    %v4038 = vsel %vm1924, %v3782, %v3995
    %v4039 = vsel %vm1924, %v3850, %v3997
    %v4040 = vsel %vm1924, %v3918, %v3999
    %v4041 = vsel %vm1924, %v3986, %v4001
    %v4042 = vsel %vm2621, %v4038, %v4011
    %v4043 = vsel %vm2621, %v4039, %v4013
    %v4044 = vsel %vm2621, %v4040, %v4015
    %v4045 = vsel %vm2621, %v4041, %v4017
    %vm4046 = vcmask 195584
    %v4047 = vsel %vm4046, %v4042, %v4027
    %v4048 = vsel %vm4046, %v4043, %v4029
    %v4049 = vsel %vm4046, %v4044, %v4031
    %v4050 = vsel %vm4046, %v4045, %v4033
    %4051 = vst.msk [vmem:[#allocation7] sm:$0xff] %vm58, %v4047
    %4052 = vst.msk [vmem:[#allocation7 + $0x8] sm:$0xff] %vm58, %v4048
    %4053 = vst.msk [vmem:[#allocation7 + $0x10] sm:$0xff] %vm58, %v4049
    %4054 = vst.msk [vmem:[#allocation7 + $0x18] sm:$0xff] %vm58, %v4050
    // Predicated region
    $region22: #{tpu_custom_call.1} parent=1 // pred_check
      _
    $region23: #{tpu_custom_call.1} parent=1 // pred_check_branch
      %4056 = sbr.rel (0) target = $region25
    $region24: #{tpu_custom_call.1} parent=1 // pred_region
      %s4058 = ssub.s32 512, 512
      %4059 = vsyncadd [#allocation4], %s4058
      %s4060 = sshll.u32 [#allocation7], 4
      %s4061 = int_to_ptr.vmem [resolvable:$true] %s4060
      %4066 = dma.vmem_to_hbm [thread:$0]  %s4061, 512, %s3, [#allocation4], 128, 128, 8
    $region25: #{tpu_custom_call.1} parent=1 // pred_fallthru
      _
    // Predicated region
    $region26: #{tpu_custom_call.1} parent=1 // pred_check
      _
    $region27: #{tpu_custom_call.1} parent=1 // pred_check_branch
      %4068 = sbr.rel (0) target = $region29
    $region28: #{tpu_custom_call.1} parent=1 // pred_region
      %4069 = dma.done [#allocation4], 512
    $region29: #{tpu_custom_call.1} parent=1 // pred_fallthru
      _
    %4070 = vsyncpa [#allocation3], 1
    %4071 = vsyncpa [#allocation6], 1
    %4072 = vsyncpa [#allocation4], 1

</llo_original>
